<compile_context>
chip_gen: v7x
topology: tpu7x:2x2x1
jax: 0.10.0
libtpu: 0.0.40
codegen_flags: <defaults>
</compile_context>

<pallas_src>
import math
from functools import partial

import jax
import jax.numpy as jnp
from jax import lax
from jax.experimental import pallas as pl
from jax.experimental.pallas import tpu as pltpu

# ----------------------------- model config ---------------------------------
EMBED_DIM = 32
NUM_HEADS = 4
NUM_LAYERS = 2
FF_DIM = 4 * EMBED_DIM
HEAD_DIM = EMBED_DIM // NUM_HEADS
VOCAB_VAL = 10        # value-token vocabulary of the synthetic embedding
VOCAB_DEPTH = 8       # depth-token vocabulary of the synthetic embedding
SPATIAL_A = 3         # spatial dimension A of the position input
OUT_VOCAB = 16        # generative-head output vocabulary V
LN_EPS = 1e-5
LANE = 128            # lane-dense padding width for the packed vector slab / output

# ------------------------- packed vector-slab layout -------------------------
VOCAB_VAL_PAD = 16                                   # pad one-hot contraction to a mult. of 8
ROW_VAL_EMB = 0                                      # [VOCAB_VAL_PAD, E]  (rows >=10 are zero)
ROW_DEP_EMB = ROW_VAL_EMB + VOCAB_VAL_PAD            # [VOCAB_DEPTH, E]
ROW_POS_W = ROW_DEP_EMB + VOCAB_DEPTH                # [SPATIAL_A, E]
ROW_POS_B = ROW_POS_W + SPATIAL_A                    # [1, E]
ROW_SOS = ROW_POS_B + 1                              # [1, E]
ROW_LAYERS = ROW_SOS + 1
VEC_PER_LAYER = 10                                   # bq,bk,bv,bo,g1,be1,bf1,bf2,g2,be2
ROW_GF = ROW_LAYERS + NUM_LAYERS * VEC_PER_LAYER     # final norm gamma
ROW_BFN = ROW_GF + 1                                 # final norm beta
ROW_BH = ROW_GF + 2                                  # head bias (padded to 128)
ROW_WH = ROW_GF + 3                                  # head weight [E, 128] (padded)
VEC_ROWS = ROW_WH + EMBED_DIM


# ----------------------------- kernel helpers --------------------------------
def _layer_norm(x, gamma, beta):
    mean = jnp.mean(x, axis=-1, keepdims=True)
    var = jnp.mean((x - mean) ** 2, axis=-1, keepdims=True)
    return (x - mean) * lax.rsqrt(var + LN_EPS) * gamma + beta


# ----------------------------- fused Pallas kernel ----------------------------
def fused_model_kernel(tok_ref, pos_ref, vec_ref, attn_w_ref, w1_ref, w2_ref,
                       out_ref, *, batch, seq_len):
    """Embedding + SOS shift + all encoder layers + final norm + head in one kernel."""
    E, H, D, F = EMBED_DIM, NUM_HEADS, HEAD_DIM, FF_DIM
    N, L = batch, seq_len
    NL = N * L
    f32 = jnp.float32
    scale = 1.0 / math.sqrt(D)                       # fast-transformers softmax_temp

    def row(r, width=E):                             # static carve from the packed slab
        return vec_ref[r:r + 1, 0:width]             # [1, width]

    # ---------------- token embedding: one-hot x table matmuls on the idle MXU ----
    tok = tok_ref[...]                                                       # [NL, 2] int32
    val_oh = jnp.where(
        tok[:, 0:1] == lax.broadcasted_iota(jnp.int32, (NL, VOCAB_VAL_PAD), 1),
        1.0, 0.0).astype(f32)                                                # [NL, 16]
    dep_oh = jnp.where(
        tok[:, 1:2] == lax.broadcasted_iota(jnp.int32, (NL, VOCAB_DEPTH), 1),
        1.0, 0.0).astype(f32)                                                # [NL, 8]
    seq = jnp.dot(val_oh, vec_ref[ROW_VAL_EMB:ROW_VAL_EMB + VOCAB_VAL_PAD, 0:E],
                  preferred_element_type=f32)
    seq = seq + jnp.dot(dep_oh, vec_ref[ROW_DEP_EMB:ROW_DEP_EMB + VOCAB_DEPTH, 0:E],
                        preferred_element_type=f32)
    pos = pos_ref[...]                                                       # [NL, A]
    for a in range(SPATIAL_A):                       # tiny-K projection kept on the VPU
        seq = seq + pos[:, a:a + 1] * row(ROW_POS_W + a)
    seq = seq + row(ROW_POS_B)                                               # [NL, E]

    # ---------------- _prepend_sos_token: shift right, pad with learned sos -------
    seq3 = seq.reshape(N, L, E)
    sos = jnp.broadcast_to(row(ROW_SOS).reshape(1, 1, E), (N, 1, E))
    x = jnp.concatenate([sos, seq3[:, :L - 1, :]], axis=1).reshape(NL, E)    # [NL, E]

    # causal mask (recurrent full-attention == causal); built once, reused by all layers
    rows_i = lax.broadcasted_iota(jnp.int32, (L, L), 0)
    cols_i = lax.broadcasted_iota(jnp.int32, (L, L), 1)
    causal = cols_i <= rows_i                                                # [L, L]

    for layer in range(NUM_LAYERS):                  # static unroll; weights stay in VMEM
        base = ROW_LAYERS + layer * VEC_PER_LAYER
        wq = attn_w_ref[4 * layer + 0]
        wk = attn_w_ref[4 * layer + 1]
        wv = attn_w_ref[4 * layer + 2]
        wo = attn_w_ref[4 * layer + 3]

        # three separate [E,E] projections (no 0/32/64 lane slicing of a fused result)
        q = jnp.dot(x, wq, preferred_element_type=f32) + row(base + 0)       # [NL, E]
        k = jnp.dot(x, wk, preferred_element_type=f32) + row(base + 1)
        v = jnp.dot(x, wv, preferred_element_type=f32) + row(base + 2)

        # heads folded into the leading batch dim -> ONE pair of batched dot_generals
        # and ONE softmax chain per layer.
        def split_heads(t):                          # [NL, E] -> [H*N, L, D]
            t3 = t.reshape(N, L, E)
            return jnp.concatenate(
                [t3[:, :, h * D:(h + 1) * D] for h in range(H)], axis=0)
        qh, kh, vh = split_heads(q), split_heads(k), split_heads(v)

        s = lax.dot_general(qh, kh, (((2,), (2,)), ((0,), (0,))),
                            preferred_element_type=f32) * scale             # [HN, L, L]
        s = jnp.where(causal, s, -1e30)
        s = s - jnp.max(s, axis=-1, keepdims=True)
        p = jnp.exp(s)
        p = p * pl.reciprocal(jnp.sum(p, axis=-1, keepdims=True), approx=True)
        o = lax.dot_general(p, vh, (((2,), (1,)), ((0,), (0,))),
                            preferred_element_type=f32)                     # [HN, L, D]
        attn = jnp.concatenate([o[h * N:(h + 1) * N] for h in range(H)], axis=-1)
        attn = attn.reshape(NL, E)                                           # [NL, E]

        attn = jnp.dot(attn, wo, preferred_element_type=f32) + row(base + 3)
        x = _layer_norm(x + attn, row(base + 4), row(base + 5))              # norm1 (post-norm)

        h1 = jnp.dot(x, w1_ref[layer], preferred_element_type=f32) + row(base + 6, F)
        h1 = jax.nn.gelu(h1, approximate=True)  # TODO(synk): torch F.gelu default is exact erf GELU
        h2 = jnp.dot(h1, w2_ref[layer], preferred_element_type=f32) + row(base + 7)
        x = _layer_norm(x + h2, row(base + 8), row(base + 9))                # norm2

    # final encoder LayerNorm + generative head; one dense 128-lane store
    x = _layer_norm(x, row(ROW_GF), row(ROW_BFN))
    out_ref[...] = (jnp.dot(x, vec_ref[ROW_WH:ROW_WH + E, :], preferred_element_type=f32)
                    + row(ROW_BH, LANE))                                     # [NL, 128]


# ----------------------------- full forward pass ------------------------------
@jax.jit
def fast_recurrent_transformer_forward(packed, value, depth, position):
    """value/depth: int32 [N, L]; position: float32 [N, L, A] -> logits [N, L, V]."""
    N, L = value.shape
    NL = N * L
    tok = jnp.stack([value.astype(jnp.int32), depth.astype(jnp.int32)],
                    axis=-1).reshape(NL, 2)
    pos = position.astype(jnp.float32).reshape(NL, SPATIAL_A)

    vmem = pl.BlockSpec(memory_space=pltpu.MemorySpace.VMEM)   # whole array resident, no grid
    out = pl.pallas_call(
        partial(fused_model_kernel, batch=N, seq_len=L),
        out_shape=jax.ShapeDtypeStruct((NL, LANE), jnp.float32),
        in_specs=[vmem] * 6,
        out_specs=vmem,
    )(tok, pos, packed['vec'], packed['attn_w'], packed['w1'], packed['w2'])
    return out[:, :OUT_VOCAB].reshape(N, L, OUT_VOCAB)


# ----------------------------- parameter packing ------------------------------
def pack_params(p):
    """Pack logical parameters into the kernel's 4 resident tensors."""
    E = EMBED_DIM
    vec = jnp.zeros((VEC_ROWS, LANE), jnp.float32)

    def put(vec, row, mat):
        r, c = mat.shape
        return vec.at[row:row + r, 0:c].set(mat)

    vec = put(vec, ROW_VAL_EMB, p['val_emb'])                 # [10, E] in a 16-row slot
    vec = put(vec, ROW_DEP_EMB, p['dep_emb'])
    vec = put(vec, ROW_POS_W, p['pos_w'])
    vec = put(vec, ROW_POS_B, p['pos_b'][None, :])
    vec = put(vec, ROW_SOS, p['sos'][None, :])
    names = ('bq', 'bk', 'bv', 'bo', 'g1', 'be1', 'bf1', 'bf2', 'g2', 'be2')
    for l in range(NUM_LAYERS):
        base = ROW_LAYERS + l * VEC_PER_LAYER
        for i, name in enumerate(names):
            vec = put(vec, base + i, p['layers'][l][name][None, :])
    vec = put(vec, ROW_GF, p['gf'][None, :])
    vec = put(vec, ROW_BFN, p['bfn'][None, :])
    vec = put(vec, ROW_BH, p['bh'][None, :])
    vec = put(vec, ROW_WH, p['wh'])                           # [E, V] padded to [E, 128]

    attn_w = jnp.stack([p['layers'][l][w]
                        for l in range(NUM_LAYERS)
                        for w in ('wq', 'wk', 'wv', 'wo')])   # [4*Lyr, E, E]
    w1 = jnp.stack([p['layers'][l]['w1'] for l in range(NUM_LAYERS)])   # [Lyr, E, F]
    w2 = jnp.stack([p['layers'][l]['w2'] for l in range(NUM_LAYERS)])   # [Lyr, F, E]
    return {'vec': vec, 'attn_w': attn_w, 'w1': w1, 'w2': w2}


# ----------------------------- deterministic params ---------------------------
def init_params(key):
    def nrm(k, shape, scale=0.02):
        return scale * jax.random.normal(k, shape, dtype=jnp.float32)

    E, F, V = EMBED_DIM, FF_DIM, OUT_VOCAB
    keys = iter(jax.random.split(key, 8 + NUM_LAYERS * 8))
    params = {
        'val_emb': nrm(next(keys), (VOCAB_VAL, E)),
        'dep_emb': nrm(next(keys), (VOCAB_DEPTH, E)),
        'pos_w': nrm(next(keys), (SPATIAL_A, E)),
        'pos_b': jnp.zeros((E,), jnp.float32),
        'sos': nrm(next(keys), (E,), scale=1.0),              # nn.init.normal_ (std=1)
        'gf': jnp.ones((E,), jnp.float32),
        'bfn': jnp.zeros((E,), jnp.float32),
        'wh': nrm(next(keys), (E, V)),
        'bh': jnp.zeros((V,), jnp.float32),
        'layers': [],
    }
    for _ in range(NUM_LAYERS):
        params['layers'].append({
            'wq': nrm(next(keys), (E, E)), 'bq': jnp.zeros((E,), jnp.float32),
            'wk': nrm(next(keys), (E, E)), 'bk': jnp.zeros((E,), jnp.float32),
            'wv': nrm(next(keys), (E, E)), 'bv': jnp.zeros((E,), jnp.float32),
            'wo': nrm(next(keys), (E, E)), 'bo': jnp.zeros((E,), jnp.float32),
            'g1': jnp.ones((E,), jnp.float32), 'be1': jnp.zeros((E,), jnp.float32),
            'w1': nrm(next(keys), (E, F)), 'bf1': jnp.zeros((F,), jnp.float32),
            'w2': nrm(next(keys), (F, E)), 'bf2': jnp.zeros((E,), jnp.float32),
            'g2': jnp.ones((E,), jnp.float32), 'be2': jnp.zeros((E,), jnp.float32),
        })
    return params


# ----------------------------- main -------------------------------------------
if __name__ == "__main__":
    key = jax.random.PRNGKey(0)
    pkey, dkey = jax.random.split(key)
    params = init_params(pkey)
    packed = pack_params(params)

    N, L = 2, 8
    k1, k2, k3 = jax.random.split(dkey, 3)
    value = jax.random.randint(k1, (N, L), 0, VOCAB_VAL)                     # [N, L]
    depth = jax.random.randint(k2, (N, L), 0, VOCAB_DEPTH)                   # [N, L]
    position = jax.random.normal(k3, (N, L, SPATIAL_A), dtype=jnp.float32)   # [N, L, A]

    logits = fast_recurrent_transformer_forward(packed, value, depth, position)
    logits = jax.block_until_ready(logits)
    assert logits.shape == (N, L, OUT_VOCAB)
    assert bool(jnp.all(jnp.isfinite(logits)))
    print("KERNEL_OK")
</pallas_src>

<mosaic_0001>
module attributes {stable_mosaic.version = 11 : i64} {
  func.func @fused_model_kernel(%arg0: memref<16x2xi32, #tpu.memory_space<vmem>>, %arg1: memref<16x3xf32, #tpu.memory_space<vmem>>, %arg2: memref<84x128xf32, #tpu.memory_space<vmem>>, %arg3: memref<8x32x32xf32, #tpu.memory_space<vmem>>, %arg4: memref<2x32x128xf32, #tpu.memory_space<vmem>>, %arg5: memref<2x128x32xf32, #tpu.memory_space<vmem>>, %arg6: memref<16x128xf32, #tpu.memory_space<vmem>>) attributes {dimension_semantics = [], scalar_prefetch = 0 : i64, scratch_operands = 0 : i64, tpu.core_type = #tpu.core_type<tc>} {
    %c0 = arith.constant 0 : index
    %c0_0 = arith.constant 0 : index
    %0 = vector.load %arg0[%c0, %c0_0] : memref<16x2xi32, #tpu.memory_space<vmem>>, vector<16x2xi32>
    %1 = vector.extract_strided_slice %0 {offsets = [0, 0], sizes = [16, 1], strides = [1, 1]} : vector<16x2xi32> to vector<16x1xi32>
    %2 = tpu.iota {dimensions = array<i32: 1>} : vector<16x16xi32>
    %3 = vector.broadcast %1 : vector<16x1xi32> to vector<16x16xi32>
    %4 = arith.cmpi eq, %3, %2 : vector<16x16xi32>
    %cst = arith.constant 1.000000e+00 : f32
    %cst_1 = arith.constant 0.000000e+00 : f32
    %5 = vector.broadcast %cst : f32 to vector<16x16xf32>
    %6 = vector.broadcast %cst_1 : f32 to vector<16x16xf32>
    %7 = arith.select %4, %5, %6 : vector<16x16xi1>, vector<16x16xf32>
    %8 = vector.extract_strided_slice %0 {offsets = [0, 1], sizes = [16, 1], strides = [1, 1]} : vector<16x2xi32> to vector<16x1xi32>
    %9 = tpu.iota {dimensions = array<i32: 1>} : vector<16x8xi32>
    %10 = vector.broadcast %8 : vector<16x1xi32> to vector<16x8xi32>
    %11 = arith.cmpi eq, %10, %9 : vector<16x8xi32>
    %cst_2 = arith.constant 1.000000e+00 : f32
    %cst_3 = arith.constant 0.000000e+00 : f32
    %12 = vector.broadcast %cst_2 : f32 to vector<16x8xf32>
    %13 = vector.broadcast %cst_3 : f32 to vector<16x8xf32>
    %14 = arith.select %11, %12, %13 : vector<16x8xi1>, vector<16x8xf32>
    %c0_4 = arith.constant 0 : index
    %c0_5 = arith.constant 0 : index
    %15 = vector.load %arg2[%c0_4, %c0_5] : memref<84x128xf32, #tpu.memory_space<vmem>>, vector<16x32xf32>
    %cst_6 = arith.constant dense<0.000000e+00> : vector<16x32xf32>
    %16 = tpu.matmul %7, %15, %cst_6 {dimension_numbers = #tpu.dot_dimension_numbers<[1], [0], [0], [1], [0, 0, 1, 1], [], []>} : vector<16x16xf32>, vector<16x32xf32>, vector<16x32xf32> -> vector<16x32xf32>
    %c16 = arith.constant 16 : index
    %c0_7 = arith.constant 0 : index
    %17 = vector.load %arg2[%c16, %c0_7] : memref<84x128xf32, #tpu.memory_space<vmem>>, vector<8x32xf32>
    %cst_8 = arith.constant dense<0.000000e+00> : vector<16x32xf32>
    %18 = tpu.matmul %14, %17, %cst_8 {dimension_numbers = #tpu.dot_dimension_numbers<[1], [0], [0], [1], [0, 0, 1, 1], [], []>} : vector<16x8xf32>, vector<8x32xf32>, vector<16x32xf32> -> vector<16x32xf32>
    %19 = arith.addf %16, %18 : vector<16x32xf32>
    %c0_9 = arith.constant 0 : index
    %c0_10 = arith.constant 0 : index
    %20 = vector.load %arg1[%c0_9, %c0_10] : memref<16x3xf32, #tpu.memory_space<vmem>>, vector<16x3xf32>
    %21 = vector.extract_strided_slice %20 {offsets = [0, 0], sizes = [16, 1], strides = [1, 1]} : vector<16x3xf32> to vector<16x1xf32>
    %c24 = arith.constant 24 : index
    %c0_11 = arith.constant 0 : index
    %22 = vector.load %arg2[%c24, %c0_11] : memref<84x128xf32, #tpu.memory_space<vmem>>, vector<1x32xf32>
    %23 = vector.broadcast %21 : vector<16x1xf32> to vector<16x32xf32>
    %24 = vector.broadcast %22 : vector<1x32xf32> to vector<16x32xf32>
    %25 = arith.mulf %23, %24 : vector<16x32xf32>
    %26 = arith.addf %19, %25 : vector<16x32xf32>
    %27 = vector.extract_strided_slice %20 {offsets = [0, 1], sizes = [16, 1], strides = [1, 1]} : vector<16x3xf32> to vector<16x1xf32>
    %c25 = arith.constant 25 : index
    %c0_12 = arith.constant 0 : index
    %28 = vector.load %arg2[%c25, %c0_12] : memref<84x128xf32, #tpu.memory_space<vmem>>, vector<1x32xf32>
    %29 = vector.broadcast %27 : vector<16x1xf32> to vector<16x32xf32>
    %30 = vector.broadcast %28 : vector<1x32xf32> to vector<16x32xf32>
    %31 = arith.mulf %29, %30 : vector<16x32xf32>
    %32 = arith.addf %26, %31 : vector<16x32xf32>
    %33 = vector.extract_strided_slice %20 {offsets = [0, 2], sizes = [16, 1], strides = [1, 1]} : vector<16x3xf32> to vector<16x1xf32>
    %c26 = arith.constant 26 : index
    %c0_13 = arith.constant 0 : index
    %34 = vector.load %arg2[%c26, %c0_13] : memref<84x128xf32, #tpu.memory_space<vmem>>, vector<1x32xf32>
    %35 = vector.broadcast %33 : vector<16x1xf32> to vector<16x32xf32>
    %36 = vector.broadcast %34 : vector<1x32xf32> to vector<16x32xf32>
    %37 = arith.mulf %35, %36 : vector<16x32xf32>
    %38 = arith.addf %32, %37 : vector<16x32xf32>
    %c27 = arith.constant 27 : index
    %c0_14 = arith.constant 0 : index
    %39 = vector.load %arg2[%c27, %c0_14] : memref<84x128xf32, #tpu.memory_space<vmem>>, vector<1x32xf32>
    %40 = vector.broadcast %39 : vector<1x32xf32> to vector<16x32xf32>
    %41 = arith.addf %38, %40 : vector<16x32xf32>
    %42 = vector.shape_cast %41 : vector<16x32xf32> to vector<2x8x32xf32>
    %c28 = arith.constant 28 : index
    %c0_15 = arith.constant 0 : index
    %43 = vector.load %arg2[%c28, %c0_15] : memref<84x128xf32, #tpu.memory_space<vmem>>, vector<1x32xf32>
    %44 = vector.shape_cast %43 : vector<1x32xf32> to vector<1x1x32xf32>
    %45 = vector.shape_cast %44 : vector<1x1x32xf32> to vector<1x1x32xf32>
    %46 = vector.broadcast %45 : vector<1x1x32xf32> to vector<2x1x32xf32>
    %47 = vector.extract_strided_slice %42 {offsets = [0, 0, 0], sizes = [2, 7, 32], strides = [1, 1, 1]} : vector<2x8x32xf32> to vector<2x7x32xf32>
    %48 = tpu.concatenate %46, %47 in 1 : vector<2x1x32xf32>, vector<2x7x32xf32> -> vector<2x8x32xf32>
    %49 = vector.shape_cast %48 : vector<2x8x32xf32> to vector<16x32xf32>
    %50 = tpu.iota {dimensions = array<i32: 0>} : vector<8x8xi32>
    %51 = tpu.iota {dimensions = array<i32: 1>} : vector<8x8xi32>
    %52 = arith.cmpi sle, %51, %50 : vector<8x8xi32>
    %c0_16 = arith.constant 0 : index
    %c0_17 = arith.constant 0 : index
    %c0_18 = arith.constant 0 : index
    %53 = vector.load %arg3[%c0_16, %c0_17, %c0_18] : memref<8x32x32xf32, #tpu.memory_space<vmem>>, vector<1x32x32xf32>
    %54 = vector.shape_cast %53 : vector<1x32x32xf32> to vector<32x32xf32>
    %c1 = arith.constant 1 : index
    %c0_19 = arith.constant 0 : index
    %c0_20 = arith.constant 0 : index
    %55 = vector.load %arg3[%c1, %c0_19, %c0_20] : memref<8x32x32xf32, #tpu.memory_space<vmem>>, vector<1x32x32xf32>
    %56 = vector.shape_cast %55 : vector<1x32x32xf32> to vector<32x32xf32>
    %c2 = arith.constant 2 : index
    %c0_21 = arith.constant 0 : index
    %c0_22 = arith.constant 0 : index
    %57 = vector.load %arg3[%c2, %c0_21, %c0_22] : memref<8x32x32xf32, #tpu.memory_space<vmem>>, vector<1x32x32xf32>
    %58 = vector.shape_cast %57 : vector<1x32x32xf32> to vector<32x32xf32>
    %c3 = arith.constant 3 : index
    %c0_23 = arith.constant 0 : index
    %c0_24 = arith.constant 0 : index
    %59 = vector.load %arg3[%c3, %c0_23, %c0_24] : memref<8x32x32xf32, #tpu.memory_space<vmem>>, vector<1x32x32xf32>
    %60 = vector.shape_cast %59 : vector<1x32x32xf32> to vector<32x32xf32>
    %cst_25 = arith.constant dense<0.000000e+00> : vector<16x32xf32>
    %61 = tpu.matmul %49, %54, %cst_25 {dimension_numbers = #tpu.dot_dimension_numbers<[1], [0], [0], [1], [0, 0, 1, 1], [], []>} : vector<16x32xf32>, vector<32x32xf32>, vector<16x32xf32> -> vector<16x32xf32>
    %c29 = arith.constant 29 : index
    %c0_26 = arith.constant 0 : index
    %62 = vector.load %arg2[%c29, %c0_26] : memref<84x128xf32, #tpu.memory_space<vmem>>, vector<1x32xf32>
    %63 = vector.broadcast %62 : vector<1x32xf32> to vector<16x32xf32>
    %64 = arith.addf %61, %63 : vector<16x32xf32>
    %cst_27 = arith.constant dense<0.000000e+00> : vector<16x32xf32>
    %65 = tpu.matmul %49, %56, %cst_27 {dimension_numbers = #tpu.dot_dimension_numbers<[1], [0], [0], [1], [0, 0, 1, 1], [], []>} : vector<16x32xf32>, vector<32x32xf32>, vector<16x32xf32> -> vector<16x32xf32>
    %c30 = arith.constant 30 : index
    %c0_28 = arith.constant 0 : index
    %66 = vector.load %arg2[%c30, %c0_28] : memref<84x128xf32, #tpu.memory_space<vmem>>, vector<1x32xf32>
    %67 = vector.broadcast %66 : vector<1x32xf32> to vector<16x32xf32>
    %68 = arith.addf %65, %67 : vector<16x32xf32>
    %cst_29 = arith.constant dense<0.000000e+00> : vector<16x32xf32>
    %69 = tpu.matmul %49, %58, %cst_29 {dimension_numbers = #tpu.dot_dimension_numbers<[1], [0], [0], [1], [0, 0, 1, 1], [], []>} : vector<16x32xf32>, vector<32x32xf32>, vector<16x32xf32> -> vector<16x32xf32>
    %c31 = arith.constant 31 : index
    %c0_30 = arith.constant 0 : index
    %70 = vector.load %arg2[%c31, %c0_30] : memref<84x128xf32, #tpu.memory_space<vmem>>, vector<1x32xf32>
    %71 = vector.broadcast %70 : vector<1x32xf32> to vector<16x32xf32>
    %72 = arith.addf %69, %71 : vector<16x32xf32>
    %73 = vector.shape_cast %64 : vector<16x32xf32> to vector<2x8x32xf32>
    %74 = vector.extract_strided_slice %73 {offsets = [0, 0, 0], sizes = [2, 8, 8], strides = [1, 1, 1]} : vector<2x8x32xf32> to vector<2x8x8xf32>
    %75 = vector.extract_strided_slice %73 {offsets = [0, 0, 8], sizes = [2, 8, 8], strides = [1, 1, 1]} : vector<2x8x32xf32> to vector<2x8x8xf32>
    %76 = vector.extract_strided_slice %73 {offsets = [0, 0, 16], sizes = [2, 8, 8], strides = [1, 1, 1]} : vector<2x8x32xf32> to vector<2x8x8xf32>
    %77 = vector.extract_strided_slice %73 {offsets = [0, 0, 24], sizes = [2, 8, 8], strides = [1, 1, 1]} : vector<2x8x32xf32> to vector<2x8x8xf32>
    %78 = tpu.concatenate %74, %75, %76, %77 in 0 : vector<2x8x8xf32>, vector<2x8x8xf32>, vector<2x8x8xf32>, vector<2x8x8xf32> -> vector<8x8x8xf32>
    %79 = vector.shape_cast %68 : vector<16x32xf32> to vector<2x8x32xf32>
    %80 = vector.extract_strided_slice %79 {offsets = [0, 0, 0], sizes = [2, 8, 8], strides = [1, 1, 1]} : vector<2x8x32xf32> to vector<2x8x8xf32>
    %81 = vector.extract_strided_slice %79 {offsets = [0, 0, 8], sizes = [2, 8, 8], strides = [1, 1, 1]} : vector<2x8x32xf32> to vector<2x8x8xf32>
    %82 = vector.extract_strided_slice %79 {offsets = [0, 0, 16], sizes = [2, 8, 8], strides = [1, 1, 1]} : vector<2x8x32xf32> to vector<2x8x8xf32>
    %83 = vector.extract_strided_slice %79 {offsets = [0, 0, 24], sizes = [2, 8, 8], strides = [1, 1, 1]} : vector<2x8x32xf32> to vector<2x8x8xf32>
    %84 = tpu.concatenate %80, %81, %82, %83 in 0 : vector<2x8x8xf32>, vector<2x8x8xf32>, vector<2x8x8xf32>, vector<2x8x8xf32> -> vector<8x8x8xf32>
    %85 = vector.shape_cast %72 : vector<16x32xf32> to vector<2x8x32xf32>
    %86 = vector.extract_strided_slice %85 {offsets = [0, 0, 0], sizes = [2, 8, 8], strides = [1, 1, 1]} : vector<2x8x32xf32> to vector<2x8x8xf32>
    %87 = vector.extract_strided_slice %85 {offsets = [0, 0, 8], sizes = [2, 8, 8], strides = [1, 1, 1]} : vector<2x8x32xf32> to vector<2x8x8xf32>
    %88 = vector.extract_strided_slice %85 {offsets = [0, 0, 16], sizes = [2, 8, 8], strides = [1, 1, 1]} : vector<2x8x32xf32> to vector<2x8x8xf32>
    %89 = vector.extract_strided_slice %85 {offsets = [0, 0, 24], sizes = [2, 8, 8], strides = [1, 1, 1]} : vector<2x8x32xf32> to vector<2x8x8xf32>
    %90 = tpu.concatenate %86, %87, %88, %89 in 0 : vector<2x8x8xf32>, vector<2x8x8xf32>, vector<2x8x8xf32>, vector<2x8x8xf32> -> vector<8x8x8xf32>
    %cst_31 = arith.constant dense<0.000000e+00> : vector<8x8x8xf32>
    %91 = tpu.matmul %78, %84, %cst_31 {dimension_numbers = #tpu.dot_dimension_numbers<[2], [2], [1], [1], [0, 0, 0, 1, 1, 1], [0], [0]>} : vector<8x8x8xf32>, vector<8x8x8xf32>, vector<8x8x8xf32> -> vector<8x8x8xf32>
    %cst_32 = arith.constant 0.353553385 : f32
    %92 = vector.broadcast %cst_32 : f32 to vector<8x8x8xf32>
    %93 = arith.mulf %91, %92 : vector<8x8x8xf32>
    %cst_33 = arith.constant -1.000000e+30 : f32
    %94 = vector.shape_cast %52 : vector<8x8xi1> to vector<1x8x8xi1>
    %95 = vector.broadcast %94 : vector<1x8x8xi1> to vector<8x8x8xi1>
    %96 = vector.broadcast %cst_33 : f32 to vector<8x8x8xf32>
    %97 = arith.select %95, %93, %96 : vector<8x8x8xi1>, vector<8x8x8xf32>
    %cst_34 = arith.constant dense<0xFF800000> : vector<8x8xf32>
    %98 = vector.multi_reduction <maximumf>, %97, %cst_34 [2] : vector<8x8x8xf32> to vector<8x8xf32>
    %99 = vector.shape_cast %98 : vector<8x8xf32> to vector<8x8x1xf32>
    %100 = vector.broadcast %99 : vector<8x8x1xf32> to vector<8x8x8xf32>
    %101 = arith.subf %97, %100 : vector<8x8x8xf32>
    %102 = math.exp %101 : vector<8x8x8xf32>
    %cst_35 = arith.constant dense<0.000000e+00> : vector<8x8xf32>
    %103 = vector.multi_reduction <add>, %102, %cst_35 [2] : vector<8x8x8xf32> to vector<8x8xf32>
    %104 = vector.shape_cast %103 : vector<8x8xf32> to vector<8x8x1xf32>
    %105 = tpu.reciprocal %104 {approx = true} : vector<8x8x1xf32> -> vector<8x8x1xf32>
    %106 = vector.broadcast %105 : vector<8x8x1xf32> to vector<8x8x8xf32>
    %107 = arith.mulf %102, %106 : vector<8x8x8xf32>
    %cst_36 = arith.constant dense<0.000000e+00> : vector<8x8x8xf32>
    %108 = tpu.matmul %107, %90, %cst_36 {dimension_numbers = #tpu.dot_dimension_numbers<[2], [1], [1], [2], [0, 0, 0, 1, 1, 2], [0], [0]>} : vector<8x8x8xf32>, vector<8x8x8xf32>, vector<8x8x8xf32> -> vector<8x8x8xf32>
    %109 = vector.extract_strided_slice %108 {offsets = [0, 0, 0], sizes = [2, 8, 8], strides = [1, 1, 1]} : vector<8x8x8xf32> to vector<2x8x8xf32>
    %110 = vector.extract_strided_slice %108 {offsets = [2, 0, 0], sizes = [2, 8, 8], strides = [1, 1, 1]} : vector<8x8x8xf32> to vector<2x8x8xf32>
    %111 = vector.extract_strided_slice %108 {offsets = [4, 0, 0], sizes = [2, 8, 8], strides = [1, 1, 1]} : vector<8x8x8xf32> to vector<2x8x8xf32>
    %112 = vector.extract_strided_slice %108 {offsets = [6, 0, 0], sizes = [2, 8, 8], strides = [1, 1, 1]} : vector<8x8x8xf32> to vector<2x8x8xf32>
    %113 = tpu.concatenate %109, %110, %111, %112 in 2 : vector<2x8x8xf32>, vector<2x8x8xf32>, vector<2x8x8xf32>, vector<2x8x8xf32> -> vector<2x8x32xf32>
    %114 = vector.shape_cast %113 : vector<2x8x32xf32> to vector<16x32xf32>
    %cst_37 = arith.constant dense<0.000000e+00> : vector<16x32xf32>
    %115 = tpu.matmul %114, %60, %cst_37 {dimension_numbers = #tpu.dot_dimension_numbers<[1], [0], [0], [1], [0, 0, 1, 1], [], []>} : vector<16x32xf32>, vector<32x32xf32>, vector<16x32xf32> -> vector<16x32xf32>
    %c32 = arith.constant 32 : index
    %c0_38 = arith.constant 0 : index
    %116 = vector.load %arg2[%c32, %c0_38] : memref<84x128xf32, #tpu.memory_space<vmem>>, vector<1x32xf32>
    %117 = vector.broadcast %116 : vector<1x32xf32> to vector<16x32xf32>
    %118 = arith.addf %115, %117 : vector<16x32xf32>
    %119 = arith.addf %49, %118 : vector<16x32xf32>
    %c33 = arith.constant 33 : index
    %c0_39 = arith.constant 0 : index
    %120 = vector.load %arg2[%c33, %c0_39] : memref<84x128xf32, #tpu.memory_space<vmem>>, vector<1x32xf32>
    %c34 = arith.constant 34 : index
    %c0_40 = arith.constant 0 : index
    %121 = vector.load %arg2[%c34, %c0_40] : memref<84x128xf32, #tpu.memory_space<vmem>>, vector<1x32xf32>
    %cst_41 = arith.constant dense<0.000000e+00> : vector<16xf32>
    %122 = vector.multi_reduction <add>, %119, %cst_41 [1] : vector<16x32xf32> to vector<16xf32>
    %123 = vector.shape_cast %122 : vector<16xf32> to vector<16x1xf32>
    %cst_42 = arith.constant 3.200000e+01 : f32
    %124 = vector.broadcast %cst_42 : f32 to vector<16x1xf32>
    %125 = arith.divf %123, %124 : vector<16x1xf32>
    %126 = vector.broadcast %125 : vector<16x1xf32> to vector<16x32xf32>
    %127 = arith.subf %119, %126 : vector<16x32xf32>
    %128 = arith.mulf %127, %127 : vector<16x32xf32>
    %cst_43 = arith.constant dense<0.000000e+00> : vector<16xf32>
    %129 = vector.multi_reduction <add>, %128, %cst_43 [1] : vector<16x32xf32> to vector<16xf32>
    %130 = vector.shape_cast %129 : vector<16xf32> to vector<16x1xf32>
    %cst_44 = arith.constant 3.200000e+01 : f32
    %131 = vector.broadcast %cst_44 : f32 to vector<16x1xf32>
    %132 = arith.divf %130, %131 : vector<16x1xf32>
    %133 = vector.broadcast %125 : vector<16x1xf32> to vector<16x32xf32>
    %134 = arith.subf %119, %133 : vector<16x32xf32>
    %cst_45 = arith.constant 9.99999974E-6 : f32
    %135 = vector.broadcast %cst_45 : f32 to vector<16x1xf32>
    %136 = arith.addf %132, %135 : vector<16x1xf32>
    %137 = math.rsqrt %136 : vector<16x1xf32>
    %138 = vector.broadcast %137 : vector<16x1xf32> to vector<16x32xf32>
    %139 = arith.mulf %134, %138 : vector<16x32xf32>
    %140 = vector.broadcast %120 : vector<1x32xf32> to vector<16x32xf32>
    %141 = arith.mulf %139, %140 : vector<16x32xf32>
    %142 = vector.broadcast %121 : vector<1x32xf32> to vector<16x32xf32>
    %143 = arith.addf %141, %142 : vector<16x32xf32>
    %c0_46 = arith.constant 0 : index
    %c0_47 = arith.constant 0 : index
    %c0_48 = arith.constant 0 : index
    %144 = vector.load %arg4[%c0_46, %c0_47, %c0_48] : memref<2x32x128xf32, #tpu.memory_space<vmem>>, vector<1x32x128xf32>
    %145 = vector.shape_cast %144 : vector<1x32x128xf32> to vector<32x128xf32>
    %cst_49 = arith.constant dense<0.000000e+00> : vector<16x128xf32>
    %146 = tpu.matmul %143, %145, %cst_49 {dimension_numbers = #tpu.dot_dimension_numbers<[1], [0], [0], [1], [0, 0, 1, 1], [], []>} : vector<16x32xf32>, vector<32x128xf32>, vector<16x128xf32> -> vector<16x128xf32>
    %c35 = arith.constant 35 : index
    %c0_50 = arith.constant 0 : index
    %147 = vector.load %arg2[%c35, %c0_50] : memref<84x128xf32, #tpu.memory_space<vmem>>, vector<1x128xf32>
    %148 = vector.broadcast %147 : vector<1x128xf32> to vector<16x128xf32>
    %149 = arith.addf %146, %148 : vector<16x128xf32>
    %150 = arith.mulf %149, %149 : vector<16x128xf32>
    %151 = arith.mulf %149, %150 : vector<16x128xf32>
    %cst_51 = arith.constant 4.471500e-02 : f32
    %152 = vector.broadcast %cst_51 : f32 to vector<16x128xf32>
    %153 = arith.mulf %152, %151 : vector<16x128xf32>
    %154 = arith.addf %149, %153 : vector<16x128xf32>
    %cst_52 = arith.constant 0.797884583 : f32
    %155 = vector.broadcast %cst_52 : f32 to vector<16x128xf32>
    %156 = arith.mulf %155, %154 : vector<16x128xf32>
    %157 = math.tanh %156 : vector<16x128xf32>
    %cst_53 = arith.constant 1.000000e+00 : f32
    %158 = vector.broadcast %cst_53 : f32 to vector<16x128xf32>
    %159 = arith.addf %158, %157 : vector<16x128xf32>
    %cst_54 = arith.constant 5.000000e-01 : f32
    %160 = vector.broadcast %cst_54 : f32 to vector<16x128xf32>
    %161 = arith.mulf %160, %159 : vector<16x128xf32>
    %162 = arith.mulf %149, %161 : vector<16x128xf32>
    %c0_55 = arith.constant 0 : index
    %c0_56 = arith.constant 0 : index
    %c0_57 = arith.constant 0 : index
    %163 = vector.load %arg5[%c0_55, %c0_56, %c0_57] : memref<2x128x32xf32, #tpu.memory_space<vmem>>, vector<1x128x32xf32>
    %164 = vector.shape_cast %163 : vector<1x128x32xf32> to vector<128x32xf32>
    %cst_58 = arith.constant dense<0.000000e+00> : vector<16x32xf32>
    %165 = tpu.matmul %162, %164, %cst_58 {dimension_numbers = #tpu.dot_dimension_numbers<[1], [0], [0], [1], [0, 0, 1, 1], [], []>} : vector<16x128xf32>, vector<128x32xf32>, vector<16x32xf32> -> vector<16x32xf32>
    %c36 = arith.constant 36 : index
    %c0_59 = arith.constant 0 : index
    %166 = vector.load %arg2[%c36, %c0_59] : memref<84x128xf32, #tpu.memory_space<vmem>>, vector<1x32xf32>
    %167 = vector.broadcast %166 : vector<1x32xf32> to vector<16x32xf32>
    %168 = arith.addf %165, %167 : vector<16x32xf32>
    %169 = arith.addf %143, %168 : vector<16x32xf32>
    %c37 = arith.constant 37 : index
    %c0_60 = arith.constant 0 : index
    %170 = vector.load %arg2[%c37, %c0_60] : memref<84x128xf32, #tpu.memory_space<vmem>>, vector<1x32xf32>
    %c38 = arith.constant 38 : index
    %c0_61 = arith.constant 0 : index
    %171 = vector.load %arg2[%c38, %c0_61] : memref<84x128xf32, #tpu.memory_space<vmem>>, vector<1x32xf32>
    %cst_62 = arith.constant dense<0.000000e+00> : vector<16xf32>
    %172 = vector.multi_reduction <add>, %169, %cst_62 [1] : vector<16x32xf32> to vector<16xf32>
    %173 = vector.shape_cast %172 : vector<16xf32> to vector<16x1xf32>
    %cst_63 = arith.constant 3.200000e+01 : f32
    %174 = vector.broadcast %cst_63 : f32 to vector<16x1xf32>
    %175 = arith.divf %173, %174 : vector<16x1xf32>
    %176 = vector.broadcast %175 : vector<16x1xf32> to vector<16x32xf32>
    %177 = arith.subf %169, %176 : vector<16x32xf32>
    %178 = arith.mulf %177, %177 : vector<16x32xf32>
    %cst_64 = arith.constant dense<0.000000e+00> : vector<16xf32>
    %179 = vector.multi_reduction <add>, %178, %cst_64 [1] : vector<16x32xf32> to vector<16xf32>
    %180 = vector.shape_cast %179 : vector<16xf32> to vector<16x1xf32>
    %cst_65 = arith.constant 3.200000e+01 : f32
    %181 = vector.broadcast %cst_65 : f32 to vector<16x1xf32>
    %182 = arith.divf %180, %181 : vector<16x1xf32>
    %183 = vector.broadcast %175 : vector<16x1xf32> to vector<16x32xf32>
    %184 = arith.subf %169, %183 : vector<16x32xf32>
    %cst_66 = arith.constant 9.99999974E-6 : f32
    %185 = vector.broadcast %cst_66 : f32 to vector<16x1xf32>
    %186 = arith.addf %182, %185 : vector<16x1xf32>
    %187 = math.rsqrt %186 : vector<16x1xf32>
    %188 = vector.broadcast %187 : vector<16x1xf32> to vector<16x32xf32>
    %189 = arith.mulf %184, %188 : vector<16x32xf32>
    %190 = vector.broadcast %170 : vector<1x32xf32> to vector<16x32xf32>
    %191 = arith.mulf %189, %190 : vector<16x32xf32>
    %192 = vector.broadcast %171 : vector<1x32xf32> to vector<16x32xf32>
    %193 = arith.addf %191, %192 : vector<16x32xf32>
    %c4 = arith.constant 4 : index
    %c0_67 = arith.constant 0 : index
    %c0_68 = arith.constant 0 : index
    %194 = vector.load %arg3[%c4, %c0_67, %c0_68] : memref<8x32x32xf32, #tpu.memory_space<vmem>>, vector<1x32x32xf32>
    %195 = vector.shape_cast %194 : vector<1x32x32xf32> to vector<32x32xf32>
    %c5 = arith.constant 5 : index
    %c0_69 = arith.constant 0 : index
    %c0_70 = arith.constant 0 : index
    %196 = vector.load %arg3[%c5, %c0_69, %c0_70] : memref<8x32x32xf32, #tpu.memory_space<vmem>>, vector<1x32x32xf32>
    %197 = vector.shape_cast %196 : vector<1x32x32xf32> to vector<32x32xf32>
    %c6 = arith.constant 6 : index
    %c0_71 = arith.constant 0 : index
    %c0_72 = arith.constant 0 : index
    %198 = vector.load %arg3[%c6, %c0_71, %c0_72] : memref<8x32x32xf32, #tpu.memory_space<vmem>>, vector<1x32x32xf32>
    %199 = vector.shape_cast %198 : vector<1x32x32xf32> to vector<32x32xf32>
    %c7 = arith.constant 7 : index
    %c0_73 = arith.constant 0 : index
    %c0_74 = arith.constant 0 : index
    %200 = vector.load %arg3[%c7, %c0_73, %c0_74] : memref<8x32x32xf32, #tpu.memory_space<vmem>>, vector<1x32x32xf32>
    %201 = vector.shape_cast %200 : vector<1x32x32xf32> to vector<32x32xf32>
    %cst_75 = arith.constant dense<0.000000e+00> : vector<16x32xf32>
    %202 = tpu.matmul %193, %195, %cst_75 {dimension_numbers = #tpu.dot_dimension_numbers<[1], [0], [0], [1], [0, 0, 1, 1], [], []>} : vector<16x32xf32>, vector<32x32xf32>, vector<16x32xf32> -> vector<16x32xf32>
    %c39 = arith.constant 39 : index
    %c0_76 = arith.constant 0 : index
    %203 = vector.load %arg2[%c39, %c0_76] : memref<84x128xf32, #tpu.memory_space<vmem>>, vector<1x32xf32>
    %204 = vector.broadcast %203 : vector<1x32xf32> to vector<16x32xf32>
    %205 = arith.addf %202, %204 : vector<16x32xf32>
    %cst_77 = arith.constant dense<0.000000e+00> : vector<16x32xf32>
    %206 = tpu.matmul %193, %197, %cst_77 {dimension_numbers = #tpu.dot_dimension_numbers<[1], [0], [0], [1], [0, 0, 1, 1], [], []>} : vector<16x32xf32>, vector<32x32xf32>, vector<16x32xf32> -> vector<16x32xf32>
    %c40 = arith.constant 40 : index
    %c0_78 = arith.constant 0 : index
    %207 = vector.load %arg2[%c40, %c0_78] : memref<84x128xf32, #tpu.memory_space<vmem>>, vector<1x32xf32>
    %208 = vector.broadcast %207 : vector<1x32xf32> to vector<16x32xf32>
    %209 = arith.addf %206, %208 : vector<16x32xf32>
    %cst_79 = arith.constant dense<0.000000e+00> : vector<16x32xf32>
    %210 = tpu.matmul %193, %199, %cst_79 {dimension_numbers = #tpu.dot_dimension_numbers<[1], [0], [0], [1], [0, 0, 1, 1], [], []>} : vector<16x32xf32>, vector<32x32xf32>, vector<16x32xf32> -> vector<16x32xf32>
    %c41 = arith.constant 41 : index
    %c0_80 = arith.constant 0 : index
    %211 = vector.load %arg2[%c41, %c0_80] : memref<84x128xf32, #tpu.memory_space<vmem>>, vector<1x32xf32>
    %212 = vector.broadcast %211 : vector<1x32xf32> to vector<16x32xf32>
    %213 = arith.addf %210, %212 : vector<16x32xf32>
    %214 = vector.shape_cast %205 : vector<16x32xf32> to vector<2x8x32xf32>
    %215 = vector.extract_strided_slice %214 {offsets = [0, 0, 0], sizes = [2, 8, 8], strides = [1, 1, 1]} : vector<2x8x32xf32> to vector<2x8x8xf32>
    %216 = vector.extract_strided_slice %214 {offsets = [0, 0, 8], sizes = [2, 8, 8], strides = [1, 1, 1]} : vector<2x8x32xf32> to vector<2x8x8xf32>
    %217 = vector.extract_strided_slice %214 {offsets = [0, 0, 16], sizes = [2, 8, 8], strides = [1, 1, 1]} : vector<2x8x32xf32> to vector<2x8x8xf32>
    %218 = vector.extract_strided_slice %214 {offsets = [0, 0, 24], sizes = [2, 8, 8], strides = [1, 1, 1]} : vector<2x8x32xf32> to vector<2x8x8xf32>
    %219 = tpu.concatenate %215, %216, %217, %218 in 0 : vector<2x8x8xf32>, vector<2x8x8xf32>, vector<2x8x8xf32>, vector<2x8x8xf32> -> vector<8x8x8xf32>
    %220 = vector.shape_cast %209 : vector<16x32xf32> to vector<2x8x32xf32>
    %221 = vector.extract_strided_slice %220 {offsets = [0, 0, 0], sizes = [2, 8, 8], strides = [1, 1, 1]} : vector<2x8x32xf32> to vector<2x8x8xf32>
    %222 = vector.extract_strided_slice %220 {offsets = [0, 0, 8], sizes = [2, 8, 8], strides = [1, 1, 1]} : vector<2x8x32xf32> to vector<2x8x8xf32>
    %223 = vector.extract_strided_slice %220 {offsets = [0, 0, 16], sizes = [2, 8, 8], strides = [1, 1, 1]} : vector<2x8x32xf32> to vector<2x8x8xf32>
    %224 = vector.extract_strided_slice %220 {offsets = [0, 0, 24], sizes = [2, 8, 8], strides = [1, 1, 1]} : vector<2x8x32xf32> to vector<2x8x8xf32>
    %225 = tpu.concatenate %221, %222, %223, %224 in 0 : vector<2x8x8xf32>, vector<2x8x8xf32>, vector<2x8x8xf32>, vector<2x8x8xf32> -> vector<8x8x8xf32>
    %226 = vector.shape_cast %213 : vector<16x32xf32> to vector<2x8x32xf32>
    %227 = vector.extract_strided_slice %226 {offsets = [0, 0, 0], sizes = [2, 8, 8], strides = [1, 1, 1]} : vector<2x8x32xf32> to vector<2x8x8xf32>
    %228 = vector.extract_strided_slice %226 {offsets = [0, 0, 8], sizes = [2, 8, 8], strides = [1, 1, 1]} : vector<2x8x32xf32> to vector<2x8x8xf32>
    %229 = vector.extract_strided_slice %226 {offsets = [0, 0, 16], sizes = [2, 8, 8], strides = [1, 1, 1]} : vector<2x8x32xf32> to vector<2x8x8xf32>
    %230 = vector.extract_strided_slice %226 {offsets = [0, 0, 24], sizes = [2, 8, 8], strides = [1, 1, 1]} : vector<2x8x32xf32> to vector<2x8x8xf32>
    %231 = tpu.concatenate %227, %228, %229, %230 in 0 : vector<2x8x8xf32>, vector<2x8x8xf32>, vector<2x8x8xf32>, vector<2x8x8xf32> -> vector<8x8x8xf32>
    %cst_81 = arith.constant dense<0.000000e+00> : vector<8x8x8xf32>
    %232 = tpu.matmul %219, %225, %cst_81 {dimension_numbers = #tpu.dot_dimension_numbers<[2], [2], [1], [1], [0, 0, 0, 1, 1, 1], [0], [0]>} : vector<8x8x8xf32>, vector<8x8x8xf32>, vector<8x8x8xf32> -> vector<8x8x8xf32>
    %cst_82 = arith.constant 0.353553385 : f32
    %233 = vector.broadcast %cst_82 : f32 to vector<8x8x8xf32>
    %234 = arith.mulf %232, %233 : vector<8x8x8xf32>
    %cst_83 = arith.constant -1.000000e+30 : f32
    %235 = vector.shape_cast %52 : vector<8x8xi1> to vector<1x8x8xi1>
    %236 = vector.broadcast %235 : vector<1x8x8xi1> to vector<8x8x8xi1>
    %237 = vector.broadcast %cst_83 : f32 to vector<8x8x8xf32>
    %238 = arith.select %236, %234, %237 : vector<8x8x8xi1>, vector<8x8x8xf32>
    %cst_84 = arith.constant dense<0xFF800000> : vector<8x8xf32>
    %239 = vector.multi_reduction <maximumf>, %238, %cst_84 [2] : vector<8x8x8xf32> to vector<8x8xf32>
    %240 = vector.shape_cast %239 : vector<8x8xf32> to vector<8x8x1xf32>
    %241 = vector.broadcast %240 : vector<8x8x1xf32> to vector<8x8x8xf32>
    %242 = arith.subf %238, %241 : vector<8x8x8xf32>
    %243 = math.exp %242 : vector<8x8x8xf32>
    %cst_85 = arith.constant dense<0.000000e+00> : vector<8x8xf32>
    %244 = vector.multi_reduction <add>, %243, %cst_85 [2] : vector<8x8x8xf32> to vector<8x8xf32>
    %245 = vector.shape_cast %244 : vector<8x8xf32> to vector<8x8x1xf32>
    %246 = tpu.reciprocal %245 {approx = true} : vector<8x8x1xf32> -> vector<8x8x1xf32>
    %247 = vector.broadcast %246 : vector<8x8x1xf32> to vector<8x8x8xf32>
    %248 = arith.mulf %243, %247 : vector<8x8x8xf32>
    %cst_86 = arith.constant dense<0.000000e+00> : vector<8x8x8xf32>
    %249 = tpu.matmul %248, %231, %cst_86 {dimension_numbers = #tpu.dot_dimension_numbers<[2], [1], [1], [2], [0, 0, 0, 1, 1, 2], [0], [0]>} : vector<8x8x8xf32>, vector<8x8x8xf32>, vector<8x8x8xf32> -> vector<8x8x8xf32>
    %250 = vector.extract_strided_slice %249 {offsets = [0, 0, 0], sizes = [2, 8, 8], strides = [1, 1, 1]} : vector<8x8x8xf32> to vector<2x8x8xf32>
    %251 = vector.extract_strided_slice %249 {offsets = [2, 0, 0], sizes = [2, 8, 8], strides = [1, 1, 1]} : vector<8x8x8xf32> to vector<2x8x8xf32>
    %252 = vector.extract_strided_slice %249 {offsets = [4, 0, 0], sizes = [2, 8, 8], strides = [1, 1, 1]} : vector<8x8x8xf32> to vector<2x8x8xf32>
    %253 = vector.extract_strided_slice %249 {offsets = [6, 0, 0], sizes = [2, 8, 8], strides = [1, 1, 1]} : vector<8x8x8xf32> to vector<2x8x8xf32>
    %254 = tpu.concatenate %250, %251, %252, %253 in 2 : vector<2x8x8xf32>, vector<2x8x8xf32>, vector<2x8x8xf32>, vector<2x8x8xf32> -> vector<2x8x32xf32>
    %255 = vector.shape_cast %254 : vector<2x8x32xf32> to vector<16x32xf32>
    %cst_87 = arith.constant dense<0.000000e+00> : vector<16x32xf32>
    %256 = tpu.matmul %255, %201, %cst_87 {dimension_numbers = #tpu.dot_dimension_numbers<[1], [0], [0], [1], [0, 0, 1, 1], [], []>} : vector<16x32xf32>, vector<32x32xf32>, vector<16x32xf32> -> vector<16x32xf32>
    %c42 = arith.constant 42 : index
    %c0_88 = arith.constant 0 : index
    %257 = vector.load %arg2[%c42, %c0_88] : memref<84x128xf32, #tpu.memory_space<vmem>>, vector<1x32xf32>
    %258 = vector.broadcast %257 : vector<1x32xf32> to vector<16x32xf32>
    %259 = arith.addf %256, %258 : vector<16x32xf32>
    %260 = arith.addf %193, %259 : vector<16x32xf32>
    %c43 = arith.constant 43 : index
    %c0_89 = arith.constant 0 : index
    %261 = vector.load %arg2[%c43, %c0_89] : memref<84x128xf32, #tpu.memory_space<vmem>>, vector<1x32xf32>
    %c44 = arith.constant 44 : index
    %c0_90 = arith.constant 0 : index
    %262 = vector.load %arg2[%c44, %c0_90] : memref<84x128xf32, #tpu.memory_space<vmem>>, vector<1x32xf32>
    %cst_91 = arith.constant dense<0.000000e+00> : vector<16xf32>
    %263 = vector.multi_reduction <add>, %260, %cst_91 [1] : vector<16x32xf32> to vector<16xf32>
    %264 = vector.shape_cast %263 : vector<16xf32> to vector<16x1xf32>
    %cst_92 = arith.constant 3.200000e+01 : f32
    %265 = vector.broadcast %cst_92 : f32 to vector<16x1xf32>
    %266 = arith.divf %264, %265 : vector<16x1xf32>
    %267 = vector.broadcast %266 : vector<16x1xf32> to vector<16x32xf32>
    %268 = arith.subf %260, %267 : vector<16x32xf32>
    %269 = arith.mulf %268, %268 : vector<16x32xf32>
    %cst_93 = arith.constant dense<0.000000e+00> : vector<16xf32>
    %270 = vector.multi_reduction <add>, %269, %cst_93 [1] : vector<16x32xf32> to vector<16xf32>
    %271 = vector.shape_cast %270 : vector<16xf32> to vector<16x1xf32>
    %cst_94 = arith.constant 3.200000e+01 : f32
    %272 = vector.broadcast %cst_94 : f32 to vector<16x1xf32>
    %273 = arith.divf %271, %272 : vector<16x1xf32>
    %274 = vector.broadcast %266 : vector<16x1xf32> to vector<16x32xf32>
    %275 = arith.subf %260, %274 : vector<16x32xf32>
    %cst_95 = arith.constant 9.99999974E-6 : f32
    %276 = vector.broadcast %cst_95 : f32 to vector<16x1xf32>
    %277 = arith.addf %273, %276 : vector<16x1xf32>
    %278 = math.rsqrt %277 : vector<16x1xf32>
    %279 = vector.broadcast %278 : vector<16x1xf32> to vector<16x32xf32>
    %280 = arith.mulf %275, %279 : vector<16x32xf32>
    %281 = vector.broadcast %261 : vector<1x32xf32> to vector<16x32xf32>
    %282 = arith.mulf %280, %281 : vector<16x32xf32>
    %283 = vector.broadcast %262 : vector<1x32xf32> to vector<16x32xf32>
    %284 = arith.addf %282, %283 : vector<16x32xf32>
    %c1_96 = arith.constant 1 : index
    %c0_97 = arith.constant 0 : index
    %c0_98 = arith.constant 0 : index
    %285 = vector.load %arg4[%c1_96, %c0_97, %c0_98] : memref<2x32x128xf32, #tpu.memory_space<vmem>>, vector<1x32x128xf32>
    %286 = vector.shape_cast %285 : vector<1x32x128xf32> to vector<32x128xf32>
    %cst_99 = arith.constant dense<0.000000e+00> : vector<16x128xf32>
    %287 = tpu.matmul %284, %286, %cst_99 {dimension_numbers = #tpu.dot_dimension_numbers<[1], [0], [0], [1], [0, 0, 1, 1], [], []>} : vector<16x32xf32>, vector<32x128xf32>, vector<16x128xf32> -> vector<16x128xf32>
    %c45 = arith.constant 45 : index
    %c0_100 = arith.constant 0 : index
    %288 = vector.load %arg2[%c45, %c0_100] : memref<84x128xf32, #tpu.memory_space<vmem>>, vector<1x128xf32>
    %289 = vector.broadcast %288 : vector<1x128xf32> to vector<16x128xf32>
    %290 = arith.addf %287, %289 : vector<16x128xf32>
    %291 = arith.mulf %290, %290 : vector<16x128xf32>
    %292 = arith.mulf %290, %291 : vector<16x128xf32>
    %cst_101 = arith.constant 4.471500e-02 : f32
    %293 = vector.broadcast %cst_101 : f32 to vector<16x128xf32>
    %294 = arith.mulf %293, %292 : vector<16x128xf32>
    %295 = arith.addf %290, %294 : vector<16x128xf32>
    %cst_102 = arith.constant 0.797884583 : f32
    %296 = vector.broadcast %cst_102 : f32 to vector<16x128xf32>
    %297 = arith.mulf %296, %295 : vector<16x128xf32>
    %298 = math.tanh %297 : vector<16x128xf32>
    %cst_103 = arith.constant 1.000000e+00 : f32
    %299 = vector.broadcast %cst_103 : f32 to vector<16x128xf32>
    %300 = arith.addf %299, %298 : vector<16x128xf32>
    %cst_104 = arith.constant 5.000000e-01 : f32
    %301 = vector.broadcast %cst_104 : f32 to vector<16x128xf32>
    %302 = arith.mulf %301, %300 : vector<16x128xf32>
    %303 = arith.mulf %290, %302 : vector<16x128xf32>
    %c1_105 = arith.constant 1 : index
    %c0_106 = arith.constant 0 : index
    %c0_107 = arith.constant 0 : index
    %304 = vector.load %arg5[%c1_105, %c0_106, %c0_107] : memref<2x128x32xf32, #tpu.memory_space<vmem>>, vector<1x128x32xf32>
    %305 = vector.shape_cast %304 : vector<1x128x32xf32> to vector<128x32xf32>
    %cst_108 = arith.constant dense<0.000000e+00> : vector<16x32xf32>
    %306 = tpu.matmul %303, %305, %cst_108 {dimension_numbers = #tpu.dot_dimension_numbers<[1], [0], [0], [1], [0, 0, 1, 1], [], []>} : vector<16x128xf32>, vector<128x32xf32>, vector<16x32xf32> -> vector<16x32xf32>
    %c46 = arith.constant 46 : index
    %c0_109 = arith.constant 0 : index
    %307 = vector.load %arg2[%c46, %c0_109] : memref<84x128xf32, #tpu.memory_space<vmem>>, vector<1x32xf32>
    %308 = vector.broadcast %307 : vector<1x32xf32> to vector<16x32xf32>
    %309 = arith.addf %306, %308 : vector<16x32xf32>
    %310 = arith.addf %284, %309 : vector<16x32xf32>
    %c47 = arith.constant 47 : index
    %c0_110 = arith.constant 0 : index
    %311 = vector.load %arg2[%c47, %c0_110] : memref<84x128xf32, #tpu.memory_space<vmem>>, vector<1x32xf32>
    %c48 = arith.constant 48 : index
    %c0_111 = arith.constant 0 : index
    %312 = vector.load %arg2[%c48, %c0_111] : memref<84x128xf32, #tpu.memory_space<vmem>>, vector<1x32xf32>
    %cst_112 = arith.constant dense<0.000000e+00> : vector<16xf32>
    %313 = vector.multi_reduction <add>, %310, %cst_112 [1] : vector<16x32xf32> to vector<16xf32>
    %314 = vector.shape_cast %313 : vector<16xf32> to vector<16x1xf32>
    %cst_113 = arith.constant 3.200000e+01 : f32
    %315 = vector.broadcast %cst_113 : f32 to vector<16x1xf32>
    %316 = arith.divf %314, %315 : vector<16x1xf32>
    %317 = vector.broadcast %316 : vector<16x1xf32> to vector<16x32xf32>
    %318 = arith.subf %310, %317 : vector<16x32xf32>
    %319 = arith.mulf %318, %318 : vector<16x32xf32>
    %cst_114 = arith.constant dense<0.000000e+00> : vector<16xf32>
    %320 = vector.multi_reduction <add>, %319, %cst_114 [1] : vector<16x32xf32> to vector<16xf32>
    %321 = vector.shape_cast %320 : vector<16xf32> to vector<16x1xf32>
    %cst_115 = arith.constant 3.200000e+01 : f32
    %322 = vector.broadcast %cst_115 : f32 to vector<16x1xf32>
    %323 = arith.divf %321, %322 : vector<16x1xf32>
    %324 = vector.broadcast %316 : vector<16x1xf32> to vector<16x32xf32>
    %325 = arith.subf %310, %324 : vector<16x32xf32>
    %cst_116 = arith.constant 9.99999974E-6 : f32
    %326 = vector.broadcast %cst_116 : f32 to vector<16x1xf32>
    %327 = arith.addf %323, %326 : vector<16x1xf32>
    %328 = math.rsqrt %327 : vector<16x1xf32>
    %329 = vector.broadcast %328 : vector<16x1xf32> to vector<16x32xf32>
    %330 = arith.mulf %325, %329 : vector<16x32xf32>
    %331 = vector.broadcast %311 : vector<1x32xf32> to vector<16x32xf32>
    %332 = arith.mulf %330, %331 : vector<16x32xf32>
    %333 = vector.broadcast %312 : vector<1x32xf32> to vector<16x32xf32>
    %334 = arith.addf %332, %333 : vector<16x32xf32>
    %c49 = arith.constant 49 : index
    %c0_117 = arith.constant 0 : index
    %335 = vector.load %arg2[%c49, %c0_117] : memref<84x128xf32, #tpu.memory_space<vmem>>, vector<1x32xf32>
    %c50 = arith.constant 50 : index
    %c0_118 = arith.constant 0 : index
    %336 = vector.load %arg2[%c50, %c0_118] : memref<84x128xf32, #tpu.memory_space<vmem>>, vector<1x32xf32>
    %cst_119 = arith.constant dense<0.000000e+00> : vector<16xf32>
    %337 = vector.multi_reduction <add>, %334, %cst_119 [1] : vector<16x32xf32> to vector<16xf32>
    %338 = vector.shape_cast %337 : vector<16xf32> to vector<16x1xf32>
    %cst_120 = arith.constant 3.200000e+01 : f32
    %339 = vector.broadcast %cst_120 : f32 to vector<16x1xf32>
    %340 = arith.divf %338, %339 : vector<16x1xf32>
    %341 = vector.broadcast %340 : vector<16x1xf32> to vector<16x32xf32>
    %342 = arith.subf %334, %341 : vector<16x32xf32>
    %343 = arith.mulf %342, %342 : vector<16x32xf32>
    %cst_121 = arith.constant dense<0.000000e+00> : vector<16xf32>
    %344 = vector.multi_reduction <add>, %343, %cst_121 [1] : vector<16x32xf32> to vector<16xf32>
    %345 = vector.shape_cast %344 : vector<16xf32> to vector<16x1xf32>
    %cst_122 = arith.constant 3.200000e+01 : f32
    %346 = vector.broadcast %cst_122 : f32 to vector<16x1xf32>
    %347 = arith.divf %345, %346 : vector<16x1xf32>
    %348 = vector.broadcast %340 : vector<16x1xf32> to vector<16x32xf32>
    %349 = arith.subf %334, %348 : vector<16x32xf32>
    %cst_123 = arith.constant 9.99999974E-6 : f32
    %350 = vector.broadcast %cst_123 : f32 to vector<16x1xf32>
    %351 = arith.addf %347, %350 : vector<16x1xf32>
    %352 = math.rsqrt %351 : vector<16x1xf32>
    %353 = vector.broadcast %352 : vector<16x1xf32> to vector<16x32xf32>
    %354 = arith.mulf %349, %353 : vector<16x32xf32>
    %355 = vector.broadcast %335 : vector<1x32xf32> to vector<16x32xf32>
    %356 = arith.mulf %354, %355 : vector<16x32xf32>
    %357 = vector.broadcast %336 : vector<1x32xf32> to vector<16x32xf32>
    %358 = arith.addf %356, %357 : vector<16x32xf32>
    %c52 = arith.constant 52 : index
    %c0_124 = arith.constant 0 : index
    %359 = vector.load %arg2[%c52, %c0_124] : memref<84x128xf32, #tpu.memory_space<vmem>>, vector<32x128xf32>
    %cst_125 = arith.constant dense<0.000000e+00> : vector<16x128xf32>
    %360 = tpu.matmul %358, %359, %cst_125 {dimension_numbers = #tpu.dot_dimension_numbers<[1], [0], [0], [1], [0, 0, 1, 1], [], []>} : vector<16x32xf32>, vector<32x128xf32>, vector<16x128xf32> -> vector<16x128xf32>
    %c51 = arith.constant 51 : index
    %c0_126 = arith.constant 0 : index
    %361 = vector.load %arg2[%c51, %c0_126] : memref<84x128xf32, #tpu.memory_space<vmem>>, vector<1x128xf32>
    %362 = vector.broadcast %361 : vector<1x128xf32> to vector<16x128xf32>
    %363 = arith.addf %360, %362 : vector<16x128xf32>
    %c0_127 = arith.constant 0 : index
    %c0_128 = arith.constant 0 : index
    %364 = vector.load %arg6[%c0_127, %c0_128] : memref<16x128xf32, #tpu.memory_space<vmem>>, vector<16x128xf32>
    tpu.vector_store %arg6[%c0_127, %c0_128], %363 {strides = array<i32>} : memref<16x128xf32, #tpu.memory_space<vmem>>, vector<16x128xf32>,
    return
  }
}

</mosaic_0001>

<llo_original>
// kernel: fast_recurrent_transformer_forward.1
$region0: #{fast_recurrent_transformer_forward.1}
  #allocation0 [shape = 'u32[]', space=smem, size = 0x4, offset = 0x4, fixed_abs, tag = 'smem constant byte address 0x4 - core index']
  #allocation1 [shape = 'u32[144,128]{1,0:T(1,128)}', space=vmem, size = 0x12000, scoped, tag = 'internal scratch']
  %s0 = inlined_call_operand.vmem [shape: s32[16,2], index: 0, kind: input, shape index: {}]
  %s1 = inlined_call_operand.vmem [shape: f32[16,3], index: 1, kind: input, shape index: {}]
  %s2 = inlined_call_operand.vmem [shape: f32[84,128], index: 2, kind: input, shape index: {}]
  %s3 = inlined_call_operand.vmem [shape: f32[8,32,32], index: 3, kind: input, shape index: {}]
  %s4 = inlined_call_operand.hbm [shape: f32[2,32,128], index: 4, kind: input, shape index: {}]
  %s5 = inlined_call_operand.vmem [shape: f32[2,128,32], index: 5, kind: input, shape index: {}]
  %s6 = inlined_call_operand.vmem [shape: f32[16,128], index: 6, kind: output, shape index: {}]
  %s7 = sld [smem:[#allocation0]]
  $region38: #{fast_recurrent_transformer_forward.1} parent=0
    _
  %s9 = ssub.s32 1, %s7
  %s10 = scalar_select 0, %s9, %s7
  $region1: #{fast_recurrent_transformer_forward.1} parent=0
    #allocation2 [shape = 'u8[32768]{0}', space=vmem, size = 0x8000, scoped, tag = 'input window, operand 4, single buffered']
    #allocation3 [shape = 's32[1]{0}', space=sflag, size = 0x4, scoped, tag = 'scoped memory for fast_recurrent_transformer_forward.1']
    %11 = vsyncpa [#allocation3], 0
    // Predicated region
    $region2: #{fast_recurrent_transformer_forward.1} parent=1 // pred_check
      _
    $region3: #{fast_recurrent_transformer_forward.1} parent=1 // pred_check_branch
      %13 = sbr.rel (0) target = $region5
    $region4: #{fast_recurrent_transformer_forward.1} parent=1 // pred_region
      _
    $region5: #{fast_recurrent_transformer_forward.1} parent=1 // pred_fallthru
      _
    // Predicated region
    $region6: #{fast_recurrent_transformer_forward.1} parent=1 // pred_check
      _
    $region7: #{fast_recurrent_transformer_forward.1} parent=1 // pred_check_branch
      %15 = sbr.rel (0) target = $region9
    $region8: #{fast_recurrent_transformer_forward.1} parent=1 // pred_region
      _
    $region9: #{fast_recurrent_transformer_forward.1} parent=1 // pred_fallthru
      _
    // Predicated region
    $region10: #{fast_recurrent_transformer_forward.1} parent=1 // pred_check
      _
    $region11: #{fast_recurrent_transformer_forward.1} parent=1 // pred_check_branch
      %17 = sbr.rel (0) target = $region13
    $region12: #{fast_recurrent_transformer_forward.1} parent=1 // pred_region
      _
    $region13: #{fast_recurrent_transformer_forward.1} parent=1 // pred_fallthru
      _
    // Predicated region
    $region14: #{fast_recurrent_transformer_forward.1} parent=1 // pred_check
      _
    $region15: #{fast_recurrent_transformer_forward.1} parent=1 // pred_check_branch
      %19 = sbr.rel (0) target = $region17
    $region16: #{fast_recurrent_transformer_forward.1} parent=1 // pred_region
      _
    $region17: #{fast_recurrent_transformer_forward.1} parent=1 // pred_fallthru
      _
    // Predicated region
    $region18: #{fast_recurrent_transformer_forward.1} parent=1 // pred_check
      _
    $region19: #{fast_recurrent_transformer_forward.1} parent=1 // pred_check_branch
      %21 = sbr.rel (0) target = $region21
    $region20: #{fast_recurrent_transformer_forward.1} parent=1 // pred_region
      %s23 = ssub.s32 1024, 1024
      %24 = vsyncadd [#allocation3], %s23
      %s25 = sshll.u32 [#allocation2], 4
      %s26 = int_to_ptr.vmem [resolvable:$true] %s25
      %31 = dma.hbm_to_vmem [thread:$0]  %s4, 1024, %s26, [#allocation3], 128, 128, 8
    $region21: #{fast_recurrent_transformer_forward.1} parent=1 // pred_fallthru
      _
    // Predicated region
    $region22: #{fast_recurrent_transformer_forward.1} parent=1 // pred_check
      _
    $region23: #{fast_recurrent_transformer_forward.1} parent=1 // pred_check_branch
      %33 = sbr.rel (0) target = $region25
    $region24: #{fast_recurrent_transformer_forward.1} parent=1 // pred_region
      _
    $region25: #{fast_recurrent_transformer_forward.1} parent=1 // pred_fallthru
      _
    // Predicated region
    $region26: #{fast_recurrent_transformer_forward.1} parent=1 // pred_check
      _
    $region27: #{fast_recurrent_transformer_forward.1} parent=1 // pred_check_branch
      %35 = sbr.rel (0) target = $region29
    $region28: #{fast_recurrent_transformer_forward.1} parent=1 // pred_region
      %36 = dma.done [#allocation3], 1024
    $region29: #{fast_recurrent_transformer_forward.1} parent=1 // pred_fallthru
      _
    %v37 = vld [vmem:[%s0] sm:$0xff]
    %v38 = vld [vmem:[%s0 + $0x8] sm:$0xff]
    %v39 = vlaneseq
    %v40 = vand.u32 %v39, 127
    %41 = vset.pattern.permute.xlu0 0
    %42 = vperm.xlu0 %41, %v37
    %v43 = vpop.permute.xlu0 %42
    %44 = vset.pattern.permute.xlu0 0
    %45 = vperm.xlu0 %44, %v38
    %v46 = vpop.permute.xlu0 %45
    %vm47 = vcmp.eq.s32.totalorder %v43, %v40
    %vm48 = vcmp.eq.s32.totalorder %v46, %v40
    %v49 = vsel %vm47, 1.0, 0.0
    %v50 = vsel %vm48, 1.0, 0.0
    %51 = vset.pattern.permute.xlu0 1
    %52 = vperm.xlu0 %51, %v37
    %v53 = vpop.permute.xlu0 %52
    %54 = vset.pattern.permute.xlu0 1
    %55 = vperm.xlu0 %54, %v38
    %v56 = vpop.permute.xlu0 %55
    %vm57 = vcmp.eq.s32.totalorder %v53, %v40
    %vm58 = vcmp.eq.s32.totalorder %v56, %v40
    %v59 = vsel %vm57, 1.0, 0.0
    %v60 = vsel %vm58, 1.0, 0.0
    %v61 = vld [vmem:[%s2] sm:$0xff]
    %v62 = vld [vmem:[%s2 + $0x8] sm:$0xff]
    %v63 = vld [vmem:[%s2 + $0x10] sm:$0xff]
    %vm64 = vcmask 64512
    %v66 = vsel %vm64, %v59, 0
    %v69 = vsel %vm64, %v60, 0
    %71 = vmatprep.subr.mxu0 0.0
    %72 = vmatpush1.msra.mxu0 %v63
    %73 = vmatprep.subr.mxu0 0.0
    %74 = vmatpush1.msra.mxu0 0.0
    %75 = vmatprep.subr.mxu0 0.0
    %76 = vmatpush1.msra.mxu0 0.0
    %77 = vmatprep.subr.mxu0 0.0
    %78 = vmatpush1.msra.mxu0 0.0
    %79 = vmatprep.subr.mxu0 0.0
    %80 = vmatpush1.msra.mxu0 0.0
    %81 = vmatprep.subr.mxu0 0.0
    %82 = vmatpush1.msra.mxu0 0.0
    %83 = vmatprep.subr.mxu0 0.0
    %84 = vmatpush1.msra.mxu0 0.0
    %85 = vmatprep.subr.mxu0 0.0
    %86 = vmatpush1.msra.mxu0 0.0
    %87 = vmatprep.subr.mxu0 0.0
    %88 = vmatpush1.msra.mxu0 0.0
    %89 = vmatprep.subr.mxu0 0.0
    %90 = vmatpush1.msra.mxu0 0.0
    %91 = vmatprep.subr.mxu0 0.0
    %92 = vmatpush1.msra.mxu0 0.0
    %93 = vmatprep.subr.mxu0 0.0
    %94 = vmatpush1.msra.mxu0 0.0
    %95 = vmatprep.subr.mxu0 0.0
    %96 = vmatpush1.msra.mxu0 0.0
    %97 = vmatprep.subr.mxu0 0.0
    %98 = vmatpush1.msra.mxu0 0.0
    %99 = vmatprep.subr.mxu0 0.0
    %100 = vmatpush1.msra.mxu0 0.0
    %101 = vmatprep.subr.mxu0 0.0
    %102 = vmatpush1.msra.mxu0 0.0
    %103 = vmatprep.subr.mxu0 0.0
    %104 = vmatpush1.msra.mxu0 0.0
    %105 = vmatprep.subr.mxu0 0.0
    %106 = vmatpush1.msra.mxu0 0.0
    %107 = vmatprep.subr.mxu0 0.0
    %108 = vmatpush1.msra.mxu0 0.0
    %109 = vmatprep.subr.mxu0 0.0
    %110 = vmatpush1.msra.mxu0 0.0
    %111 = vmatprep.subr.mxu0 0.0
    %112 = vmatpush1.msra.mxu0 0.0
    %113 = vmatprep.subr.mxu0 0.0
    %114 = vmatpush1.msra.mxu0 0.0
    %115 = vmatprep.subr.mxu0 0.0
    %116 = vmatpush1.msra.mxu0 0.0
    %117 = vmatprep.subr.mxu0 0.0
    %118 = vmatpush1.msra.mxu0 0.0
    %119 = vmatprep.subr.mxu0 0.0
    %120 = vmatpush1.msra.mxu0 0.0
    %121 = vmatprep.subr.mxu0 0.0
    %122 = vmatpush1.msra.mxu0 0.0
    %123 = vmatprep.subr.mxu0 0.0
    %124 = vmatpush1.msra.mxu0 0.0
    %125 = vmatprep.subr.mxu0 0.0
    %126 = vmatpush1.msra.mxu0 0.0
    %127 = vmatprep.subr.mxu0 0.0
    %128 = vmatpush1.msra.mxu0 0.0
    %129 = vmatprep.subr.mxu0 0.0
    %130 = vmatpush1.msra.mxu0 0.0
    %131 = vmatprep.subr.mxu0 0.0
    %132 = vmatpush1.msra.mxu0 0.0
    %133 = vmatprep.subr.mxu0 0.0
    %134 = vmatpush1.msra.mxu0 0.0
    %135 = vmatprep.mubr.f32.mxu0 0.0
    %136 = vmatmul.mubr.f32.gmra.mrb[0].mxu0 %v66
    %v137 = vpop.f32.mrb[0].mxu0
    %v138 = vadd.f32 0.0, %v137
    %v139 = vpop.f32.mrb[0].mxu0
    %140 = vmatprep.mubr.f32.mxu0 0.0
    %141 = vmatmul.mubr.f32.gmra.mrb[0].mxu0 %v69
    %v142 = vpop.f32.mrb[0].mxu0
    %v143 = vadd.f32 0.0, %v142
    %v144 = vpop.f32.mrb[0].mxu0
    %145 = vdwg.mxu0
    %vm146 = vcmask 130048
    %v148 = vsel %vm146, %v49, 0
    %v151 = vsel %vm146, %v50, 0
    %153 = vmatprep.subr.mxu0 0.0
    %154 = vmatpush1.msra.mxu0 %v61
    %155 = vmatprep.subr.mxu0 0.0
    %156 = vmatpush1.msra.mxu0 %v62
    %157 = vmatprep.subr.mxu0 0.0
    %158 = vmatpush1.msra.mxu0 0.0
    %159 = vmatprep.subr.mxu0 0.0
    %160 = vmatpush1.msra.mxu0 0.0
    %161 = vmatprep.subr.mxu0 0.0
    %162 = vmatpush1.msra.mxu0 0.0
    %163 = vmatprep.subr.mxu0 0.0
    %164 = vmatpush1.msra.mxu0 0.0
    %165 = vmatprep.subr.mxu0 0.0
    %166 = vmatpush1.msra.mxu0 0.0
    %167 = vmatprep.subr.mxu0 0.0
    %168 = vmatpush1.msra.mxu0 0.0
    %169 = vmatprep.subr.mxu0 0.0
    %170 = vmatpush1.msra.mxu0 0.0
    %171 = vmatprep.subr.mxu0 0.0
    %172 = vmatpush1.msra.mxu0 0.0
    %173 = vmatprep.subr.mxu0 0.0
    %174 = vmatpush1.msra.mxu0 0.0
    %175 = vmatprep.subr.mxu0 0.0
    %176 = vmatpush1.msra.mxu0 0.0
    %177 = vmatprep.subr.mxu0 0.0
    %178 = vmatpush1.msra.mxu0 0.0
    %179 = vmatprep.subr.mxu0 0.0
    %180 = vmatpush1.msra.mxu0 0.0
    %181 = vmatprep.subr.mxu0 0.0
    %182 = vmatpush1.msra.mxu0 0.0
    %183 = vmatprep.subr.mxu0 0.0
    %184 = vmatpush1.msra.mxu0 0.0
    %185 = vmatprep.subr.mxu0 0.0
    %186 = vmatpush1.msra.mxu0 0.0
    %187 = vmatprep.subr.mxu0 0.0
    %188 = vmatpush1.msra.mxu0 0.0
    %189 = vmatprep.subr.mxu0 0.0
    %190 = vmatpush1.msra.mxu0 0.0
    %191 = vmatprep.subr.mxu0 0.0
    %192 = vmatpush1.msra.mxu0 0.0
    %193 = vmatprep.subr.mxu0 0.0
    %194 = vmatpush1.msra.mxu0 0.0
    %195 = vmatprep.subr.mxu0 0.0
    %196 = vmatpush1.msra.mxu0 0.0
    %197 = vmatprep.subr.mxu0 0.0
    %198 = vmatpush1.msra.mxu0 0.0
    %199 = vmatprep.subr.mxu0 0.0
    %200 = vmatpush1.msra.mxu0 0.0
    %201 = vmatprep.subr.mxu0 0.0
    %202 = vmatpush1.msra.mxu0 0.0
    %203 = vmatprep.subr.mxu0 0.0
    %204 = vmatpush1.msra.mxu0 0.0
    %205 = vmatprep.subr.mxu0 0.0
    %206 = vmatpush1.msra.mxu0 0.0
    %207 = vmatprep.subr.mxu0 0.0
    %208 = vmatpush1.msra.mxu0 0.0
    %209 = vmatprep.subr.mxu0 0.0
    %210 = vmatpush1.msra.mxu0 0.0
    %211 = vmatprep.subr.mxu0 0.0
    %212 = vmatpush1.msra.mxu0 0.0
    %213 = vmatprep.subr.mxu0 0.0
    %214 = vmatpush1.msra.mxu0 0.0
    %215 = vmatprep.subr.mxu0 0.0
    %216 = vmatpush1.msra.mxu0 0.0
    %217 = vmatprep.mubr.f32.mxu0 0.0
    %218 = vmatmul.mubr.f32.gmra.mrb[0].mxu0 %v148
    %v219 = vpop.f32.mrb[0].mxu0
    %v220 = vadd.f32 %v138, %v219
    %v221 = vpop.f32.mrb[0].mxu0
    %222 = vmatprep.mubr.f32.mxu0 0.0
    %223 = vmatmul.mubr.f32.gmra.mrb[0].mxu0 %v151
    %v224 = vpop.f32.mrb[0].mxu0
    %v225 = vadd.f32 %v143, %v224
    %v226 = vpop.f32.mrb[0].mxu0
    %227 = vdwg.mxu0
    %v228 = vld [vmem:[%s1] sm:$0xff]
    %v229 = vld [vmem:[%s1 + $0x8] sm:$0xff]
    %v230 = vld [vmem:[%s2 + $0x18] sm:$0x1]
    %232 = vset.pattern.permute.xlu0 0
    %233 = vperm.xlu0 %232, %v228
    %v234 = vpop.permute.xlu0 %233
    %237 = vset.pattern.permute.xlu0 0
    %238 = vperm.xlu0 %237, %v229
    %v239 = vpop.permute.xlu0 %238
    %v241 = vlaneseq
    %v242 = vshrl.u32 %v241, 7
    %v243 = vsub.s32 0, %v242
    %v244 = vrot.slane %v230, %v243
    %v245 = vmul.f32 %v234, %v244
    %v246 = vmul.f32 %v239, %v244
    %v247 = vadd.f32 %v220, %v245
    %v248 = vadd.f32 %v225, %v246
    %v249 = vld [vmem:[%s2 + $0x19] sm:$0x1]
    %250 = vset.pattern.permute.xlu0 1
    %251 = vperm.xlu0 %250, %v228
    %v252 = vpop.permute.xlu0 %251
    %254 = vset.pattern.permute.xlu0 1
    %255 = vperm.xlu0 %254, %v229
    %v256 = vpop.permute.xlu0 %255
    %v258 = vlaneseq
    %v259 = vshrl.u32 %v258, 7
    %v260 = vsub.s32 0, %v259
    %v261 = vrot.slane %v249, %v260
    %v262 = vmul.f32 %v252, %v261
    %v263 = vmul.f32 %v256, %v261
    %v264 = vadd.f32 %v247, %v262
    %v265 = vadd.f32 %v248, %v263
    %v266 = vld [vmem:[%s2 + $0x1a] sm:$0x1]
    %267 = vset.pattern.permute.xlu0 2
    %268 = vperm.xlu0 %267, %v228
    %v269 = vpop.permute.xlu0 %268
    %271 = vset.pattern.permute.xlu0 2
    %272 = vperm.xlu0 %271, %v229
    %v273 = vpop.permute.xlu0 %272
    %v275 = vlaneseq
    %v276 = vshrl.u32 %v275, 7
    %v277 = vsub.s32 0, %v276
    %v278 = vrot.slane %v266, %v277
    %v279 = vmul.f32 %v269, %v278
    %v280 = vmul.f32 %v273, %v278
    %v281 = vadd.f32 %v264, %v279
    %v282 = vadd.f32 %v265, %v280
    %v283 = vld [vmem:[%s2 + $0x1b] sm:$0x1]
    %v284 = vlaneseq
    %v285 = vshrl.u32 %v284, 7
    %v286 = vsub.s32 0, %v285
    %v287 = vrot.slane %v283, %v286
    %v288 = vadd.f32 %v281, %v287
    %v289 = vadd.f32 %v282, %v287
    %v290 = vld [vmem:[%s2 + $0x1c] sm:$0x1]
    %v293 = vrot.slane %v288, 7
    %v294 = vrot.slane %v289, 7
    %vm297 = vcmask 1040384
    %v298 = vsel %vm297, %v290, %v293
    %v299 = vsel %vm297, %v290, %v294
    %v300 = vlaneseq
    %v301 = vshrl.u32 %v300, 7
    %vm302 = vcmp.le.s32.totalorder %v40, %v301
    %v303 = vld [vmem:[%s3] sm:$0xff]
    %v304 = vld [vmem:[%s3 + $0x8] sm:$0xff]
    %v305 = vld [vmem:[%s3 + $0x10] sm:$0xff]
    %v306 = vld [vmem:[%s3 + $0x18] sm:$0xff]
    %s307 = scalar_lea.vmem %s3, 32
    %v308 = vld [vmem:[%s307] sm:$0xff]
    %v309 = vld [vmem:[%s307 + $0x8] sm:$0xff]
    %v310 = vld [vmem:[%s307 + $0x10] sm:$0xff]
    %v311 = vld [vmem:[%s307 + $0x18] sm:$0xff]
    %s312 = scalar_lea.vmem %s3, 64
    %v313 = vld [vmem:[%s312] sm:$0xff]
    %v314 = vld [vmem:[%s312 + $0x8] sm:$0xff]
    %v315 = vld [vmem:[%s312 + $0x10] sm:$0xff]
    %v316 = vld [vmem:[%s312 + $0x18] sm:$0xff]
    %s317 = scalar_lea.vmem %s3, 96
    %v318 = vld [vmem:[%s317] sm:$0xff]
    %v319 = vld [vmem:[%s317 + $0x8] sm:$0xff]
    %v320 = vld [vmem:[%s317 + $0x10] sm:$0xff]
    %v321 = vld [vmem:[%s317 + $0x18] sm:$0xff]
    %v322 = vld [vmem:[%s2 + $0x1d] sm:$0x1]
    %v323 = vlaneseq
    %v324 = vshrl.u32 %v323, 7
    %v325 = vsub.s32 0, %v324
    %v326 = vrot.slane %v322, %v325
    %vm327 = vcmask 261120
    %v329 = vsel %vm327, %v298, 0
    %v332 = vsel %vm327, %v299, 0
    %334 = vmatprep.subr.mxu0 0.0
    %335 = vmatpush1.msra.mxu0 %v303
    %336 = vmatprep.subr.mxu0 0.0
    %337 = vmatpush1.msra.mxu0 %v304
    %338 = vmatprep.subr.mxu0 0.0
    %339 = vmatpush1.msra.mxu0 %v305
    %340 = vmatprep.subr.mxu0 0.0
    %341 = vmatpush1.msra.mxu0 %v306
    %342 = vmatprep.subr.mxu0 0.0
    %343 = vmatpush1.msra.mxu0 0.0
    %344 = vmatprep.subr.mxu0 0.0
    %345 = vmatpush1.msra.mxu0 0.0
    %346 = vmatprep.subr.mxu0 0.0
    %347 = vmatpush1.msra.mxu0 0.0
    %348 = vmatprep.subr.mxu0 0.0
    %349 = vmatpush1.msra.mxu0 0.0
    %350 = vmatprep.subr.mxu0 0.0
    %351 = vmatpush1.msra.mxu0 0.0
    %352 = vmatprep.subr.mxu0 0.0
    %353 = vmatpush1.msra.mxu0 0.0
    %354 = vmatprep.subr.mxu0 0.0
    %355 = vmatpush1.msra.mxu0 0.0
    %356 = vmatprep.subr.mxu0 0.0
    %357 = vmatpush1.msra.mxu0 0.0
    %358 = vmatprep.subr.mxu0 0.0
    %359 = vmatpush1.msra.mxu0 0.0
    %360 = vmatprep.subr.mxu0 0.0
    %361 = vmatpush1.msra.mxu0 0.0
    %362 = vmatprep.subr.mxu0 0.0
    %363 = vmatpush1.msra.mxu0 0.0
    %364 = vmatprep.subr.mxu0 0.0
    %365 = vmatpush1.msra.mxu0 0.0
    %366 = vmatprep.subr.mxu0 0.0
    %367 = vmatpush1.msra.mxu0 0.0
    %368 = vmatprep.subr.mxu0 0.0
    %369 = vmatpush1.msra.mxu0 0.0
    %370 = vmatprep.subr.mxu0 0.0
    %371 = vmatpush1.msra.mxu0 0.0
    %372 = vmatprep.subr.mxu0 0.0
    %373 = vmatpush1.msra.mxu0 0.0
    %374 = vmatprep.subr.mxu0 0.0
    %375 = vmatpush1.msra.mxu0 0.0
    %376 = vmatprep.subr.mxu0 0.0
    %377 = vmatpush1.msra.mxu0 0.0
    %378 = vmatprep.subr.mxu0 0.0
    %379 = vmatpush1.msra.mxu0 0.0
    %380 = vmatprep.subr.mxu0 0.0
    %381 = vmatpush1.msra.mxu0 0.0
    %382 = vmatprep.subr.mxu0 0.0
    %383 = vmatpush1.msra.mxu0 0.0
    %384 = vmatprep.subr.mxu0 0.0
    %385 = vmatpush1.msra.mxu0 0.0
    %386 = vmatprep.subr.mxu0 0.0
    %387 = vmatpush1.msra.mxu0 0.0
    %388 = vmatprep.subr.mxu0 0.0
    %389 = vmatpush1.msra.mxu0 0.0
    %390 = vmatprep.subr.mxu0 0.0
    %391 = vmatpush1.msra.mxu0 0.0
    %392 = vmatprep.subr.mxu0 0.0
    %393 = vmatpush1.msra.mxu0 0.0
    %394 = vmatprep.subr.mxu0 0.0
    %395 = vmatpush1.msra.mxu0 0.0
    %396 = vmatprep.subr.mxu0 0.0
    %397 = vmatpush1.msra.mxu0 0.0
    %398 = vmatprep.mubr.f32.mxu0 0.0
    %399 = vmatmul.mubr.f32.gmra.mrb[0].mxu0 %v329
    %v400 = vpop.f32.mrb[0].mxu0
    %v401 = vadd.f32 %v326, %v400
    %v402 = vpop.f32.mrb[0].mxu0
    %403 = vmatprep.mubr.f32.mxu0 0.0
    %404 = vmatmul.mubr.f32.gmra.mrb[0].mxu0 %v332
    %v405 = vpop.f32.mrb[0].mxu0
    %v406 = vadd.f32 %v326, %v405
    %v407 = vpop.f32.mrb[0].mxu0
    %408 = vdwg.mxu0
    %v409 = vld [vmem:[%s2 + $0x1e] sm:$0x1]
    %v410 = vlaneseq
    %v411 = vshrl.u32 %v410, 7
    %v412 = vsub.s32 0, %v411
    %v413 = vrot.slane %v409, %v412
    %414 = vmatprep.subr.mxu0 0.0
    %415 = vmatpush1.msra.mxu0 %v308
    %416 = vmatprep.subr.mxu0 0.0
    %417 = vmatpush1.msra.mxu0 %v309
    %418 = vmatprep.subr.mxu0 0.0
    %419 = vmatpush1.msra.mxu0 %v310
    %420 = vmatprep.subr.mxu0 0.0
    %421 = vmatpush1.msra.mxu0 %v311
    %422 = vmatprep.subr.mxu0 0.0
    %423 = vmatpush1.msra.mxu0 0.0
    %424 = vmatprep.subr.mxu0 0.0
    %425 = vmatpush1.msra.mxu0 0.0
    %426 = vmatprep.subr.mxu0 0.0
    %427 = vmatpush1.msra.mxu0 0.0
    %428 = vmatprep.subr.mxu0 0.0
    %429 = vmatpush1.msra.mxu0 0.0
    %430 = vmatprep.subr.mxu0 0.0
    %431 = vmatpush1.msra.mxu0 0.0
    %432 = vmatprep.subr.mxu0 0.0
    %433 = vmatpush1.msra.mxu0 0.0
    %434 = vmatprep.subr.mxu0 0.0
    %435 = vmatpush1.msra.mxu0 0.0
    %436 = vmatprep.subr.mxu0 0.0
    %437 = vmatpush1.msra.mxu0 0.0
    %438 = vmatprep.subr.mxu0 0.0
    %439 = vmatpush1.msra.mxu0 0.0
    %440 = vmatprep.subr.mxu0 0.0
    %441 = vmatpush1.msra.mxu0 0.0
    %442 = vmatprep.subr.mxu0 0.0
    %443 = vmatpush1.msra.mxu0 0.0
    %444 = vmatprep.subr.mxu0 0.0
    %445 = vmatpush1.msra.mxu0 0.0
    %446 = vmatprep.subr.mxu0 0.0
    %447 = vmatpush1.msra.mxu0 0.0
    %448 = vmatprep.subr.mxu0 0.0
    %449 = vmatpush1.msra.mxu0 0.0
    %450 = vmatprep.subr.mxu0 0.0
    %451 = vmatpush1.msra.mxu0 0.0
    %452 = vmatprep.subr.mxu0 0.0
    %453 = vmatpush1.msra.mxu0 0.0
    %454 = vmatprep.subr.mxu0 0.0
    %455 = vmatpush1.msra.mxu0 0.0
    %456 = vmatprep.subr.mxu0 0.0
    %457 = vmatpush1.msra.mxu0 0.0
    %458 = vmatprep.subr.mxu0 0.0
    %459 = vmatpush1.msra.mxu0 0.0
    %460 = vmatprep.subr.mxu0 0.0
    %461 = vmatpush1.msra.mxu0 0.0
    %462 = vmatprep.subr.mxu0 0.0
    %463 = vmatpush1.msra.mxu0 0.0
    %464 = vmatprep.subr.mxu0 0.0
    %465 = vmatpush1.msra.mxu0 0.0
    %466 = vmatprep.subr.mxu0 0.0
    %467 = vmatpush1.msra.mxu0 0.0
    %468 = vmatprep.subr.mxu0 0.0
    %469 = vmatpush1.msra.mxu0 0.0
    %470 = vmatprep.subr.mxu0 0.0
    %471 = vmatpush1.msra.mxu0 0.0
    %472 = vmatprep.subr.mxu0 0.0
    %473 = vmatpush1.msra.mxu0 0.0
    %474 = vmatprep.subr.mxu0 0.0
    %475 = vmatpush1.msra.mxu0 0.0
    %476 = vmatprep.subr.mxu0 0.0
    %477 = vmatpush1.msra.mxu0 0.0
    %478 = vmatprep.mubr.f32.mxu0 0.0
    %479 = vmatmul.mubr.f32.gmra.mrb[0].mxu0 %v329
    %v480 = vpop.f32.mrb[0].mxu0
    %v481 = vadd.f32 %v413, %v480
    %v482 = vpop.f32.mrb[0].mxu0
    %483 = vmatprep.mubr.f32.mxu0 0.0
    %484 = vmatmul.mubr.f32.gmra.mrb[0].mxu0 %v332
    %v485 = vpop.f32.mrb[0].mxu0
    %v486 = vadd.f32 %v413, %v485
    %v487 = vpop.f32.mrb[0].mxu0
    %488 = vdwg.mxu0
    %v489 = vld [vmem:[%s2 + $0x1f] sm:$0x1]
    %v490 = vlaneseq
    %v491 = vshrl.u32 %v490, 7
    %v492 = vsub.s32 0, %v491
    %v493 = vrot.slane %v489, %v492
    %494 = vmatprep.subr.mxu0 0.0
    %495 = vmatpush1.msra.mxu0 %v313
    %496 = vmatprep.subr.mxu0 0.0
    %497 = vmatpush1.msra.mxu0 %v314
    %498 = vmatprep.subr.mxu0 0.0
    %499 = vmatpush1.msra.mxu0 %v315
    %500 = vmatprep.subr.mxu0 0.0
    %501 = vmatpush1.msra.mxu0 %v316
    %502 = vmatprep.subr.mxu0 0.0
    %503 = vmatpush1.msra.mxu0 0.0
    %504 = vmatprep.subr.mxu0 0.0
    %505 = vmatpush1.msra.mxu0 0.0
    %506 = vmatprep.subr.mxu0 0.0
    %507 = vmatpush1.msra.mxu0 0.0
    %508 = vmatprep.subr.mxu0 0.0
    %509 = vmatpush1.msra.mxu0 0.0
    %510 = vmatprep.subr.mxu0 0.0
    %511 = vmatpush1.msra.mxu0 0.0
    %512 = vmatprep.subr.mxu0 0.0
    %513 = vmatpush1.msra.mxu0 0.0
    %514 = vmatprep.subr.mxu0 0.0
    %515 = vmatpush1.msra.mxu0 0.0
    %516 = vmatprep.subr.mxu0 0.0
    %517 = vmatpush1.msra.mxu0 0.0
    %518 = vmatprep.subr.mxu0 0.0
    %519 = vmatpush1.msra.mxu0 0.0
    %520 = vmatprep.subr.mxu0 0.0
    %521 = vmatpush1.msra.mxu0 0.0
    %522 = vmatprep.subr.mxu0 0.0
    %523 = vmatpush1.msra.mxu0 0.0
    %524 = vmatprep.subr.mxu0 0.0
    %525 = vmatpush1.msra.mxu0 0.0
    %526 = vmatprep.subr.mxu0 0.0
    %527 = vmatpush1.msra.mxu0 0.0
    %528 = vmatprep.subr.mxu0 0.0
    %529 = vmatpush1.msra.mxu0 0.0
    %530 = vmatprep.subr.mxu0 0.0
    %531 = vmatpush1.msra.mxu0 0.0
    %532 = vmatprep.subr.mxu0 0.0
    %533 = vmatpush1.msra.mxu0 0.0
    %534 = vmatprep.subr.mxu0 0.0
    %535 = vmatpush1.msra.mxu0 0.0
    %536 = vmatprep.subr.mxu0 0.0
    %537 = vmatpush1.msra.mxu0 0.0
    %538 = vmatprep.subr.mxu0 0.0
    %539 = vmatpush1.msra.mxu0 0.0
    %540 = vmatprep.subr.mxu0 0.0
    %541 = vmatpush1.msra.mxu0 0.0
    %542 = vmatprep.subr.mxu0 0.0
    %543 = vmatpush1.msra.mxu0 0.0
    %544 = vmatprep.subr.mxu0 0.0
    %545 = vmatpush1.msra.mxu0 0.0
    %546 = vmatprep.subr.mxu0 0.0
    %547 = vmatpush1.msra.mxu0 0.0
    %548 = vmatprep.subr.mxu0 0.0
    %549 = vmatpush1.msra.mxu0 0.0
    %550 = vmatprep.subr.mxu0 0.0
    %551 = vmatpush1.msra.mxu0 0.0
    %552 = vmatprep.subr.mxu0 0.0
    %553 = vmatpush1.msra.mxu0 0.0
    %554 = vmatprep.subr.mxu0 0.0
    %555 = vmatpush1.msra.mxu0 0.0
    %556 = vmatprep.subr.mxu0 0.0
    %557 = vmatpush1.msra.mxu0 0.0
    %558 = vmatprep.mubr.f32.mxu0 0.0
    %559 = vmatmul.mubr.f32.gmra.mrb[0].mxu0 %v329
    %v560 = vpop.f32.mrb[0].mxu0
    %v561 = vadd.f32 %v493, %v560
    %v562 = vpop.f32.mrb[0].mxu0
    %563 = vmatprep.mubr.f32.mxu0 0.0
    %564 = vmatmul.mubr.f32.gmra.mrb[0].mxu0 %v332
    %v565 = vpop.f32.mrb[0].mxu0
    %v566 = vadd.f32 %v493, %v565
    %v567 = vpop.f32.mrb[0].mxu0
    %568 = vdwg.mxu0
    %571 = vrot.lane.b32.xlu0 %v401, 120
    %v572 = vpop.permute.xlu0 %571
    %573 = vrot.lane.b32.xlu0 %v406, 120
    %v574 = vpop.permute.xlu0 %573
    %575 = vrot.lane.b32.xlu0 %v401, 112
    %v576 = vpop.permute.xlu0 %575
    %577 = vrot.lane.b32.xlu0 %v406, 112
    %v578 = vpop.permute.xlu0 %577
    %579 = vrot.lane.b32.xlu0 %v401, 104
    %v580 = vpop.permute.xlu0 %579
    %581 = vrot.lane.b32.xlu0 %v406, 104
    %v582 = vpop.permute.xlu0 %581
    %585 = vrot.lane.b32.xlu0 %v481, 120
    %v586 = vpop.permute.xlu0 %585
    %587 = vrot.lane.b32.xlu0 %v486, 120
    %v588 = vpop.permute.xlu0 %587
    %589 = vrot.lane.b32.xlu0 %v481, 112
    %v590 = vpop.permute.xlu0 %589
    %591 = vrot.lane.b32.xlu0 %v486, 112
    %v592 = vpop.permute.xlu0 %591
    %593 = vrot.lane.b32.xlu0 %v481, 104
    %v594 = vpop.permute.xlu0 %593
    %595 = vrot.lane.b32.xlu0 %v486, 104
    %v596 = vpop.permute.xlu0 %595
    %599 = vrot.lane.b32.xlu0 %v561, 120
    %v600 = vpop.permute.xlu0 %599
    %601 = vrot.lane.b32.xlu0 %v566, 120
    %v602 = vpop.permute.xlu0 %601
    %605 = vrot.lane.b32.xlu0 %v561, 112
    %v606 = vpop.permute.xlu0 %605
    %607 = vrot.lane.b32.xlu0 %v566, 112
    %v608 = vpop.permute.xlu0 %607
    %611 = vrot.lane.b32.xlu0 %v561, 104
    %v612 = vpop.permute.xlu0 %611
    %613 = vrot.lane.b32.xlu0 %v566, 104
    %v614 = vpop.permute.xlu0 %613
    %v617 = vsel %vm64, %v401, 0
    %v619 = vsel %vm64, %v481, 0
    %621 = vmatprep.subr.mxu0 0.0
    %622 = vmatpush1.xpose.msra.mxu0 %v619
    %623 = vmatprep.subr.mxu0 0.0
    %624 = vmatpush1.xpose.msra.mxu0 0.0
    %625 = vmatprep.subr.mxu0 0.0
    %626 = vmatpush1.xpose.msra.mxu0 0.0
    %627 = vmatprep.subr.mxu0 0.0
    %628 = vmatpush1.xpose.msra.mxu0 0.0
    %629 = vmatprep.subr.mxu0 0.0
    %630 = vmatpush1.xpose.msra.mxu0 0.0
    %631 = vmatprep.subr.mxu0 0.0
    %632 = vmatpush1.xpose.msra.mxu0 0.0
    %633 = vmatprep.subr.mxu0 0.0
    %634 = vmatpush1.xpose.msra.mxu0 0.0
    %635 = vmatprep.subr.mxu0 0.0
    %636 = vmatpush1.xpose.msra.mxu0 0.0
    %637 = vmatprep.subr.mxu0 0.0
    %638 = vmatpush1.xpose.msra.mxu0 0.0
    %639 = vmatprep.subr.mxu0 0.0
    %640 = vmatpush1.xpose.msra.mxu0 0.0
    %641 = vmatprep.subr.mxu0 0.0
    %642 = vmatpush1.xpose.msra.mxu0 0.0
    %643 = vmatprep.subr.mxu0 0.0
    %644 = vmatpush1.xpose.msra.mxu0 0.0
    %645 = vmatprep.subr.mxu0 0.0
    %646 = vmatpush1.xpose.msra.mxu0 0.0
    %647 = vmatprep.subr.mxu0 0.0
    %648 = vmatpush1.xpose.msra.mxu0 0.0
    %649 = vmatprep.subr.mxu0 0.0
    %650 = vmatpush1.xpose.msra.mxu0 0.0
    %651 = vmatprep.subr.mxu0 0.0
    %652 = vmatpush1.xpose.msra.mxu0 0.0
    %653 = vmatprep.subr.mxu0 0.0
    %654 = vmatpush1.xpose.msra.mxu0 0.0
    %655 = vmatprep.subr.mxu0 0.0
    %656 = vmatpush1.xpose.msra.mxu0 0.0
    %657 = vmatprep.subr.mxu0 0.0
    %658 = vmatpush1.xpose.msra.mxu0 0.0
    %659 = vmatprep.subr.mxu0 0.0
    %660 = vmatpush1.xpose.msra.mxu0 0.0
    %661 = vmatprep.subr.mxu0 0.0
    %662 = vmatpush1.xpose.msra.mxu0 0.0
    %663 = vmatprep.subr.mxu0 0.0
    %664 = vmatpush1.xpose.msra.mxu0 0.0
    %665 = vmatprep.subr.mxu0 0.0
    %666 = vmatpush1.xpose.msra.mxu0 0.0
    %667 = vmatprep.subr.mxu0 0.0
    %668 = vmatpush1.xpose.msra.mxu0 0.0
    %669 = vmatprep.subr.mxu0 0.0
    %670 = vmatpush1.xpose.msra.mxu0 0.0
    %671 = vmatprep.subr.mxu0 0.0
    %672 = vmatpush1.xpose.msra.mxu0 0.0
    %673 = vmatprep.subr.mxu0 0.0
    %674 = vmatpush1.xpose.msra.mxu0 0.0
    %675 = vmatprep.subr.mxu0 0.0
    %676 = vmatpush1.xpose.msra.mxu0 0.0
    %677 = vmatprep.subr.mxu0 0.0
    %678 = vmatpush1.xpose.msra.mxu0 0.0
    %679 = vmatprep.subr.mxu0 0.0
    %680 = vmatpush1.xpose.msra.mxu0 0.0
    %681 = vmatprep.subr.mxu0 0.0
    %682 = vmatpush1.xpose.msra.mxu0 0.0
    %683 = vmatprep.subr.mxu0 0.0
    %684 = vmatpush1.xpose.msra.mxu0 0.0
    %685 = vmatprep.mubr.f32.mxu0 0.0
    %686 = vmatmul.mubr.f32.gmra.mrb[0].mxu0 %v617
    %v687 = vpop.f32.mrb[0].mxu0
    %v688 = vadd.f32 0.0, %v687
    %v689 = vpop.f32.mrb[0].mxu0
    %690 = vdwg.mxu0
    %v691 = vsel %vm64, %v406, 0
    %v693 = vsel %vm64, %v486, 0
    %695 = vmatprep.subr.mxu0 0.0
    %696 = vmatpush1.xpose.msra.mxu0 %v693
    %697 = vmatprep.subr.mxu0 0.0
    %698 = vmatpush1.xpose.msra.mxu0 0.0
    %699 = vmatprep.subr.mxu0 0.0
    %700 = vmatpush1.xpose.msra.mxu0 0.0
    %701 = vmatprep.subr.mxu0 0.0
    %702 = vmatpush1.xpose.msra.mxu0 0.0
    %703 = vmatprep.subr.mxu0 0.0
    %704 = vmatpush1.xpose.msra.mxu0 0.0
    %705 = vmatprep.subr.mxu0 0.0
    %706 = vmatpush1.xpose.msra.mxu0 0.0
    %707 = vmatprep.subr.mxu0 0.0
    %708 = vmatpush1.xpose.msra.mxu0 0.0
    %709 = vmatprep.subr.mxu0 0.0
    %710 = vmatpush1.xpose.msra.mxu0 0.0
    %711 = vmatprep.subr.mxu0 0.0
    %712 = vmatpush1.xpose.msra.mxu0 0.0
    %713 = vmatprep.subr.mxu0 0.0
    %714 = vmatpush1.xpose.msra.mxu0 0.0
    %715 = vmatprep.subr.mxu0 0.0
    %716 = vmatpush1.xpose.msra.mxu0 0.0
    %717 = vmatprep.subr.mxu0 0.0
    %718 = vmatpush1.xpose.msra.mxu0 0.0
    %719 = vmatprep.subr.mxu0 0.0
    %720 = vmatpush1.xpose.msra.mxu0 0.0
    %721 = vmatprep.subr.mxu0 0.0
    %722 = vmatpush1.xpose.msra.mxu0 0.0
    %723 = vmatprep.subr.mxu0 0.0
    %724 = vmatpush1.xpose.msra.mxu0 0.0
    %725 = vmatprep.subr.mxu0 0.0
    %726 = vmatpush1.xpose.msra.mxu0 0.0
    %727 = vmatprep.subr.mxu0 0.0
    %728 = vmatpush1.xpose.msra.mxu0 0.0
    %729 = vmatprep.subr.mxu0 0.0
    %730 = vmatpush1.xpose.msra.mxu0 0.0
    %731 = vmatprep.subr.mxu0 0.0
    %732 = vmatpush1.xpose.msra.mxu0 0.0
    %733 = vmatprep.subr.mxu0 0.0
    %734 = vmatpush1.xpose.msra.mxu0 0.0
    %735 = vmatprep.subr.mxu0 0.0
    %736 = vmatpush1.xpose.msra.mxu0 0.0
    %737 = vmatprep.subr.mxu0 0.0
    %738 = vmatpush1.xpose.msra.mxu0 0.0
    %739 = vmatprep.subr.mxu0 0.0
    %740 = vmatpush1.xpose.msra.mxu0 0.0
    %741 = vmatprep.subr.mxu0 0.0
    %742 = vmatpush1.xpose.msra.mxu0 0.0
    %743 = vmatprep.subr.mxu0 0.0
    %744 = vmatpush1.xpose.msra.mxu0 0.0
    %745 = vmatprep.subr.mxu0 0.0
    %746 = vmatpush1.xpose.msra.mxu0 0.0
    %747 = vmatprep.subr.mxu0 0.0
    %748 = vmatpush1.xpose.msra.mxu0 0.0
    %749 = vmatprep.subr.mxu0 0.0
    %750 = vmatpush1.xpose.msra.mxu0 0.0
    %751 = vmatprep.subr.mxu0 0.0
    %752 = vmatpush1.xpose.msra.mxu0 0.0
    %753 = vmatprep.subr.mxu0 0.0
    %754 = vmatpush1.xpose.msra.mxu0 0.0
    %755 = vmatprep.subr.mxu0 0.0
    %756 = vmatpush1.xpose.msra.mxu0 0.0
    %757 = vmatprep.subr.mxu0 0.0
    %758 = vmatpush1.xpose.msra.mxu0 0.0
    %759 = vmatprep.mubr.f32.mxu0 0.0
    %760 = vmatmul.mubr.f32.gmra.mrb[0].mxu0 %v691
    %v761 = vpop.f32.mrb[0].mxu0
    %v762 = vadd.f32 0.0, %v761
    %v763 = vpop.f32.mrb[0].mxu0
    %764 = vdwg.mxu0
    %v765 = vsel %vm64, %v572, 0
    %v767 = vsel %vm64, %v586, 0
    %769 = vmatprep.subr.mxu0 0.0
    %770 = vmatpush1.xpose.msra.mxu0 %v767
    %771 = vmatprep.subr.mxu0 0.0
    %772 = vmatpush1.xpose.msra.mxu0 0.0
    %773 = vmatprep.subr.mxu0 0.0
    %774 = vmatpush1.xpose.msra.mxu0 0.0
    %775 = vmatprep.subr.mxu0 0.0
    %776 = vmatpush1.xpose.msra.mxu0 0.0
    %777 = vmatprep.subr.mxu0 0.0
    %778 = vmatpush1.xpose.msra.mxu0 0.0
    %779 = vmatprep.subr.mxu0 0.0
    %780 = vmatpush1.xpose.msra.mxu0 0.0
    %781 = vmatprep.subr.mxu0 0.0
    %782 = vmatpush1.xpose.msra.mxu0 0.0
    %783 = vmatprep.subr.mxu0 0.0
    %784 = vmatpush1.xpose.msra.mxu0 0.0
    %785 = vmatprep.subr.mxu0 0.0
    %786 = vmatpush1.xpose.msra.mxu0 0.0
    %787 = vmatprep.subr.mxu0 0.0
    %788 = vmatpush1.xpose.msra.mxu0 0.0
    %789 = vmatprep.subr.mxu0 0.0
    %790 = vmatpush1.xpose.msra.mxu0 0.0
    %791 = vmatprep.subr.mxu0 0.0
    %792 = vmatpush1.xpose.msra.mxu0 0.0
    %793 = vmatprep.subr.mxu0 0.0
    %794 = vmatpush1.xpose.msra.mxu0 0.0
    %795 = vmatprep.subr.mxu0 0.0
    %796 = vmatpush1.xpose.msra.mxu0 0.0
    %797 = vmatprep.subr.mxu0 0.0
    %798 = vmatpush1.xpose.msra.mxu0 0.0
    %799 = vmatprep.subr.mxu0 0.0
    %800 = vmatpush1.xpose.msra.mxu0 0.0
    %801 = vmatprep.subr.mxu0 0.0
    %802 = vmatpush1.xpose.msra.mxu0 0.0
    %803 = vmatprep.subr.mxu0 0.0
    %804 = vmatpush1.xpose.msra.mxu0 0.0
    %805 = vmatprep.subr.mxu0 0.0
    %806 = vmatpush1.xpose.msra.mxu0 0.0
    %807 = vmatprep.subr.mxu0 0.0
    %808 = vmatpush1.xpose.msra.mxu0 0.0
    %809 = vmatprep.subr.mxu0 0.0
    %810 = vmatpush1.xpose.msra.mxu0 0.0
    %811 = vmatprep.subr.mxu0 0.0
    %812 = vmatpush1.xpose.msra.mxu0 0.0
    %813 = vmatprep.subr.mxu0 0.0
    %814 = vmatpush1.xpose.msra.mxu0 0.0
    %815 = vmatprep.subr.mxu0 0.0
    %816 = vmatpush1.xpose.msra.mxu0 0.0
    %817 = vmatprep.subr.mxu0 0.0
    %818 = vmatpush1.xpose.msra.mxu0 0.0
    %819 = vmatprep.subr.mxu0 0.0
    %820 = vmatpush1.xpose.msra.mxu0 0.0
    %821 = vmatprep.subr.mxu0 0.0
    %822 = vmatpush1.xpose.msra.mxu0 0.0
    %823 = vmatprep.subr.mxu0 0.0
    %824 = vmatpush1.xpose.msra.mxu0 0.0
    %825 = vmatprep.subr.mxu0 0.0
    %826 = vmatpush1.xpose.msra.mxu0 0.0
    %827 = vmatprep.subr.mxu0 0.0
    %828 = vmatpush1.xpose.msra.mxu0 0.0
    %829 = vmatprep.subr.mxu0 0.0
    %830 = vmatpush1.xpose.msra.mxu0 0.0
    %831 = vmatprep.subr.mxu0 0.0
    %832 = vmatpush1.xpose.msra.mxu0 0.0
    %833 = vmatprep.mubr.f32.mxu0 0.0
    %834 = vmatmul.mubr.f32.gmra.mrb[0].mxu0 %v765
    %v835 = vpop.f32.mrb[0].mxu0
    %v836 = vadd.f32 0.0, %v835
    %v837 = vpop.f32.mrb[0].mxu0
    %838 = vdwg.mxu0
    %v839 = vsel %vm64, %v574, 0
    %v841 = vsel %vm64, %v588, 0
    %843 = vmatprep.subr.mxu0 0.0
    %844 = vmatpush1.xpose.msra.mxu0 %v841
    %845 = vmatprep.subr.mxu0 0.0
    %846 = vmatpush1.xpose.msra.mxu0 0.0
    %847 = vmatprep.subr.mxu0 0.0
    %848 = vmatpush1.xpose.msra.mxu0 0.0
    %849 = vmatprep.subr.mxu0 0.0
    %850 = vmatpush1.xpose.msra.mxu0 0.0
    %851 = vmatprep.subr.mxu0 0.0
    %852 = vmatpush1.xpose.msra.mxu0 0.0
    %853 = vmatprep.subr.mxu0 0.0
    %854 = vmatpush1.xpose.msra.mxu0 0.0
    %855 = vmatprep.subr.mxu0 0.0
    %856 = vmatpush1.xpose.msra.mxu0 0.0
    %857 = vmatprep.subr.mxu0 0.0
    %858 = vmatpush1.xpose.msra.mxu0 0.0
    %859 = vmatprep.subr.mxu0 0.0
    %860 = vmatpush1.xpose.msra.mxu0 0.0
    %861 = vmatprep.subr.mxu0 0.0
    %862 = vmatpush1.xpose.msra.mxu0 0.0
    %863 = vmatprep.subr.mxu0 0.0
    %864 = vmatpush1.xpose.msra.mxu0 0.0
    %865 = vmatprep.subr.mxu0 0.0
    %866 = vmatpush1.xpose.msra.mxu0 0.0
    %867 = vmatprep.subr.mxu0 0.0
    %868 = vmatpush1.xpose.msra.mxu0 0.0
    %869 = vmatprep.subr.mxu0 0.0
    %870 = vmatpush1.xpose.msra.mxu0 0.0
    %871 = vmatprep.subr.mxu0 0.0
    %872 = vmatpush1.xpose.msra.mxu0 0.0
    %873 = vmatprep.subr.mxu0 0.0
    %874 = vmatpush1.xpose.msra.mxu0 0.0
    %875 = vmatprep.subr.mxu0 0.0
    %876 = vmatpush1.xpose.msra.mxu0 0.0
    %877 = vmatprep.subr.mxu0 0.0
    %878 = vmatpush1.xpose.msra.mxu0 0.0
    %879 = vmatprep.subr.mxu0 0.0
    %880 = vmatpush1.xpose.msra.mxu0 0.0
    %881 = vmatprep.subr.mxu0 0.0
    %882 = vmatpush1.xpose.msra.mxu0 0.0
    %883 = vmatprep.subr.mxu0 0.0
    %884 = vmatpush1.xpose.msra.mxu0 0.0
    %885 = vmatprep.subr.mxu0 0.0
    %886 = vmatpush1.xpose.msra.mxu0 0.0
    %887 = vmatprep.subr.mxu0 0.0
    %888 = vmatpush1.xpose.msra.mxu0 0.0
    %889 = vmatprep.subr.mxu0 0.0
    %890 = vmatpush1.xpose.msra.mxu0 0.0
    %891 = vmatprep.subr.mxu0 0.0
    %892 = vmatpush1.xpose.msra.mxu0 0.0
    %893 = vmatprep.subr.mxu0 0.0
    %894 = vmatpush1.xpose.msra.mxu0 0.0
    %895 = vmatprep.subr.mxu0 0.0
    %896 = vmatpush1.xpose.msra.mxu0 0.0
    %897 = vmatprep.subr.mxu0 0.0
    %898 = vmatpush1.xpose.msra.mxu0 0.0
    %899 = vmatprep.subr.mxu0 0.0
    %900 = vmatpush1.xpose.msra.mxu0 0.0
    %901 = vmatprep.subr.mxu0 0.0
    %902 = vmatpush1.xpose.msra.mxu0 0.0
    %903 = vmatprep.subr.mxu0 0.0
    %904 = vmatpush1.xpose.msra.mxu0 0.0
    %905 = vmatprep.subr.mxu0 0.0
    %906 = vmatpush1.xpose.msra.mxu0 0.0
    %907 = vmatprep.mubr.f32.mxu0 0.0
    %908 = vmatmul.mubr.f32.gmra.mrb[0].mxu0 %v839
    %v909 = vpop.f32.mrb[0].mxu0
    %v910 = vadd.f32 0.0, %v909
    %v911 = vpop.f32.mrb[0].mxu0
    %912 = vdwg.mxu0
    %v913 = vsel %vm64, %v576, 0
    %v915 = vsel %vm64, %v590, 0
    %917 = vmatprep.subr.mxu0 0.0
    %918 = vmatpush1.xpose.msra.mxu0 %v915
    %919 = vmatprep.subr.mxu0 0.0
    %920 = vmatpush1.xpose.msra.mxu0 0.0
    %921 = vmatprep.subr.mxu0 0.0
    %922 = vmatpush1.xpose.msra.mxu0 0.0
    %923 = vmatprep.subr.mxu0 0.0
    %924 = vmatpush1.xpose.msra.mxu0 0.0
    %925 = vmatprep.subr.mxu0 0.0
    %926 = vmatpush1.xpose.msra.mxu0 0.0
    %927 = vmatprep.subr.mxu0 0.0
    %928 = vmatpush1.xpose.msra.mxu0 0.0
    %929 = vmatprep.subr.mxu0 0.0
    %930 = vmatpush1.xpose.msra.mxu0 0.0
    %931 = vmatprep.subr.mxu0 0.0
    %932 = vmatpush1.xpose.msra.mxu0 0.0
    %933 = vmatprep.subr.mxu0 0.0
    %934 = vmatpush1.xpose.msra.mxu0 0.0
    %935 = vmatprep.subr.mxu0 0.0
    %936 = vmatpush1.xpose.msra.mxu0 0.0
    %937 = vmatprep.subr.mxu0 0.0
    %938 = vmatpush1.xpose.msra.mxu0 0.0
    %939 = vmatprep.subr.mxu0 0.0
    %940 = vmatpush1.xpose.msra.mxu0 0.0
    %941 = vmatprep.subr.mxu0 0.0
    %942 = vmatpush1.xpose.msra.mxu0 0.0
    %943 = vmatprep.subr.mxu0 0.0
    %944 = vmatpush1.xpose.msra.mxu0 0.0
    %945 = vmatprep.subr.mxu0 0.0
    %946 = vmatpush1.xpose.msra.mxu0 0.0
    %947 = vmatprep.subr.mxu0 0.0
    %948 = vmatpush1.xpose.msra.mxu0 0.0
    %949 = vmatprep.subr.mxu0 0.0
    %950 = vmatpush1.xpose.msra.mxu0 0.0
    %951 = vmatprep.subr.mxu0 0.0
    %952 = vmatpush1.xpose.msra.mxu0 0.0
    %953 = vmatprep.subr.mxu0 0.0
    %954 = vmatpush1.xpose.msra.mxu0 0.0
    %955 = vmatprep.subr.mxu0 0.0
    %956 = vmatpush1.xpose.msra.mxu0 0.0
    %957 = vmatprep.subr.mxu0 0.0
    %958 = vmatpush1.xpose.msra.mxu0 0.0
    %959 = vmatprep.subr.mxu0 0.0
    %960 = vmatpush1.xpose.msra.mxu0 0.0
    %961 = vmatprep.subr.mxu0 0.0
    %962 = vmatpush1.xpose.msra.mxu0 0.0
    %963 = vmatprep.subr.mxu0 0.0
    %964 = vmatpush1.xpose.msra.mxu0 0.0
    %965 = vmatprep.subr.mxu0 0.0
    %966 = vmatpush1.xpose.msra.mxu0 0.0
    %967 = vmatprep.subr.mxu0 0.0
    %968 = vmatpush1.xpose.msra.mxu0 0.0
    %969 = vmatprep.subr.mxu0 0.0
    %970 = vmatpush1.xpose.msra.mxu0 0.0
    %971 = vmatprep.subr.mxu0 0.0
    %972 = vmatpush1.xpose.msra.mxu0 0.0
    %973 = vmatprep.subr.mxu0 0.0
    %974 = vmatpush1.xpose.msra.mxu0 0.0
    %975 = vmatprep.subr.mxu0 0.0
    %976 = vmatpush1.xpose.msra.mxu0 0.0
    %977 = vmatprep.subr.mxu0 0.0
    %978 = vmatpush1.xpose.msra.mxu0 0.0
    %979 = vmatprep.subr.mxu0 0.0
    %980 = vmatpush1.xpose.msra.mxu0 0.0
    %981 = vmatprep.mubr.f32.mxu0 0.0
    %982 = vmatmul.mubr.f32.gmra.mrb[0].mxu0 %v913
    %v983 = vpop.f32.mrb[0].mxu0
    %v984 = vadd.f32 0.0, %v983
    %v985 = vpop.f32.mrb[0].mxu0
    %986 = vdwg.mxu0
    %v987 = vsel %vm64, %v578, 0
    %v989 = vsel %vm64, %v592, 0
    %991 = vmatprep.subr.mxu0 0.0
    %992 = vmatpush1.xpose.msra.mxu0 %v989
    %993 = vmatprep.subr.mxu0 0.0
    %994 = vmatpush1.xpose.msra.mxu0 0.0
    %995 = vmatprep.subr.mxu0 0.0
    %996 = vmatpush1.xpose.msra.mxu0 0.0
    %997 = vmatprep.subr.mxu0 0.0
    %998 = vmatpush1.xpose.msra.mxu0 0.0
    %999 = vmatprep.subr.mxu0 0.0
    %1000 = vmatpush1.xpose.msra.mxu0 0.0
    %1001 = vmatprep.subr.mxu0 0.0
    %1002 = vmatpush1.xpose.msra.mxu0 0.0
    %1003 = vmatprep.subr.mxu0 0.0
    %1004 = vmatpush1.xpose.msra.mxu0 0.0
    %1005 = vmatprep.subr.mxu0 0.0
    %1006 = vmatpush1.xpose.msra.mxu0 0.0
    %1007 = vmatprep.subr.mxu0 0.0
    %1008 = vmatpush1.xpose.msra.mxu0 0.0
    %1009 = vmatprep.subr.mxu0 0.0
    %1010 = vmatpush1.xpose.msra.mxu0 0.0
    %1011 = vmatprep.subr.mxu0 0.0
    %1012 = vmatpush1.xpose.msra.mxu0 0.0
    %1013 = vmatprep.subr.mxu0 0.0
    %1014 = vmatpush1.xpose.msra.mxu0 0.0
    %1015 = vmatprep.subr.mxu0 0.0
    %1016 = vmatpush1.xpose.msra.mxu0 0.0
    %1017 = vmatprep.subr.mxu0 0.0
    %1018 = vmatpush1.xpose.msra.mxu0 0.0
    %1019 = vmatprep.subr.mxu0 0.0
    %1020 = vmatpush1.xpose.msra.mxu0 0.0
    %1021 = vmatprep.subr.mxu0 0.0
    %1022 = vmatpush1.xpose.msra.mxu0 0.0
    %1023 = vmatprep.subr.mxu0 0.0
    %1024 = vmatpush1.xpose.msra.mxu0 0.0
    %1025 = vmatprep.subr.mxu0 0.0
    %1026 = vmatpush1.xpose.msra.mxu0 0.0
    %1027 = vmatprep.subr.mxu0 0.0
    %1028 = vmatpush1.xpose.msra.mxu0 0.0
    %1029 = vmatprep.subr.mxu0 0.0
    %1030 = vmatpush1.xpose.msra.mxu0 0.0
    %1031 = vmatprep.subr.mxu0 0.0
    %1032 = vmatpush1.xpose.msra.mxu0 0.0
    %1033 = vmatprep.subr.mxu0 0.0
    %1034 = vmatpush1.xpose.msra.mxu0 0.0
    %1035 = vmatprep.subr.mxu0 0.0
    %1036 = vmatpush1.xpose.msra.mxu0 0.0
    %1037 = vmatprep.subr.mxu0 0.0
    %1038 = vmatpush1.xpose.msra.mxu0 0.0
    %1039 = vmatprep.subr.mxu0 0.0
    %1040 = vmatpush1.xpose.msra.mxu0 0.0
    %1041 = vmatprep.subr.mxu0 0.0
    %1042 = vmatpush1.xpose.msra.mxu0 0.0
    %1043 = vmatprep.subr.mxu0 0.0
    %1044 = vmatpush1.xpose.msra.mxu0 0.0
    %1045 = vmatprep.subr.mxu0 0.0
    %1046 = vmatpush1.xpose.msra.mxu0 0.0
    %1047 = vmatprep.subr.mxu0 0.0
    %1048 = vmatpush1.xpose.msra.mxu0 0.0
    %1049 = vmatprep.subr.mxu0 0.0
    %1050 = vmatpush1.xpose.msra.mxu0 0.0
    %1051 = vmatprep.subr.mxu0 0.0
    %1052 = vmatpush1.xpose.msra.mxu0 0.0
    %1053 = vmatprep.subr.mxu0 0.0
    %1054 = vmatpush1.xpose.msra.mxu0 0.0
    %1055 = vmatprep.mubr.f32.mxu0 0.0
    %1056 = vmatmul.mubr.f32.gmra.mrb[0].mxu0 %v987
    %v1057 = vpop.f32.mrb[0].mxu0
    %v1058 = vadd.f32 0.0, %v1057
    %v1059 = vpop.f32.mrb[0].mxu0
    %1060 = vdwg.mxu0
    %v1061 = vsel %vm64, %v580, 0
    %v1063 = vsel %vm64, %v594, 0
    %1065 = vmatprep.subr.mxu0 0.0
    %1066 = vmatpush1.xpose.msra.mxu0 %v1063
    %1067 = vmatprep.subr.mxu0 0.0
    %1068 = vmatpush1.xpose.msra.mxu0 0.0
    %1069 = vmatprep.subr.mxu0 0.0
    %1070 = vmatpush1.xpose.msra.mxu0 0.0
    %1071 = vmatprep.subr.mxu0 0.0
    %1072 = vmatpush1.xpose.msra.mxu0 0.0
    %1073 = vmatprep.subr.mxu0 0.0
    %1074 = vmatpush1.xpose.msra.mxu0 0.0
    %1075 = vmatprep.subr.mxu0 0.0
    %1076 = vmatpush1.xpose.msra.mxu0 0.0
    %1077 = vmatprep.subr.mxu0 0.0
    %1078 = vmatpush1.xpose.msra.mxu0 0.0
    %1079 = vmatprep.subr.mxu0 0.0
    %1080 = vmatpush1.xpose.msra.mxu0 0.0
    %1081 = vmatprep.subr.mxu0 0.0
    %1082 = vmatpush1.xpose.msra.mxu0 0.0
    %1083 = vmatprep.subr.mxu0 0.0
    %1084 = vmatpush1.xpose.msra.mxu0 0.0
    %1085 = vmatprep.subr.mxu0 0.0
    %1086 = vmatpush1.xpose.msra.mxu0 0.0
    %1087 = vmatprep.subr.mxu0 0.0
    %1088 = vmatpush1.xpose.msra.mxu0 0.0
    %1089 = vmatprep.subr.mxu0 0.0
    %1090 = vmatpush1.xpose.msra.mxu0 0.0
    %1091 = vmatprep.subr.mxu0 0.0
    %1092 = vmatpush1.xpose.msra.mxu0 0.0
    %1093 = vmatprep.subr.mxu0 0.0
    %1094 = vmatpush1.xpose.msra.mxu0 0.0
    %1095 = vmatprep.subr.mxu0 0.0
    %1096 = vmatpush1.xpose.msra.mxu0 0.0
    %1097 = vmatprep.subr.mxu0 0.0
    %1098 = vmatpush1.xpose.msra.mxu0 0.0
    %1099 = vmatprep.subr.mxu0 0.0
    %1100 = vmatpush1.xpose.msra.mxu0 0.0
    %1101 = vmatprep.subr.mxu0 0.0
    %1102 = vmatpush1.xpose.msra.mxu0 0.0
    %1103 = vmatprep.subr.mxu0 0.0
    %1104 = vmatpush1.xpose.msra.mxu0 0.0
    %1105 = vmatprep.subr.mxu0 0.0
    %1106 = vmatpush1.xpose.msra.mxu0 0.0
    %1107 = vmatprep.subr.mxu0 0.0
    %1108 = vmatpush1.xpose.msra.mxu0 0.0
    %1109 = vmatprep.subr.mxu0 0.0
    %1110 = vmatpush1.xpose.msra.mxu0 0.0
    %1111 = vmatprep.subr.mxu0 0.0
    %1112 = vmatpush1.xpose.msra.mxu0 0.0
    %1113 = vmatprep.subr.mxu0 0.0
    %1114 = vmatpush1.xpose.msra.mxu0 0.0
    %1115 = vmatprep.subr.mxu0 0.0
    %1116 = vmatpush1.xpose.msra.mxu0 0.0
    %1117 = vmatprep.subr.mxu0 0.0
    %1118 = vmatpush1.xpose.msra.mxu0 0.0
    %1119 = vmatprep.subr.mxu0 0.0
    %1120 = vmatpush1.xpose.msra.mxu0 0.0
    %1121 = vmatprep.subr.mxu0 0.0
    %1122 = vmatpush1.xpose.msra.mxu0 0.0
    %1123 = vmatprep.subr.mxu0 0.0
    %1124 = vmatpush1.xpose.msra.mxu0 0.0
    %1125 = vmatprep.subr.mxu0 0.0
    %1126 = vmatpush1.xpose.msra.mxu0 0.0
    %1127 = vmatprep.subr.mxu0 0.0
    %1128 = vmatpush1.xpose.msra.mxu0 0.0
    %1129 = vmatprep.mubr.f32.mxu0 0.0
    %1130 = vmatmul.mubr.f32.gmra.mrb[0].mxu0 %v1061
    %v1131 = vpop.f32.mrb[0].mxu0
    %v1132 = vadd.f32 0.0, %v1131
    %v1133 = vpop.f32.mrb[0].mxu0
    %1134 = vdwg.mxu0
    %v1135 = vsel %vm64, %v582, 0
    %v1137 = vsel %vm64, %v596, 0
    %1139 = vmatprep.subr.mxu0 0.0
    %1140 = vmatpush1.xpose.msra.mxu0 %v1137
    %1141 = vmatprep.subr.mxu0 0.0
    %1142 = vmatpush1.xpose.msra.mxu0 0.0
    %1143 = vmatprep.subr.mxu0 0.0
    %1144 = vmatpush1.xpose.msra.mxu0 0.0
    %1145 = vmatprep.subr.mxu0 0.0
    %1146 = vmatpush1.xpose.msra.mxu0 0.0
    %1147 = vmatprep.subr.mxu0 0.0
    %1148 = vmatpush1.xpose.msra.mxu0 0.0
    %1149 = vmatprep.subr.mxu0 0.0
    %1150 = vmatpush1.xpose.msra.mxu0 0.0
    %1151 = vmatprep.subr.mxu0 0.0
    %1152 = vmatpush1.xpose.msra.mxu0 0.0
    %1153 = vmatprep.subr.mxu0 0.0
    %1154 = vmatpush1.xpose.msra.mxu0 0.0
    %1155 = vmatprep.subr.mxu0 0.0
    %1156 = vmatpush1.xpose.msra.mxu0 0.0
    %1157 = vmatprep.subr.mxu0 0.0
    %1158 = vmatpush1.xpose.msra.mxu0 0.0
    %1159 = vmatprep.subr.mxu0 0.0
    %1160 = vmatpush1.xpose.msra.mxu0 0.0
    %1161 = vmatprep.subr.mxu0 0.0
    %1162 = vmatpush1.xpose.msra.mxu0 0.0
    %1163 = vmatprep.subr.mxu0 0.0
    %1164 = vmatpush1.xpose.msra.mxu0 0.0
    %1165 = vmatprep.subr.mxu0 0.0
    %1166 = vmatpush1.xpose.msra.mxu0 0.0
    %1167 = vmatprep.subr.mxu0 0.0
    %1168 = vmatpush1.xpose.msra.mxu0 0.0
    %1169 = vmatprep.subr.mxu0 0.0
    %1170 = vmatpush1.xpose.msra.mxu0 0.0
    %1171 = vmatprep.subr.mxu0 0.0
    %1172 = vmatpush1.xpose.msra.mxu0 0.0
    %1173 = vmatprep.subr.mxu0 0.0
    %1174 = vmatpush1.xpose.msra.mxu0 0.0
    %1175 = vmatprep.subr.mxu0 0.0
    %1176 = vmatpush1.xpose.msra.mxu0 0.0
    %1177 = vmatprep.subr.mxu0 0.0
    %1178 = vmatpush1.xpose.msra.mxu0 0.0
    %1179 = vmatprep.subr.mxu0 0.0
    %1180 = vmatpush1.xpose.msra.mxu0 0.0
    %1181 = vmatprep.subr.mxu0 0.0
    %1182 = vmatpush1.xpose.msra.mxu0 0.0
    %1183 = vmatprep.subr.mxu0 0.0
    %1184 = vmatpush1.xpose.msra.mxu0 0.0
    %1185 = vmatprep.subr.mxu0 0.0
    %1186 = vmatpush1.xpose.msra.mxu0 0.0
    %1187 = vmatprep.subr.mxu0 0.0
    %1188 = vmatpush1.xpose.msra.mxu0 0.0
    %1189 = vmatprep.subr.mxu0 0.0
    %1190 = vmatpush1.xpose.msra.mxu0 0.0
    %1191 = vmatprep.subr.mxu0 0.0
    %1192 = vmatpush1.xpose.msra.mxu0 0.0
    %1193 = vmatprep.subr.mxu0 0.0
    %1194 = vmatpush1.xpose.msra.mxu0 0.0
    %1195 = vmatprep.subr.mxu0 0.0
    %1196 = vmatpush1.xpose.msra.mxu0 0.0
    %1197 = vmatprep.subr.mxu0 0.0
    %1198 = vmatpush1.xpose.msra.mxu0 0.0
    %1199 = vmatprep.subr.mxu0 0.0
    %1200 = vmatpush1.xpose.msra.mxu0 0.0
    %1201 = vmatprep.subr.mxu0 0.0
    %1202 = vmatpush1.xpose.msra.mxu0 0.0
    %1203 = vmatprep.mubr.f32.mxu0 0.0
    %1204 = vmatmul.mubr.f32.gmra.mrb[0].mxu0 %v1135
    %v1205 = vpop.f32.mrb[0].mxu0
    %v1206 = vadd.f32 0.0, %v1205
    %v1207 = vpop.f32.mrb[0].mxu0
    %1208 = vdwg.mxu0
    %v1209 = vmul.f32 %v688, 0.35355338
    %v1210 = vmul.f32 %v762, 0.35355338
    %v1211 = vmul.f32 %v836, 0.35355338
    %v1212 = vmul.f32 %v910, 0.35355338
    %v1213 = vmul.f32 %v984, 0.35355338
    %v1214 = vmul.f32 %v1058, 0.35355338
    %v1215 = vmul.f32 %v1132, 0.35355338
    %v1216 = vmul.f32 %v1206, 0.35355338
    %v1217 = vsel %vm302, 1, 0
    %vm1218 = vcmp.eq.s32.totalorder %v1217, 1
    %v1219 = vsel %vm1218, %v1209, -1e+30
    %v1220 = vsel %vm1218, %v1210, -1e+30
    %v1221 = vsel %vm1218, %v1211, -1e+30
    %v1222 = vsel %vm1218, %v1212, -1e+30
    %v1223 = vsel %vm1218, %v1213, -1e+30
    %v1224 = vsel %vm1218, %v1214, -1e+30
    %v1225 = vsel %vm1218, %v1215, -1e+30
    %v1226 = vsel %vm1218, %v1216, -1e+30
    %v1227 = vsel %vm64, %v1219, -inf
    %1228 = vmax.xlane.f32.xlu0 %v1227
    %v1229 = vpop.xlane.xlu0 %1228
    %v1230 = vsel %vm64, %v1220, -inf
    %1231 = vmax.xlane.f32.xlu0 %v1230
    %v1232 = vpop.xlane.xlu0 %1231
    %v1233 = vsel %vm64, %v1221, -inf
    %1234 = vmax.xlane.f32.xlu0 %v1233
    %v1235 = vpop.xlane.xlu0 %1234
    %v1236 = vsel %vm64, %v1222, -inf
    %1237 = vmax.xlane.f32.xlu0 %v1236
    %v1238 = vpop.xlane.xlu0 %1237
    %v1239 = vsel %vm64, %v1223, -inf
    %1240 = vmax.xlane.f32.xlu0 %v1239
    %v1241 = vpop.xlane.xlu0 %1240
    %v1242 = vsel %vm64, %v1224, -inf
    %1243 = vmax.xlane.f32.xlu0 %v1242
    %v1244 = vpop.xlane.xlu0 %1243
    %v1245 = vsel %vm64, %v1225, -inf
    %1246 = vmax.xlane.f32.xlu0 %v1245
    %v1247 = vpop.xlane.xlu0 %1246
    %v1248 = vsel %vm64, %v1226, -inf
    %1249 = vmax.xlane.f32.xlu0 %v1248
    %v1250 = vpop.xlane.xlu0 %1249
    %v1251 = vsub.f32 %v1219, %v1229
    %v1252 = vsub.f32 %v1220, %v1232
    %v1253 = vsub.f32 %v1221, %v1235
    %v1254 = vsub.f32 %v1222, %v1238
    %v1255 = vsub.f32 %v1223, %v1241
    %v1256 = vsub.f32 %v1224, %v1244
    %v1257 = vsub.f32 %v1225, %v1247
    %v1258 = vsub.f32 %v1226, %v1250
    %v1259 = vmul.f32 %v1251, 1.442695
    %v1260 = vpow.pop %v1259
    %v1261 = vmul.f32 %v1252, 1.442695
    %v1262 = vpow.pop %v1261
    %v1263 = vmul.f32 %v1253, 1.442695
    %v1264 = vpow.pop %v1263
    %v1265 = vmul.f32 %v1254, 1.442695
    %v1266 = vpow.pop %v1265
    %v1267 = vmul.f32 %v1255, 1.442695
    %v1268 = vpow.pop %v1267
    %v1269 = vmul.f32 %v1256, 1.442695
    %v1270 = vpow.pop %v1269
    %v1271 = vmul.f32 %v1257, 1.442695
    %v1272 = vpow.pop %v1271
    %v1273 = vmul.f32 %v1258, 1.442695
    %v1274 = vpow.pop %v1273
    %v1275 = vsel %vm64, %v1260, 0.0
    %1276 = vadd.xlane.f32.xlu0 %v1275
    %v1277 = vpop.xlane.xlu0 %1276
    %v1278 = vsel %vm64, %v1262, 0.0
    %1279 = vadd.xlane.f32.xlu0 %v1278
    %v1280 = vpop.xlane.xlu0 %1279
    %v1281 = vsel %vm64, %v1264, 0.0
    %1282 = vadd.xlane.f32.xlu0 %v1281
    %v1283 = vpop.xlane.xlu0 %1282
    %v1284 = vsel %vm64, %v1266, 0.0
    %1285 = vadd.xlane.f32.xlu0 %v1284
    %v1286 = vpop.xlane.xlu0 %1285
    %v1287 = vsel %vm64, %v1268, 0.0
    %1288 = vadd.xlane.f32.xlu0 %v1287
    %v1289 = vpop.xlane.xlu0 %1288
    %v1290 = vsel %vm64, %v1270, 0.0
    %1291 = vadd.xlane.f32.xlu0 %v1290
    %v1292 = vpop.xlane.xlu0 %1291
    %v1293 = vsel %vm64, %v1272, 0.0
    %1294 = vadd.xlane.f32.xlu0 %v1293
    %v1295 = vpop.xlane.xlu0 %1294
    %v1296 = vsel %vm64, %v1274, 0.0
    %1297 = vadd.xlane.f32.xlu0 %v1296
    %v1298 = vpop.xlane.xlu0 %1297
    %v1299 = vrcp.pop %v1277
    %v1300 = vrcp.pop %v1280
    %v1301 = vrcp.pop %v1283
    %v1302 = vrcp.pop %v1286
    %v1303 = vrcp.pop %v1289
    %v1304 = vrcp.pop %v1292
    %v1305 = vrcp.pop %v1295
    %v1306 = vrcp.pop %v1298
    %v1307 = vmul.f32 %v1260, %v1299
    %v1308 = vmul.f32 %v1262, %v1300
    %v1309 = vmul.f32 %v1264, %v1301
    %v1310 = vmul.f32 %v1266, %v1302
    %v1311 = vmul.f32 %v1268, %v1303
    %v1312 = vmul.f32 %v1270, %v1304
    %v1313 = vmul.f32 %v1272, %v1305
    %v1314 = vmul.f32 %v1274, %v1306
    %v1316 = vsel %vm64, %v1307, 0
    %1318 = vmatprep.subr.mxu0 0.0
    %1319 = vmatpush1.msra.mxu0 %v561
    %1320 = vmatprep.subr.mxu0 0.0
    %1321 = vmatpush1.msra.mxu0 0.0
    %1322 = vmatprep.subr.mxu0 0.0
    %1323 = vmatpush1.msra.mxu0 0.0
    %1324 = vmatprep.subr.mxu0 0.0
    %1325 = vmatpush1.msra.mxu0 0.0
    %1326 = vmatprep.subr.mxu0 0.0
    %1327 = vmatpush1.msra.mxu0 0.0
    %1328 = vmatprep.subr.mxu0 0.0
    %1329 = vmatpush1.msra.mxu0 0.0
    %1330 = vmatprep.subr.mxu0 0.0
    %1331 = vmatpush1.msra.mxu0 0.0
    %1332 = vmatprep.subr.mxu0 0.0
    %1333 = vmatpush1.msra.mxu0 0.0
    %1334 = vmatprep.subr.mxu0 0.0
    %1335 = vmatpush1.msra.mxu0 0.0
    %1336 = vmatprep.subr.mxu0 0.0
    %1337 = vmatpush1.msra.mxu0 0.0
    %1338 = vmatprep.subr.mxu0 0.0
    %1339 = vmatpush1.msra.mxu0 0.0
    %1340 = vmatprep.subr.mxu0 0.0
    %1341 = vmatpush1.msra.mxu0 0.0
    %1342 = vmatprep.subr.mxu0 0.0
    %1343 = vmatpush1.msra.mxu0 0.0
    %1344 = vmatprep.subr.mxu0 0.0
    %1345 = vmatpush1.msra.mxu0 0.0
    %1346 = vmatprep.subr.mxu0 0.0
    %1347 = vmatpush1.msra.mxu0 0.0
    %1348 = vmatprep.subr.mxu0 0.0
    %1349 = vmatpush1.msra.mxu0 0.0
    %1350 = vmatprep.subr.mxu0 0.0
    %1351 = vmatpush1.msra.mxu0 0.0
    %1352 = vmatprep.subr.mxu0 0.0
    %1353 = vmatpush1.msra.mxu0 0.0
    %1354 = vmatprep.subr.mxu0 0.0
    %1355 = vmatpush1.msra.mxu0 0.0
    %1356 = vmatprep.subr.mxu0 0.0
    %1357 = vmatpush1.msra.mxu0 0.0
    %1358 = vmatprep.subr.mxu0 0.0
    %1359 = vmatpush1.msra.mxu0 0.0
    %1360 = vmatprep.subr.mxu0 0.0
    %1361 = vmatpush1.msra.mxu0 0.0
    %1362 = vmatprep.subr.mxu0 0.0
    %1363 = vmatpush1.msra.mxu0 0.0
    %1364 = vmatprep.subr.mxu0 0.0
    %1365 = vmatpush1.msra.mxu0 0.0
    %1366 = vmatprep.subr.mxu0 0.0
    %1367 = vmatpush1.msra.mxu0 0.0
    %1368 = vmatprep.subr.mxu0 0.0
    %1369 = vmatpush1.msra.mxu0 0.0
    %1370 = vmatprep.subr.mxu0 0.0
    %1371 = vmatpush1.msra.mxu0 0.0
    %1372 = vmatprep.subr.mxu0 0.0
    %1373 = vmatpush1.msra.mxu0 0.0
    %1374 = vmatprep.subr.mxu0 0.0
    %1375 = vmatpush1.msra.mxu0 0.0
    %1376 = vmatprep.subr.mxu0 0.0
    %1377 = vmatpush1.msra.mxu0 0.0
    %1378 = vmatprep.subr.mxu0 0.0
    %1379 = vmatpush1.msra.mxu0 0.0
    %1380 = vmatprep.subr.mxu0 0.0
    %1381 = vmatpush1.msra.mxu0 0.0
    %1382 = vmatprep.mubr.f32.mxu0 0.0
    %1383 = vmatmul.mubr.f32.gmra.mrb[0].mxu0 %v1316
    %v1384 = vpop.f32.mrb[0].mxu0
    %v1385 = vadd.f32 0.0, %v1384
    %v1386 = vpop.f32.mrb[0].mxu0
    %1387 = vdwg.mxu0
    %v1389 = vsel %vm64, %v1308, 0
    %1391 = vmatprep.subr.mxu0 0.0
    %1392 = vmatpush1.msra.mxu0 %v566
    %1393 = vmatprep.subr.mxu0 0.0
    %1394 = vmatpush1.msra.mxu0 0.0
    %1395 = vmatprep.subr.mxu0 0.0
    %1396 = vmatpush1.msra.mxu0 0.0
    %1397 = vmatprep.subr.mxu0 0.0
    %1398 = vmatpush1.msra.mxu0 0.0
    %1399 = vmatprep.subr.mxu0 0.0
    %1400 = vmatpush1.msra.mxu0 0.0
    %1401 = vmatprep.subr.mxu0 0.0
    %1402 = vmatpush1.msra.mxu0 0.0
    %1403 = vmatprep.subr.mxu0 0.0
    %1404 = vmatpush1.msra.mxu0 0.0
    %1405 = vmatprep.subr.mxu0 0.0
    %1406 = vmatpush1.msra.mxu0 0.0
    %1407 = vmatprep.subr.mxu0 0.0
    %1408 = vmatpush1.msra.mxu0 0.0
    %1409 = vmatprep.subr.mxu0 0.0
    %1410 = vmatpush1.msra.mxu0 0.0
    %1411 = vmatprep.subr.mxu0 0.0
    %1412 = vmatpush1.msra.mxu0 0.0
    %1413 = vmatprep.subr.mxu0 0.0
    %1414 = vmatpush1.msra.mxu0 0.0
    %1415 = vmatprep.subr.mxu0 0.0
    %1416 = vmatpush1.msra.mxu0 0.0
    %1417 = vmatprep.subr.mxu0 0.0
    %1418 = vmatpush1.msra.mxu0 0.0
    %1419 = vmatprep.subr.mxu0 0.0
    %1420 = vmatpush1.msra.mxu0 0.0
    %1421 = vmatprep.subr.mxu0 0.0
    %1422 = vmatpush1.msra.mxu0 0.0
    %1423 = vmatprep.subr.mxu0 0.0
    %1424 = vmatpush1.msra.mxu0 0.0
    %1425 = vmatprep.subr.mxu0 0.0
    %1426 = vmatpush1.msra.mxu0 0.0
    %1427 = vmatprep.subr.mxu0 0.0
    %1428 = vmatpush1.msra.mxu0 0.0
    %1429 = vmatprep.subr.mxu0 0.0
    %1430 = vmatpush1.msra.mxu0 0.0
    %1431 = vmatprep.subr.mxu0 0.0
    %1432 = vmatpush1.msra.mxu0 0.0
    %1433 = vmatprep.subr.mxu0 0.0
    %1434 = vmatpush1.msra.mxu0 0.0
    %1435 = vmatprep.subr.mxu0 0.0
    %1436 = vmatpush1.msra.mxu0 0.0
    %1437 = vmatprep.subr.mxu0 0.0
    %1438 = vmatpush1.msra.mxu0 0.0
    %1439 = vmatprep.subr.mxu0 0.0
    %1440 = vmatpush1.msra.mxu0 0.0
    %1441 = vmatprep.subr.mxu0 0.0
    %1442 = vmatpush1.msra.mxu0 0.0
    %1443 = vmatprep.subr.mxu0 0.0
    %1444 = vmatpush1.msra.mxu0 0.0
    %1445 = vmatprep.subr.mxu0 0.0
    %1446 = vmatpush1.msra.mxu0 0.0
    %1447 = vmatprep.subr.mxu0 0.0
    %1448 = vmatpush1.msra.mxu0 0.0
    %1449 = vmatprep.subr.mxu0 0.0
    %1450 = vmatpush1.msra.mxu0 0.0
    %1451 = vmatprep.subr.mxu0 0.0
    %1452 = vmatpush1.msra.mxu0 0.0
    %1453 = vmatprep.subr.mxu0 0.0
    %1454 = vmatpush1.msra.mxu0 0.0
    %1455 = vmatprep.mubr.f32.mxu0 0.0
    %1456 = vmatmul.mubr.f32.gmra.mrb[0].mxu0 %v1389
    %v1457 = vpop.f32.mrb[0].mxu0
    %v1458 = vadd.f32 0.0, %v1457
    %v1459 = vpop.f32.mrb[0].mxu0
    %1460 = vdwg.mxu0
    %v1462 = vsel %vm64, %v1309, 0
    %1464 = vmatprep.subr.mxu0 0.0
    %1465 = vmatpush1.msra.mxu0 %v600
    %1466 = vmatprep.subr.mxu0 0.0
    %1467 = vmatpush1.msra.mxu0 0.0
    %1468 = vmatprep.subr.mxu0 0.0
    %1469 = vmatpush1.msra.mxu0 0.0
    %1470 = vmatprep.subr.mxu0 0.0
    %1471 = vmatpush1.msra.mxu0 0.0
    %1472 = vmatprep.subr.mxu0 0.0
    %1473 = vmatpush1.msra.mxu0 0.0
    %1474 = vmatprep.subr.mxu0 0.0
    %1475 = vmatpush1.msra.mxu0 0.0
    %1476 = vmatprep.subr.mxu0 0.0
    %1477 = vmatpush1.msra.mxu0 0.0
    %1478 = vmatprep.subr.mxu0 0.0
    %1479 = vmatpush1.msra.mxu0 0.0
    %1480 = vmatprep.subr.mxu0 0.0
    %1481 = vmatpush1.msra.mxu0 0.0
    %1482 = vmatprep.subr.mxu0 0.0
    %1483 = vmatpush1.msra.mxu0 0.0
    %1484 = vmatprep.subr.mxu0 0.0
    %1485 = vmatpush1.msra.mxu0 0.0
    %1486 = vmatprep.subr.mxu0 0.0
    %1487 = vmatpush1.msra.mxu0 0.0
    %1488 = vmatprep.subr.mxu0 0.0
    %1489 = vmatpush1.msra.mxu0 0.0
    %1490 = vmatprep.subr.mxu0 0.0
    %1491 = vmatpush1.msra.mxu0 0.0
    %1492 = vmatprep.subr.mxu0 0.0
    %1493 = vmatpush1.msra.mxu0 0.0
    %1494 = vmatprep.subr.mxu0 0.0
    %1495 = vmatpush1.msra.mxu0 0.0
    %1496 = vmatprep.subr.mxu0 0.0
    %1497 = vmatpush1.msra.mxu0 0.0
    %1498 = vmatprep.subr.mxu0 0.0
    %1499 = vmatpush1.msra.mxu0 0.0
    %1500 = vmatprep.subr.mxu0 0.0
    %1501 = vmatpush1.msra.mxu0 0.0
    %1502 = vmatprep.subr.mxu0 0.0
    %1503 = vmatpush1.msra.mxu0 0.0
    %1504 = vmatprep.subr.mxu0 0.0
    %1505 = vmatpush1.msra.mxu0 0.0
    %1506 = vmatprep.subr.mxu0 0.0
    %1507 = vmatpush1.msra.mxu0 0.0
    %1508 = vmatprep.subr.mxu0 0.0
    %1509 = vmatpush1.msra.mxu0 0.0
    %1510 = vmatprep.subr.mxu0 0.0
    %1511 = vmatpush1.msra.mxu0 0.0
    %1512 = vmatprep.subr.mxu0 0.0
    %1513 = vmatpush1.msra.mxu0 0.0
    %1514 = vmatprep.subr.mxu0 0.0
    %1515 = vmatpush1.msra.mxu0 0.0
    %1516 = vmatprep.subr.mxu0 0.0
    %1517 = vmatpush1.msra.mxu0 0.0
    %1518 = vmatprep.subr.mxu0 0.0
    %1519 = vmatpush1.msra.mxu0 0.0
    %1520 = vmatprep.subr.mxu0 0.0
    %1521 = vmatpush1.msra.mxu0 0.0
    %1522 = vmatprep.subr.mxu0 0.0
    %1523 = vmatpush1.msra.mxu0 0.0
    %1524 = vmatprep.subr.mxu0 0.0
    %1525 = vmatpush1.msra.mxu0 0.0
    %1526 = vmatprep.subr.mxu0 0.0
    %1527 = vmatpush1.msra.mxu0 0.0
    %1528 = vmatprep.mubr.f32.mxu0 0.0
    %1529 = vmatmul.mubr.f32.gmra.mrb[0].mxu0 %v1462
    %v1530 = vpop.f32.mrb[0].mxu0
    %v1531 = vadd.f32 0.0, %v1530
    %v1532 = vpop.f32.mrb[0].mxu0
    %1533 = vdwg.mxu0
    %v1535 = vsel %vm64, %v1310, 0
    %1537 = vmatprep.subr.mxu0 0.0
    %1538 = vmatpush1.msra.mxu0 %v602
    %1539 = vmatprep.subr.mxu0 0.0
    %1540 = vmatpush1.msra.mxu0 0.0
    %1541 = vmatprep.subr.mxu0 0.0
    %1542 = vmatpush1.msra.mxu0 0.0
    %1543 = vmatprep.subr.mxu0 0.0
    %1544 = vmatpush1.msra.mxu0 0.0
    %1545 = vmatprep.subr.mxu0 0.0
    %1546 = vmatpush1.msra.mxu0 0.0
    %1547 = vmatprep.subr.mxu0 0.0
    %1548 = vmatpush1.msra.mxu0 0.0
    %1549 = vmatprep.subr.mxu0 0.0
    %1550 = vmatpush1.msra.mxu0 0.0
    %1551 = vmatprep.subr.mxu0 0.0
    %1552 = vmatpush1.msra.mxu0 0.0
    %1553 = vmatprep.subr.mxu0 0.0
    %1554 = vmatpush1.msra.mxu0 0.0
    %1555 = vmatprep.subr.mxu0 0.0
    %1556 = vmatpush1.msra.mxu0 0.0
    %1557 = vmatprep.subr.mxu0 0.0
    %1558 = vmatpush1.msra.mxu0 0.0
    %1559 = vmatprep.subr.mxu0 0.0
    %1560 = vmatpush1.msra.mxu0 0.0
    %1561 = vmatprep.subr.mxu0 0.0
    %1562 = vmatpush1.msra.mxu0 0.0
    %1563 = vmatprep.subr.mxu0 0.0
    %1564 = vmatpush1.msra.mxu0 0.0
    %1565 = vmatprep.subr.mxu0 0.0
    %1566 = vmatpush1.msra.mxu0 0.0
    %1567 = vmatprep.subr.mxu0 0.0
    %1568 = vmatpush1.msra.mxu0 0.0
    %1569 = vmatprep.subr.mxu0 0.0
    %1570 = vmatpush1.msra.mxu0 0.0
    %1571 = vmatprep.subr.mxu0 0.0
    %1572 = vmatpush1.msra.mxu0 0.0
    %1573 = vmatprep.subr.mxu0 0.0
    %1574 = vmatpush1.msra.mxu0 0.0
    %1575 = vmatprep.subr.mxu0 0.0
    %1576 = vmatpush1.msra.mxu0 0.0
    %1577 = vmatprep.subr.mxu0 0.0
    %1578 = vmatpush1.msra.mxu0 0.0
    %1579 = vmatprep.subr.mxu0 0.0
    %1580 = vmatpush1.msra.mxu0 0.0
    %1581 = vmatprep.subr.mxu0 0.0
    %1582 = vmatpush1.msra.mxu0 0.0
    %1583 = vmatprep.subr.mxu0 0.0
    %1584 = vmatpush1.msra.mxu0 0.0
    %1585 = vmatprep.subr.mxu0 0.0
    %1586 = vmatpush1.msra.mxu0 0.0
    %1587 = vmatprep.subr.mxu0 0.0
    %1588 = vmatpush1.msra.mxu0 0.0
    %1589 = vmatprep.subr.mxu0 0.0
    %1590 = vmatpush1.msra.mxu0 0.0
    %1591 = vmatprep.subr.mxu0 0.0
    %1592 = vmatpush1.msra.mxu0 0.0
    %1593 = vmatprep.subr.mxu0 0.0
    %1594 = vmatpush1.msra.mxu0 0.0
    %1595 = vmatprep.subr.mxu0 0.0
    %1596 = vmatpush1.msra.mxu0 0.0
    %1597 = vmatprep.subr.mxu0 0.0
    %1598 = vmatpush1.msra.mxu0 0.0
    %1599 = vmatprep.subr.mxu0 0.0
    %1600 = vmatpush1.msra.mxu0 0.0
    %1601 = vmatprep.mubr.f32.mxu0 0.0
    %1602 = vmatmul.mubr.f32.gmra.mrb[0].mxu0 %v1535
    %v1603 = vpop.f32.mrb[0].mxu0
    %v1604 = vadd.f32 0.0, %v1603
    %v1605 = vpop.f32.mrb[0].mxu0
    %1606 = vdwg.mxu0
    %v1608 = vsel %vm64, %v1311, 0
    %1610 = vmatprep.subr.mxu0 0.0
    %1611 = vmatpush1.msra.mxu0 %v606
    %1612 = vmatprep.subr.mxu0 0.0
    %1613 = vmatpush1.msra.mxu0 0.0
    %1614 = vmatprep.subr.mxu0 0.0
    %1615 = vmatpush1.msra.mxu0 0.0
    %1616 = vmatprep.subr.mxu0 0.0
    %1617 = vmatpush1.msra.mxu0 0.0
    %1618 = vmatprep.subr.mxu0 0.0
    %1619 = vmatpush1.msra.mxu0 0.0
    %1620 = vmatprep.subr.mxu0 0.0
    %1621 = vmatpush1.msra.mxu0 0.0
    %1622 = vmatprep.subr.mxu0 0.0
    %1623 = vmatpush1.msra.mxu0 0.0
    %1624 = vmatprep.subr.mxu0 0.0
    %1625 = vmatpush1.msra.mxu0 0.0
    %1626 = vmatprep.subr.mxu0 0.0
    %1627 = vmatpush1.msra.mxu0 0.0
    %1628 = vmatprep.subr.mxu0 0.0
    %1629 = vmatpush1.msra.mxu0 0.0
    %1630 = vmatprep.subr.mxu0 0.0
    %1631 = vmatpush1.msra.mxu0 0.0
    %1632 = vmatprep.subr.mxu0 0.0
    %1633 = vmatpush1.msra.mxu0 0.0
    %1634 = vmatprep.subr.mxu0 0.0
    %1635 = vmatpush1.msra.mxu0 0.0
    %1636 = vmatprep.subr.mxu0 0.0
    %1637 = vmatpush1.msra.mxu0 0.0
    %1638 = vmatprep.subr.mxu0 0.0
    %1639 = vmatpush1.msra.mxu0 0.0
    %1640 = vmatprep.subr.mxu0 0.0
    %1641 = vmatpush1.msra.mxu0 0.0
    %1642 = vmatprep.subr.mxu0 0.0
    %1643 = vmatpush1.msra.mxu0 0.0
    %1644 = vmatprep.subr.mxu0 0.0
    %1645 = vmatpush1.msra.mxu0 0.0
    %1646 = vmatprep.subr.mxu0 0.0
    %1647 = vmatpush1.msra.mxu0 0.0
    %1648 = vmatprep.subr.mxu0 0.0
    %1649 = vmatpush1.msra.mxu0 0.0
    %1650 = vmatprep.subr.mxu0 0.0
    %1651 = vmatpush1.msra.mxu0 0.0
    %1652 = vmatprep.subr.mxu0 0.0
    %1653 = vmatpush1.msra.mxu0 0.0
    %1654 = vmatprep.subr.mxu0 0.0
    %1655 = vmatpush1.msra.mxu0 0.0
    %1656 = vmatprep.subr.mxu0 0.0
    %1657 = vmatpush1.msra.mxu0 0.0
    %1658 = vmatprep.subr.mxu0 0.0
    %1659 = vmatpush1.msra.mxu0 0.0
    %1660 = vmatprep.subr.mxu0 0.0
    %1661 = vmatpush1.msra.mxu0 0.0
    %1662 = vmatprep.subr.mxu0 0.0
    %1663 = vmatpush1.msra.mxu0 0.0
    %1664 = vmatprep.subr.mxu0 0.0
    %1665 = vmatpush1.msra.mxu0 0.0
    %1666 = vmatprep.subr.mxu0 0.0
    %1667 = vmatpush1.msra.mxu0 0.0
    %1668 = vmatprep.subr.mxu0 0.0
    %1669 = vmatpush1.msra.mxu0 0.0
    %1670 = vmatprep.subr.mxu0 0.0
    %1671 = vmatpush1.msra.mxu0 0.0
    %1672 = vmatprep.subr.mxu0 0.0
    %1673 = vmatpush1.msra.mxu0 0.0
    %1674 = vmatprep.mubr.f32.mxu0 0.0
    %1675 = vmatmul.mubr.f32.gmra.mrb[0].mxu0 %v1608
    %v1676 = vpop.f32.mrb[0].mxu0
    %v1677 = vadd.f32 0.0, %v1676
    %v1678 = vpop.f32.mrb[0].mxu0
    %1679 = vdwg.mxu0
    %v1681 = vsel %vm64, %v1312, 0
    %1683 = vmatprep.subr.mxu0 0.0
    %1684 = vmatpush1.msra.mxu0 %v608
    %1685 = vmatprep.subr.mxu0 0.0
    %1686 = vmatpush1.msra.mxu0 0.0
    %1687 = vmatprep.subr.mxu0 0.0
    %1688 = vmatpush1.msra.mxu0 0.0
    %1689 = vmatprep.subr.mxu0 0.0
    %1690 = vmatpush1.msra.mxu0 0.0
    %1691 = vmatprep.subr.mxu0 0.0
    %1692 = vmatpush1.msra.mxu0 0.0
    %1693 = vmatprep.subr.mxu0 0.0
    %1694 = vmatpush1.msra.mxu0 0.0
    %1695 = vmatprep.subr.mxu0 0.0
    %1696 = vmatpush1.msra.mxu0 0.0
    %1697 = vmatprep.subr.mxu0 0.0
    %1698 = vmatpush1.msra.mxu0 0.0
    %1699 = vmatprep.subr.mxu0 0.0
    %1700 = vmatpush1.msra.mxu0 0.0
    %1701 = vmatprep.subr.mxu0 0.0
    %1702 = vmatpush1.msra.mxu0 0.0
    %1703 = vmatprep.subr.mxu0 0.0
    %1704 = vmatpush1.msra.mxu0 0.0
    %1705 = vmatprep.subr.mxu0 0.0
    %1706 = vmatpush1.msra.mxu0 0.0
    %1707 = vmatprep.subr.mxu0 0.0
    %1708 = vmatpush1.msra.mxu0 0.0
    %1709 = vmatprep.subr.mxu0 0.0
    %1710 = vmatpush1.msra.mxu0 0.0
    %1711 = vmatprep.subr.mxu0 0.0
    %1712 = vmatpush1.msra.mxu0 0.0
    %1713 = vmatprep.subr.mxu0 0.0
    %1714 = vmatpush1.msra.mxu0 0.0
    %1715 = vmatprep.subr.mxu0 0.0
    %1716 = vmatpush1.msra.mxu0 0.0
    %1717 = vmatprep.subr.mxu0 0.0
    %1718 = vmatpush1.msra.mxu0 0.0
    %1719 = vmatprep.subr.mxu0 0.0
    %1720 = vmatpush1.msra.mxu0 0.0
    %1721 = vmatprep.subr.mxu0 0.0
    %1722 = vmatpush1.msra.mxu0 0.0
    %1723 = vmatprep.subr.mxu0 0.0
    %1724 = vmatpush1.msra.mxu0 0.0
    %1725 = vmatprep.subr.mxu0 0.0
    %1726 = vmatpush1.msra.mxu0 0.0
    %1727 = vmatprep.subr.mxu0 0.0
    %1728 = vmatpush1.msra.mxu0 0.0
    %1729 = vmatprep.subr.mxu0 0.0
    %1730 = vmatpush1.msra.mxu0 0.0
    %1731 = vmatprep.subr.mxu0 0.0
    %1732 = vmatpush1.msra.mxu0 0.0
    %1733 = vmatprep.subr.mxu0 0.0
    %1734 = vmatpush1.msra.mxu0 0.0
    %1735 = vmatprep.subr.mxu0 0.0
    %1736 = vmatpush1.msra.mxu0 0.0
    %1737 = vmatprep.subr.mxu0 0.0
    %1738 = vmatpush1.msra.mxu0 0.0
    %1739 = vmatprep.subr.mxu0 0.0
    %1740 = vmatpush1.msra.mxu0 0.0
    %1741 = vmatprep.subr.mxu0 0.0
    %1742 = vmatpush1.msra.mxu0 0.0
    %1743 = vmatprep.subr.mxu0 0.0
    %1744 = vmatpush1.msra.mxu0 0.0
    %1745 = vmatprep.subr.mxu0 0.0
    %1746 = vmatpush1.msra.mxu0 0.0
    %1747 = vmatprep.mubr.f32.mxu0 0.0
    %1748 = vmatmul.mubr.f32.gmra.mrb[0].mxu0 %v1681
    %v1749 = vpop.f32.mrb[0].mxu0
    %v1750 = vadd.f32 0.0, %v1749
    %v1751 = vpop.f32.mrb[0].mxu0
    %1752 = vdwg.mxu0
    %v1754 = vsel %vm64, %v1313, 0
    %1756 = vmatprep.subr.mxu0 0.0
    %1757 = vmatpush1.msra.mxu0 %v612
    %1758 = vmatprep.subr.mxu0 0.0
    %1759 = vmatpush1.msra.mxu0 0.0
    %1760 = vmatprep.subr.mxu0 0.0
    %1761 = vmatpush1.msra.mxu0 0.0
    %1762 = vmatprep.subr.mxu0 0.0
    %1763 = vmatpush1.msra.mxu0 0.0
    %1764 = vmatprep.subr.mxu0 0.0
    %1765 = vmatpush1.msra.mxu0 0.0
    %1766 = vmatprep.subr.mxu0 0.0
    %1767 = vmatpush1.msra.mxu0 0.0
    %1768 = vmatprep.subr.mxu0 0.0
    %1769 = vmatpush1.msra.mxu0 0.0
    %1770 = vmatprep.subr.mxu0 0.0
    %1771 = vmatpush1.msra.mxu0 0.0
    %1772 = vmatprep.subr.mxu0 0.0
    %1773 = vmatpush1.msra.mxu0 0.0
    %1774 = vmatprep.subr.mxu0 0.0
    %1775 = vmatpush1.msra.mxu0 0.0
    %1776 = vmatprep.subr.mxu0 0.0
    %1777 = vmatpush1.msra.mxu0 0.0
    %1778 = vmatprep.subr.mxu0 0.0
    %1779 = vmatpush1.msra.mxu0 0.0
    %1780 = vmatprep.subr.mxu0 0.0
    %1781 = vmatpush1.msra.mxu0 0.0
    %1782 = vmatprep.subr.mxu0 0.0
    %1783 = vmatpush1.msra.mxu0 0.0
    %1784 = vmatprep.subr.mxu0 0.0
    %1785 = vmatpush1.msra.mxu0 0.0
    %1786 = vmatprep.subr.mxu0 0.0
    %1787 = vmatpush1.msra.mxu0 0.0
    %1788 = vmatprep.subr.mxu0 0.0
    %1789 = vmatpush1.msra.mxu0 0.0
    %1790 = vmatprep.subr.mxu0 0.0
    %1791 = vmatpush1.msra.mxu0 0.0
    %1792 = vmatprep.subr.mxu0 0.0
    %1793 = vmatpush1.msra.mxu0 0.0
    %1794 = vmatprep.subr.mxu0 0.0
    %1795 = vmatpush1.msra.mxu0 0.0
    %1796 = vmatprep.subr.mxu0 0.0
    %1797 = vmatpush1.msra.mxu0 0.0
    %1798 = vmatprep.subr.mxu0 0.0
    %1799 = vmatpush1.msra.mxu0 0.0
    %1800 = vmatprep.subr.mxu0 0.0
    %1801 = vmatpush1.msra.mxu0 0.0
    %1802 = vmatprep.subr.mxu0 0.0
    %1803 = vmatpush1.msra.mxu0 0.0
    %1804 = vmatprep.subr.mxu0 0.0
    %1805 = vmatpush1.msra.mxu0 0.0
    %1806 = vmatprep.subr.mxu0 0.0
    %1807 = vmatpush1.msra.mxu0 0.0
    %1808 = vmatprep.subr.mxu0 0.0
    %1809 = vmatpush1.msra.mxu0 0.0
    %1810 = vmatprep.subr.mxu0 0.0
    %1811 = vmatpush1.msra.mxu0 0.0
    %1812 = vmatprep.subr.mxu0 0.0
    %1813 = vmatpush1.msra.mxu0 0.0
    %1814 = vmatprep.subr.mxu0 0.0
    %1815 = vmatpush1.msra.mxu0 0.0
    %1816 = vmatprep.subr.mxu0 0.0
    %1817 = vmatpush1.msra.mxu0 0.0
    %1818 = vmatprep.subr.mxu0 0.0
    %1819 = vmatpush1.msra.mxu0 0.0
    %1820 = vmatprep.mubr.f32.mxu0 0.0
    %1821 = vmatmul.mubr.f32.gmra.mrb[0].mxu0 %v1754
    %v1822 = vpop.f32.mrb[0].mxu0
    %v1823 = vadd.f32 0.0, %v1822
    %v1824 = vpop.f32.mrb[0].mxu0
    %1825 = vdwg.mxu0
    %v1827 = vsel %vm64, %v1314, 0
    %1829 = vmatprep.subr.mxu0 0.0
    %1830 = vmatpush1.msra.mxu0 %v614
    %1831 = vmatprep.subr.mxu0 0.0
    %1832 = vmatpush1.msra.mxu0 0.0
    %1833 = vmatprep.subr.mxu0 0.0
    %1834 = vmatpush1.msra.mxu0 0.0
    %1835 = vmatprep.subr.mxu0 0.0
    %1836 = vmatpush1.msra.mxu0 0.0
    %1837 = vmatprep.subr.mxu0 0.0
    %1838 = vmatpush1.msra.mxu0 0.0
    %1839 = vmatprep.subr.mxu0 0.0
    %1840 = vmatpush1.msra.mxu0 0.0
    %1841 = vmatprep.subr.mxu0 0.0
    %1842 = vmatpush1.msra.mxu0 0.0
    %1843 = vmatprep.subr.mxu0 0.0
    %1844 = vmatpush1.msra.mxu0 0.0
    %1845 = vmatprep.subr.mxu0 0.0
    %1846 = vmatpush1.msra.mxu0 0.0
    %1847 = vmatprep.subr.mxu0 0.0
    %1848 = vmatpush1.msra.mxu0 0.0
    %1849 = vmatprep.subr.mxu0 0.0
    %1850 = vmatpush1.msra.mxu0 0.0
    %1851 = vmatprep.subr.mxu0 0.0
    %1852 = vmatpush1.msra.mxu0 0.0
    %1853 = vmatprep.subr.mxu0 0.0
    %1854 = vmatpush1.msra.mxu0 0.0
    %1855 = vmatprep.subr.mxu0 0.0
    %1856 = vmatpush1.msra.mxu0 0.0
    %1857 = vmatprep.subr.mxu0 0.0
    %1858 = vmatpush1.msra.mxu0 0.0
    %1859 = vmatprep.subr.mxu0 0.0
    %1860 = vmatpush1.msra.mxu0 0.0
    %1861 = vmatprep.subr.mxu0 0.0
    %1862 = vmatpush1.msra.mxu0 0.0
    %1863 = vmatprep.subr.mxu0 0.0
    %1864 = vmatpush1.msra.mxu0 0.0
    %1865 = vmatprep.subr.mxu0 0.0
    %1866 = vmatpush1.msra.mxu0 0.0
    %1867 = vmatprep.subr.mxu0 0.0
    %1868 = vmatpush1.msra.mxu0 0.0
    %1869 = vmatprep.subr.mxu0 0.0
    %1870 = vmatpush1.msra.mxu0 0.0
    %1871 = vmatprep.subr.mxu0 0.0
    %1872 = vmatpush1.msra.mxu0 0.0
    %1873 = vmatprep.subr.mxu0 0.0
    %1874 = vmatpush1.msra.mxu0 0.0
    %1875 = vmatprep.subr.mxu0 0.0
    %1876 = vmatpush1.msra.mxu0 0.0
    %1877 = vmatprep.subr.mxu0 0.0
    %1878 = vmatpush1.msra.mxu0 0.0
    %1879 = vmatprep.subr.mxu0 0.0
    %1880 = vmatpush1.msra.mxu0 0.0
    %1881 = vmatprep.subr.mxu0 0.0
    %1882 = vmatpush1.msra.mxu0 0.0
    %1883 = vmatprep.subr.mxu0 0.0
    %1884 = vmatpush1.msra.mxu0 0.0
    %1885 = vmatprep.subr.mxu0 0.0
    %1886 = vmatpush1.msra.mxu0 0.0
    %1887 = vmatprep.subr.mxu0 0.0
    %1888 = vmatpush1.msra.mxu0 0.0
    %1889 = vmatprep.subr.mxu0 0.0
    %1890 = vmatpush1.msra.mxu0 0.0
    %1891 = vmatprep.subr.mxu0 0.0
    %1892 = vmatpush1.msra.mxu0 0.0
    %1893 = vmatprep.mubr.f32.mxu0 0.0
    %1894 = vmatmul.mubr.f32.gmra.mrb[0].mxu0 %v1827
    %v1895 = vpop.f32.mrb[0].mxu0
    %v1896 = vadd.f32 0.0, %v1895
    %v1897 = vpop.f32.mrb[0].mxu0
    %1898 = vdwg.mxu0
    %1901 = vrot.lane.b32.xlu0 %v1531, 8
    %v1902 = vpop.permute.xlu0 %1901
    %1903 = vrot.lane.b32.xlu0 %v1604, 8
    %v1904 = vpop.permute.xlu0 %1903
    %1909 = vrot.lane.b32.xlu0 %v1677, 16
    %v1910 = vpop.permute.xlu0 %1909
    %1911 = vrot.lane.b32.xlu0 %v1750, 16
    %v1912 = vpop.permute.xlu0 %1911
    %1917 = vrot.lane.b32.xlu0 %v1823, 24
    %v1918 = vpop.permute.xlu0 %1917
    %1919 = vrot.lane.b32.xlu0 %v1896, 24
    %v1920 = vpop.permute.xlu0 %1919
    %v1923 = vsel %vm64, %v1385, %v1902
    %v1924 = vsel %vm64, %v1458, %v1904
    %v1925 = vsel %vm146, %v1923, %v1910
    %v1926 = vsel %vm146, %v1924, %v1912
    %vm1927 = vcmask 195584
    %v1928 = vsel %vm1927, %v1925, %v1918
    %v1929 = vsel %vm1927, %v1926, %v1920
    %v1930 = vld [vmem:[%s2 + $0x20] sm:$0x1]
    %v1931 = vlaneseq
    %v1932 = vshrl.u32 %v1931, 7
    %v1933 = vsub.s32 0, %v1932
    %v1934 = vrot.slane %v1930, %v1933
    %v1936 = vsel %vm327, %v1928, 0
    %v1939 = vsel %vm327, %v1929, 0
    %1941 = vmatprep.subr.mxu0 0.0
    %1942 = vmatpush1.msra.mxu0 %v318
    %1943 = vmatprep.subr.mxu0 0.0
    %1944 = vmatpush1.msra.mxu0 %v319
    %1945 = vmatprep.subr.mxu0 0.0
    %1946 = vmatpush1.msra.mxu0 %v320
    %1947 = vmatprep.subr.mxu0 0.0
    %1948 = vmatpush1.msra.mxu0 %v321
    %1949 = vmatprep.subr.mxu0 0.0
    %1950 = vmatpush1.msra.mxu0 0.0
    %1951 = vmatprep.subr.mxu0 0.0
    %1952 = vmatpush1.msra.mxu0 0.0
    %1953 = vmatprep.subr.mxu0 0.0
    %1954 = vmatpush1.msra.mxu0 0.0
    %1955 = vmatprep.subr.mxu0 0.0
    %1956 = vmatpush1.msra.mxu0 0.0
    %1957 = vmatprep.subr.mxu0 0.0
    %1958 = vmatpush1.msra.mxu0 0.0
    %1959 = vmatprep.subr.mxu0 0.0
    %1960 = vmatpush1.msra.mxu0 0.0
    %1961 = vmatprep.subr.mxu0 0.0
    %1962 = vmatpush1.msra.mxu0 0.0
    %1963 = vmatprep.subr.mxu0 0.0
    %1964 = vmatpush1.msra.mxu0 0.0
    %1965 = vmatprep.subr.mxu0 0.0
    %1966 = vmatpush1.msra.mxu0 0.0
    %1967 = vmatprep.subr.mxu0 0.0
    %1968 = vmatpush1.msra.mxu0 0.0
    %1969 = vmatprep.subr.mxu0 0.0
    %1970 = vmatpush1.msra.mxu0 0.0
    %1971 = vmatprep.subr.mxu0 0.0
    %1972 = vmatpush1.msra.mxu0 0.0
    %1973 = vmatprep.subr.mxu0 0.0
    %1974 = vmatpush1.msra.mxu0 0.0
    %1975 = vmatprep.subr.mxu0 0.0
    %1976 = vmatpush1.msra.mxu0 0.0
    %1977 = vmatprep.subr.mxu0 0.0
    %1978 = vmatpush1.msra.mxu0 0.0
    %1979 = vmatprep.subr.mxu0 0.0
    %1980 = vmatpush1.msra.mxu0 0.0
    %1981 = vmatprep.subr.mxu0 0.0
    %1982 = vmatpush1.msra.mxu0 0.0
    %1983 = vmatprep.subr.mxu0 0.0
    %1984 = vmatpush1.msra.mxu0 0.0
    %1985 = vmatprep.subr.mxu0 0.0
    %1986 = vmatpush1.msra.mxu0 0.0
    %1987 = vmatprep.subr.mxu0 0.0
    %1988 = vmatpush1.msra.mxu0 0.0
    %1989 = vmatprep.subr.mxu0 0.0
    %1990 = vmatpush1.msra.mxu0 0.0
    %1991 = vmatprep.subr.mxu0 0.0
    %1992 = vmatpush1.msra.mxu0 0.0
    %1993 = vmatprep.subr.mxu0 0.0
    %1994 = vmatpush1.msra.mxu0 0.0
    %1995 = vmatprep.subr.mxu0 0.0
    %1996 = vmatpush1.msra.mxu0 0.0
    %1997 = vmatprep.subr.mxu0 0.0
    %1998 = vmatpush1.msra.mxu0 0.0
    %1999 = vmatprep.subr.mxu0 0.0
    %2000 = vmatpush1.msra.mxu0 0.0
    %2001 = vmatprep.subr.mxu0 0.0
    %2002 = vmatpush1.msra.mxu0 0.0
    %2003 = vmatprep.subr.mxu0 0.0
    %2004 = vmatpush1.msra.mxu0 0.0
    %2005 = vmatprep.mubr.f32.mxu0 0.0
    %2006 = vmatmul.mubr.f32.gmra.mrb[0].mxu0 %v1936
    %v2007 = vpop.f32.mrb[0].mxu0
    %v2008 = vadd.f32 %v1934, %v2007
    %v2009 = vpop.f32.mrb[0].mxu0
    %2010 = vmatprep.mubr.f32.mxu0 0.0
    %2011 = vmatmul.mubr.f32.gmra.mrb[0].mxu0 %v1939
    %v2012 = vpop.f32.mrb[0].mxu0
    %v2013 = vadd.f32 %v1934, %v2012
    %v2014 = vpop.f32.mrb[0].mxu0
    %2015 = vdwg.mxu0
    %v2016 = vadd.f32 %v298, %v2008
    %v2017 = vadd.f32 %v299, %v2013
    %v2018 = vld [vmem:[%s2 + $0x21] sm:$0x1]
    %v2019 = vld [vmem:[%s2 + $0x22] sm:$0x1]
    %v2020 = vsel %vm327, %v2016, 0.0
    %2021 = vadd.xlane.f32.xlu0 %v2020
    %v2022 = vpop.xlane.xlu0 %2021
    %v2023 = vsel %vm327, %v2017, 0.0
    %2024 = vadd.xlane.f32.xlu0 %v2023
    %v2025 = vpop.xlane.xlu0 %2024
    %v2026 = vrcp.pop 32.0
    %v2027 = vmul.f32 %v2022, %v2026
    %v2028 = vmul.f32 %v2025, %v2026
    %v2029 = vsub.f32 %v2016, %v2027
    %v2030 = vsub.f32 %v2017, %v2028
    %v2031 = vmul.f32 %v2029, %v2029
    %v2032 = vmul.f32 %v2030, %v2030
    %v2033 = vsel %vm327, %v2031, 0.0
    %2034 = vadd.xlane.f32.xlu0 %v2033
    %v2035 = vpop.xlane.xlu0 %2034
    %v2036 = vsel %vm327, %v2032, 0.0
    %2037 = vadd.xlane.f32.xlu0 %v2036
    %v2038 = vpop.xlane.xlu0 %2037
    %v2039 = vmul.f32 %v2035, %v2026
    %v2040 = vmul.f32 %v2038, %v2026
    %v2041 = vadd.f32 %v2039, 1e-05
    %v2042 = vadd.f32 %v2040, 1e-05
    %v2043 = vrsqrt.pop %v2041
    %v2044 = vrsqrt.pop %v2042
    %v2045 = vmul.f32 %v2029, %v2043
    %v2046 = vmul.f32 %v2030, %v2044
    %v2047 = vlaneseq
    %v2048 = vshrl.u32 %v2047, 7
    %v2049 = vsub.s32 0, %v2048
    %v2050 = vrot.slane %v2018, %v2049
    %v2051 = vmul.f32 %v2045, %v2050
    %v2052 = vmul.f32 %v2046, %v2050
    %v2053 = vlaneseq
    %v2054 = vshrl.u32 %v2053, 7
    %v2055 = vsub.s32 0, %v2054
    %v2056 = vrot.slane %v2019, %v2055
    %v2057 = vadd.f32 %v2051, %v2056
    %v2058 = vadd.f32 %v2052, %v2056
    %v2059 = vld [vmem:[#allocation2] sm:$0xff]
    %v2060 = vld [vmem:[#allocation2 + $0x8] sm:$0xff]
    %v2061 = vld [vmem:[#allocation2 + $0x10] sm:$0xff]
    %v2062 = vld [vmem:[#allocation2 + $0x18] sm:$0xff]
    %v2063 = vld [vmem:[%s2 + $0x23] sm:$0x1]
    %v2064 = vlaneseq
    %v2065 = vshrl.u32 %v2064, 7
    %v2066 = vsub.s32 0, %v2065
    %v2067 = vrot.slane %v2063, %v2066
    %v2069 = vsel %vm327, %v2057, 0
    %v2072 = vsel %vm327, %v2058, 0
    %2074 = vmatprep.subr.mxu0 0.0
    %2075 = vmatpush1.msra.mxu0 %v2059
    %2076 = vmatprep.subr.mxu0 0.0
    %2077 = vmatpush1.msra.mxu0 %v2060
    %2078 = vmatprep.subr.mxu0 0.0
    %2079 = vmatpush1.msra.mxu0 %v2061
    %2080 = vmatprep.subr.mxu0 0.0
    %2081 = vmatpush1.msra.mxu0 %v2062
    %2082 = vmatprep.subr.mxu0 0.0
    %2083 = vmatpush1.msra.mxu0 0.0
    %2084 = vmatprep.subr.mxu0 0.0
    %2085 = vmatpush1.msra.mxu0 0.0
    %2086 = vmatprep.subr.mxu0 0.0
    %2087 = vmatpush1.msra.mxu0 0.0
    %2088 = vmatprep.subr.mxu0 0.0
    %2089 = vmatpush1.msra.mxu0 0.0
    %2090 = vmatprep.subr.mxu0 0.0
    %2091 = vmatpush1.msra.mxu0 0.0
    %2092 = vmatprep.subr.mxu0 0.0
    %2093 = vmatpush1.msra.mxu0 0.0
    %2094 = vmatprep.subr.mxu0 0.0
    %2095 = vmatpush1.msra.mxu0 0.0
    %2096 = vmatprep.subr.mxu0 0.0
    %2097 = vmatpush1.msra.mxu0 0.0
    %2098 = vmatprep.subr.mxu0 0.0
    %2099 = vmatpush1.msra.mxu0 0.0
    %2100 = vmatprep.subr.mxu0 0.0
    %2101 = vmatpush1.msra.mxu0 0.0
    %2102 = vmatprep.subr.mxu0 0.0
    %2103 = vmatpush1.msra.mxu0 0.0
    %2104 = vmatprep.subr.mxu0 0.0
    %2105 = vmatpush1.msra.mxu0 0.0
    %2106 = vmatprep.subr.mxu0 0.0
    %2107 = vmatpush1.msra.mxu0 0.0
    %2108 = vmatprep.subr.mxu0 0.0
    %2109 = vmatpush1.msra.mxu0 0.0
    %2110 = vmatprep.subr.mxu0 0.0
    %2111 = vmatpush1.msra.mxu0 0.0
    %2112 = vmatprep.subr.mxu0 0.0
    %2113 = vmatpush1.msra.mxu0 0.0
    %2114 = vmatprep.subr.mxu0 0.0
    %2115 = vmatpush1.msra.mxu0 0.0
    %2116 = vmatprep.subr.mxu0 0.0
    %2117 = vmatpush1.msra.mxu0 0.0
    %2118 = vmatprep.subr.mxu0 0.0
    %2119 = vmatpush1.msra.mxu0 0.0
    %2120 = vmatprep.subr.mxu0 0.0
    %2121 = vmatpush1.msra.mxu0 0.0
    %2122 = vmatprep.subr.mxu0 0.0
    %2123 = vmatpush1.msra.mxu0 0.0
    %2124 = vmatprep.subr.mxu0 0.0
    %2125 = vmatpush1.msra.mxu0 0.0
    %2126 = vmatprep.subr.mxu0 0.0
    %2127 = vmatpush1.msra.mxu0 0.0
    %2128 = vmatprep.subr.mxu0 0.0
    %2129 = vmatpush1.msra.mxu0 0.0
    %2130 = vmatprep.subr.mxu0 0.0
    %2131 = vmatpush1.msra.mxu0 0.0
    %2132 = vmatprep.subr.mxu0 0.0
    %2133 = vmatpush1.msra.mxu0 0.0
    %2134 = vmatprep.subr.mxu0 0.0
    %2135 = vmatpush1.msra.mxu0 0.0
    %2136 = vmatprep.subr.mxu0 0.0
    %2137 = vmatpush1.msra.mxu0 0.0
    %2138 = vmatprep.mubr.f32.mxu0 0.0
    %2139 = vmatmul.mubr.f32.gmra.mrb[0].mxu0 %v2069
    %v2140 = vpop.f32.mrb[0].mxu0
    %v2141 = vadd.f32 %v2067, %v2140
    %v2142 = vpop.f32.mrb[0].mxu0
    %2143 = vmatprep.mubr.f32.mxu0 0.0
    %2144 = vmatmul.mubr.f32.gmra.mrb[0].mxu0 %v2072
    %v2145 = vpop.f32.mrb[0].mxu0
    %v2146 = vadd.f32 %v2067, %v2145
    %v2147 = vpop.f32.mrb[0].mxu0
    %2148 = vdwg.mxu0
    %v2149 = vmul.f32 %v2141, %v2141
    %v2150 = vmul.f32 %v2146, %v2146
    %v2151 = vmul.f32 %v2141, %v2149
    %v2152 = vmul.f32 %v2146, %v2150
    %v2153 = vmul.f32 %v2151, 0.044715
    %v2154 = vmul.f32 %v2152, 0.044715
    %v2155 = vadd.f32 %v2141, %v2153
    %v2156 = vadd.f32 %v2146, %v2154
    %v2157 = vmul.f32 %v2155, 0.7978846
    %v2158 = vmul.f32 %v2156, 0.7978846
    %v2159 = vtanh.pop %v2157
    %v2160 = vtanh.pop %v2158
    %v2161 = vadd.f32 %v2159, 1.0
    %v2162 = vadd.f32 %v2160, 1.0
    %v2163 = vmul.f32 %v2161, 0.5
    %v2164 = vmul.f32 %v2162, 0.5
    %v2165 = vmul.f32 %v2141, %v2163
    %v2166 = vmul.f32 %v2146, %v2164
    %v2167 = vld [vmem:[%s5] sm:$0xff]
    %v2168 = vld [vmem:[%s5 + $0x8] sm:$0xff]
    %v2169 = vld [vmem:[%s5 + $0x10] sm:$0xff]
    %v2170 = vld [vmem:[%s5 + $0x18] sm:$0xff]
    %v2171 = vld [vmem:[%s5 + $0x20] sm:$0xff]
    %v2172 = vld [vmem:[%s5 + $0x28] sm:$0xff]
    %v2173 = vld [vmem:[%s5 + $0x30] sm:$0xff]
    %v2174 = vld [vmem:[%s5 + $0x38] sm:$0xff]
    %v2175 = vld [vmem:[%s5 + $0x40] sm:$0xff]
    %v2176 = vld [vmem:[%s5 + $0x48] sm:$0xff]
    %v2177 = vld [vmem:[%s5 + $0x50] sm:$0xff]
    %v2178 = vld [vmem:[%s5 + $0x58] sm:$0xff]
    %v2179 = vld [vmem:[%s5 + $0x60] sm:$0xff]
    %v2180 = vld [vmem:[%s5 + $0x68] sm:$0xff]
    %v2181 = vld [vmem:[%s5 + $0x70] sm:$0xff]
    %v2182 = vld [vmem:[%s5 + $0x78] sm:$0xff]
    %v2183 = vld [vmem:[%s2 + $0x24] sm:$0x1]
    %v2184 = vlaneseq
    %v2185 = vshrl.u32 %v2184, 7
    %v2186 = vsub.s32 0, %v2185
    %v2187 = vrot.slane %v2183, %v2186
    %2188 = vmatprep.subr.mxu0 0.0
    %2189 = vmatpush1.msra.mxu0 %v2167
    %2190 = vmatprep.subr.mxu0 0.0
    %2191 = vmatpush1.msra.mxu0 %v2168
    %2192 = vmatprep.subr.mxu0 0.0
    %2193 = vmatpush1.msra.mxu0 %v2169
    %2194 = vmatprep.subr.mxu0 0.0
    %2195 = vmatpush1.msra.mxu0 %v2170
    %2196 = vmatprep.subr.mxu0 0.0
    %2197 = vmatpush1.msra.mxu0 %v2171
    %2198 = vmatprep.subr.mxu0 0.0
    %2199 = vmatpush1.msra.mxu0 %v2172
    %2200 = vmatprep.subr.mxu0 0.0
    %2201 = vmatpush1.msra.mxu0 %v2173
    %2202 = vmatprep.subr.mxu0 0.0
    %2203 = vmatpush1.msra.mxu0 %v2174
    %2204 = vmatprep.subr.mxu0 0.0
    %2205 = vmatpush1.msra.mxu0 %v2175
    %2206 = vmatprep.subr.mxu0 0.0
    %2207 = vmatpush1.msra.mxu0 %v2176
    %2208 = vmatprep.subr.mxu0 0.0
    %2209 = vmatpush1.msra.mxu0 %v2177
    %2210 = vmatprep.subr.mxu0 0.0
    %2211 = vmatpush1.msra.mxu0 %v2178
    %2212 = vmatprep.subr.mxu0 0.0
    %2213 = vmatpush1.msra.mxu0 %v2179
    %2214 = vmatprep.subr.mxu0 0.0
    %2215 = vmatpush1.msra.mxu0 %v2180
    %2216 = vmatprep.subr.mxu0 0.0
    %2217 = vmatpush1.msra.mxu0 %v2181
    %2218 = vmatprep.subr.mxu0 0.0
    %2219 = vmatpush1.msra.mxu0 %v2182
    %2220 = vmatprep.subr.mxu0 0.0
    %2221 = vmatpush1.msra.mxu0 0.0
    %2222 = vmatprep.subr.mxu0 0.0
    %2223 = vmatpush1.msra.mxu0 0.0
    %2224 = vmatprep.subr.mxu0 0.0
    %2225 = vmatpush1.msra.mxu0 0.0
    %2226 = vmatprep.subr.mxu0 0.0
    %2227 = vmatpush1.msra.mxu0 0.0
    %2228 = vmatprep.subr.mxu0 0.0
    %2229 = vmatpush1.msra.mxu0 0.0
    %2230 = vmatprep.subr.mxu0 0.0
    %2231 = vmatpush1.msra.mxu0 0.0
    %2232 = vmatprep.subr.mxu0 0.0
    %2233 = vmatpush1.msra.mxu0 0.0
    %2234 = vmatprep.subr.mxu0 0.0
    %2235 = vmatpush1.msra.mxu0 0.0
    %2236 = vmatprep.subr.mxu0 0.0
    %2237 = vmatpush1.msra.mxu0 0.0
    %2238 = vmatprep.subr.mxu0 0.0
    %2239 = vmatpush1.msra.mxu0 0.0
    %2240 = vmatprep.subr.mxu0 0.0
    %2241 = vmatpush1.msra.mxu0 0.0
    %2242 = vmatprep.subr.mxu0 0.0
    %2243 = vmatpush1.msra.mxu0 0.0
    %2244 = vmatprep.subr.mxu0 0.0
    %2245 = vmatpush1.msra.mxu0 0.0
    %2246 = vmatprep.subr.mxu0 0.0
    %2247 = vmatpush1.msra.mxu0 0.0
    %2248 = vmatprep.subr.mxu0 0.0
    %2249 = vmatpush1.msra.mxu0 0.0
    %2250 = vmatprep.subr.mxu0 0.0
    %2251 = vmatpush1.msra.mxu0 0.0
    %2252 = vmatprep.mubr.f32.mxu0 0.0
    %2253 = vmatmul.mubr.f32.gmra.mrb[0].mxu0 %v2165
    %v2254 = vpop.f32.mrb[0].mxu0
    %v2255 = vadd.f32 %v2187, %v2254
    %v2256 = vpop.f32.mrb[0].mxu0
    %2257 = vmatprep.mubr.f32.mxu0 0.0
    %2258 = vmatmul.mubr.f32.gmra.mrb[0].mxu0 %v2166
    %v2259 = vpop.f32.mrb[0].mxu0
    %v2260 = vadd.f32 %v2187, %v2259
    %v2261 = vpop.f32.mrb[0].mxu0
    %2262 = vdwg.mxu0
    %v2263 = vadd.f32 %v2057, %v2255
    %v2264 = vadd.f32 %v2058, %v2260
    %v2265 = vld [vmem:[%s2 + $0x25] sm:$0x1]
    %v2266 = vld [vmem:[%s2 + $0x26] sm:$0x1]
    %v2267 = vsel %vm327, %v2263, 0.0
    %2268 = vadd.xlane.f32.xlu0 %v2267
    %v2269 = vpop.xlane.xlu0 %2268
    %v2270 = vsel %vm327, %v2264, 0.0
    %2271 = vadd.xlane.f32.xlu0 %v2270
    %v2272 = vpop.xlane.xlu0 %2271
    %v2273 = vmul.f32 %v2269, %v2026
    %v2274 = vmul.f32 %v2272, %v2026
    %v2275 = vsub.f32 %v2263, %v2273
    %v2276 = vsub.f32 %v2264, %v2274
    %v2277 = vmul.f32 %v2275, %v2275
    %v2278 = vmul.f32 %v2276, %v2276
    %v2279 = vsel %vm327, %v2277, 0.0
    %2280 = vadd.xlane.f32.xlu0 %v2279
    %v2281 = vpop.xlane.xlu0 %2280
    %v2282 = vsel %vm327, %v2278, 0.0
    %2283 = vadd.xlane.f32.xlu0 %v2282
    %v2284 = vpop.xlane.xlu0 %2283
    %v2285 = vmul.f32 %v2281, %v2026
    %v2286 = vmul.f32 %v2284, %v2026
    %v2287 = vadd.f32 %v2285, 1e-05
    %v2288 = vadd.f32 %v2286, 1e-05
    %v2289 = vrsqrt.pop %v2287
    %v2290 = vrsqrt.pop %v2288
    %v2291 = vmul.f32 %v2275, %v2289
    %v2292 = vmul.f32 %v2276, %v2290
    %v2293 = vlaneseq
    %v2294 = vshrl.u32 %v2293, 7
    %v2295 = vsub.s32 0, %v2294
    %v2296 = vrot.slane %v2265, %v2295
    %v2297 = vmul.f32 %v2291, %v2296
    %v2298 = vmul.f32 %v2292, %v2296
    %v2299 = vlaneseq
    %v2300 = vshrl.u32 %v2299, 7
    %v2301 = vsub.s32 0, %v2300
    %v2302 = vrot.slane %v2266, %v2301
    %v2303 = vadd.f32 %v2297, %v2302
    %v2304 = vadd.f32 %v2298, %v2302
    %s2305 = scalar_lea.vmem %s3, 128
    %v2306 = vld [vmem:[%s2305] sm:$0xff]
    %v2307 = vld [vmem:[%s2305 + $0x8] sm:$0xff]
    %v2308 = vld [vmem:[%s2305 + $0x10] sm:$0xff]
    %v2309 = vld [vmem:[%s2305 + $0x18] sm:$0xff]
    %s2310 = scalar_lea.vmem %s3, 160
    %v2311 = vld [vmem:[%s2310] sm:$0xff]
    %v2312 = vld [vmem:[%s2310 + $0x8] sm:$0xff]
    %v2313 = vld [vmem:[%s2310 + $0x10] sm:$0xff]
    %v2314 = vld [vmem:[%s2310 + $0x18] sm:$0xff]
    %s2315 = scalar_lea.vmem %s3, 192
    %v2316 = vld [vmem:[%s2315] sm:$0xff]
    %v2317 = vld [vmem:[%s2315 + $0x8] sm:$0xff]
    %v2318 = vld [vmem:[%s2315 + $0x10] sm:$0xff]
    %v2319 = vld [vmem:[%s2315 + $0x18] sm:$0xff]
    %s2320 = scalar_lea.vmem %s3, 224
    %v2321 = vld [vmem:[%s2320] sm:$0xff]
    %v2322 = vld [vmem:[%s2320 + $0x8] sm:$0xff]
    %v2323 = vld [vmem:[%s2320 + $0x10] sm:$0xff]
    %v2324 = vld [vmem:[%s2320 + $0x18] sm:$0xff]
    %v2325 = vld [vmem:[%s2 + $0x27] sm:$0x1]
    %v2326 = vlaneseq
    %v2327 = vshrl.u32 %v2326, 7
    %v2328 = vsub.s32 0, %v2327
    %v2329 = vrot.slane %v2325, %v2328
    %v2331 = vsel %vm327, %v2303, 0
    %v2334 = vsel %vm327, %v2304, 0
    %2336 = vmatprep.subr.mxu0 0.0
    %2337 = vmatpush1.msra.mxu0 %v2306
    %2338 = vmatprep.subr.mxu0 0.0
    %2339 = vmatpush1.msra.mxu0 %v2307
    %2340 = vmatprep.subr.mxu0 0.0
    %2341 = vmatpush1.msra.mxu0 %v2308
    %2342 = vmatprep.subr.mxu0 0.0
    %2343 = vmatpush1.msra.mxu0 %v2309
    %2344 = vmatprep.subr.mxu0 0.0
    %2345 = vmatpush1.msra.mxu0 0.0
    %2346 = vmatprep.subr.mxu0 0.0
    %2347 = vmatpush1.msra.mxu0 0.0
    %2348 = vmatprep.subr.mxu0 0.0
    %2349 = vmatpush1.msra.mxu0 0.0
    %2350 = vmatprep.subr.mxu0 0.0
    %2351 = vmatpush1.msra.mxu0 0.0
    %2352 = vmatprep.subr.mxu0 0.0
    %2353 = vmatpush1.msra.mxu0 0.0
    %2354 = vmatprep.subr.mxu0 0.0
    %2355 = vmatpush1.msra.mxu0 0.0
    %2356 = vmatprep.subr.mxu0 0.0
    %2357 = vmatpush1.msra.mxu0 0.0
    %2358 = vmatprep.subr.mxu0 0.0
    %2359 = vmatpush1.msra.mxu0 0.0
    %2360 = vmatprep.subr.mxu0 0.0
    %2361 = vmatpush1.msra.mxu0 0.0
    %2362 = vmatprep.subr.mxu0 0.0
    %2363 = vmatpush1.msra.mxu0 0.0
    %2364 = vmatprep.subr.mxu0 0.0
    %2365 = vmatpush1.msra.mxu0 0.0
    %2366 = vmatprep.subr.mxu0 0.0
    %2367 = vmatpush1.msra.mxu0 0.0
    %2368 = vmatprep.subr.mxu0 0.0
    %2369 = vmatpush1.msra.mxu0 0.0
    %2370 = vmatprep.subr.mxu0 0.0
    %2371 = vmatpush1.msra.mxu0 0.0
    %2372 = vmatprep.subr.mxu0 0.0
    %2373 = vmatpush1.msra.mxu0 0.0
    %2374 = vmatprep.subr.mxu0 0.0
    %2375 = vmatpush1.msra.mxu0 0.0
    %2376 = vmatprep.subr.mxu0 0.0
    %2377 = vmatpush1.msra.mxu0 0.0
    %2378 = vmatprep.subr.mxu0 0.0
    %2379 = vmatpush1.msra.mxu0 0.0
    %2380 = vmatprep.subr.mxu0 0.0
    %2381 = vmatpush1.msra.mxu0 0.0
    %2382 = vmatprep.subr.mxu0 0.0
    %2383 = vmatpush1.msra.mxu0 0.0
    %2384 = vmatprep.subr.mxu0 0.0
    %2385 = vmatpush1.msra.mxu0 0.0
    %2386 = vmatprep.subr.mxu0 0.0
    %2387 = vmatpush1.msra.mxu0 0.0
    %2388 = vmatprep.subr.mxu0 0.0
    %2389 = vmatpush1.msra.mxu0 0.0
    %2390 = vmatprep.subr.mxu0 0.0
    %2391 = vmatpush1.msra.mxu0 0.0
    %2392 = vmatprep.subr.mxu0 0.0
    %2393 = vmatpush1.msra.mxu0 0.0
    %2394 = vmatprep.subr.mxu0 0.0
    %2395 = vmatpush1.msra.mxu0 0.0
    %2396 = vmatprep.subr.mxu0 0.0
    %2397 = vmatpush1.msra.mxu0 0.0
    %2398 = vmatprep.subr.mxu0 0.0
    %2399 = vmatpush1.msra.mxu0 0.0
    %2400 = vmatprep.mubr.f32.mxu0 0.0
    %2401 = vmatmul.mubr.f32.gmra.mrb[0].mxu0 %v2331
    %v2402 = vpop.f32.mrb[0].mxu0
    %v2403 = vadd.f32 %v2329, %v2402
    %v2404 = vpop.f32.mrb[0].mxu0
    %2405 = vmatprep.mubr.f32.mxu0 0.0
    %2406 = vmatmul.mubr.f32.gmra.mrb[0].mxu0 %v2334
    %v2407 = vpop.f32.mrb[0].mxu0
    %v2408 = vadd.f32 %v2329, %v2407
    %v2409 = vpop.f32.mrb[0].mxu0
    %2410 = vdwg.mxu0
    %v2411 = vld [vmem:[%s2 + $0x28] sm:$0x1]
    %v2412 = vlaneseq
    %v2413 = vshrl.u32 %v2412, 7
    %v2414 = vsub.s32 0, %v2413
    %v2415 = vrot.slane %v2411, %v2414
    %2416 = vmatprep.subr.mxu0 0.0
    %2417 = vmatpush1.msra.mxu0 %v2311
    %2418 = vmatprep.subr.mxu0 0.0
    %2419 = vmatpush1.msra.mxu0 %v2312
    %2420 = vmatprep.subr.mxu0 0.0
    %2421 = vmatpush1.msra.mxu0 %v2313
    %2422 = vmatprep.subr.mxu0 0.0
    %2423 = vmatpush1.msra.mxu0 %v2314
    %2424 = vmatprep.subr.mxu0 0.0
    %2425 = vmatpush1.msra.mxu0 0.0
    %2426 = vmatprep.subr.mxu0 0.0
    %2427 = vmatpush1.msra.mxu0 0.0
    %2428 = vmatprep.subr.mxu0 0.0
    %2429 = vmatpush1.msra.mxu0 0.0
    %2430 = vmatprep.subr.mxu0 0.0
    %2431 = vmatpush1.msra.mxu0 0.0
    %2432 = vmatprep.subr.mxu0 0.0
    %2433 = vmatpush1.msra.mxu0 0.0
    %2434 = vmatprep.subr.mxu0 0.0
    %2435 = vmatpush1.msra.mxu0 0.0
    %2436 = vmatprep.subr.mxu0 0.0
    %2437 = vmatpush1.msra.mxu0 0.0
    %2438 = vmatprep.subr.mxu0 0.0
    %2439 = vmatpush1.msra.mxu0 0.0
    %2440 = vmatprep.subr.mxu0 0.0
    %2441 = vmatpush1.msra.mxu0 0.0
    %2442 = vmatprep.subr.mxu0 0.0
    %2443 = vmatpush1.msra.mxu0 0.0
    %2444 = vmatprep.subr.mxu0 0.0
    %2445 = vmatpush1.msra.mxu0 0.0
    %2446 = vmatprep.subr.mxu0 0.0
    %2447 = vmatpush1.msra.mxu0 0.0
    %2448 = vmatprep.subr.mxu0 0.0
    %2449 = vmatpush1.msra.mxu0 0.0
    %2450 = vmatprep.subr.mxu0 0.0
    %2451 = vmatpush1.msra.mxu0 0.0
    %2452 = vmatprep.subr.mxu0 0.0
    %2453 = vmatpush1.msra.mxu0 0.0
    %2454 = vmatprep.subr.mxu0 0.0
    %2455 = vmatpush1.msra.mxu0 0.0
    %2456 = vmatprep.subr.mxu0 0.0
    %2457 = vmatpush1.msra.mxu0 0.0
    %2458 = vmatprep.subr.mxu0 0.0
    %2459 = vmatpush1.msra.mxu0 0.0
    %2460 = vmatprep.subr.mxu0 0.0
    %2461 = vmatpush1.msra.mxu0 0.0
    %2462 = vmatprep.subr.mxu0 0.0
    %2463 = vmatpush1.msra.mxu0 0.0
    %2464 = vmatprep.subr.mxu0 0.0
    %2465 = vmatpush1.msra.mxu0 0.0
    %2466 = vmatprep.subr.mxu0 0.0
    %2467 = vmatpush1.msra.mxu0 0.0
    %2468 = vmatprep.subr.mxu0 0.0
    %2469 = vmatpush1.msra.mxu0 0.0
    %2470 = vmatprep.subr.mxu0 0.0
    %2471 = vmatpush1.msra.mxu0 0.0
    %2472 = vmatprep.subr.mxu0 0.0
    %2473 = vmatpush1.msra.mxu0 0.0
    %2474 = vmatprep.subr.mxu0 0.0
    %2475 = vmatpush1.msra.mxu0 0.0
    %2476 = vmatprep.subr.mxu0 0.0
    %2477 = vmatpush1.msra.mxu0 0.0
    %2478 = vmatprep.subr.mxu0 0.0
    %2479 = vmatpush1.msra.mxu0 0.0
    %2480 = vmatprep.mubr.f32.mxu0 0.0
    %2481 = vmatmul.mubr.f32.gmra.mrb[0].mxu0 %v2331
    %v2482 = vpop.f32.mrb[0].mxu0
    %v2483 = vadd.f32 %v2415, %v2482
    %v2484 = vpop.f32.mrb[0].mxu0
    %2485 = vmatprep.mubr.f32.mxu0 0.0
    %2486 = vmatmul.mubr.f32.gmra.mrb[0].mxu0 %v2334
    %v2487 = vpop.f32.mrb[0].mxu0
    %v2488 = vadd.f32 %v2415, %v2487
    %v2489 = vpop.f32.mrb[0].mxu0
    %2490 = vdwg.mxu0
    %v2491 = vld [vmem:[%s2 + $0x29] sm:$0x1]
    %v2492 = vlaneseq
    %v2493 = vshrl.u32 %v2492, 7
    %v2494 = vsub.s32 0, %v2493
    %v2495 = vrot.slane %v2491, %v2494
    %2496 = vmatprep.subr.mxu0 0.0
    %2497 = vmatpush1.msra.mxu0 %v2316
    %2498 = vmatprep.subr.mxu0 0.0
    %2499 = vmatpush1.msra.mxu0 %v2317
    %2500 = vmatprep.subr.mxu0 0.0
    %2501 = vmatpush1.msra.mxu0 %v2318
    %2502 = vmatprep.subr.mxu0 0.0
    %2503 = vmatpush1.msra.mxu0 %v2319
    %2504 = vmatprep.subr.mxu0 0.0
    %2505 = vmatpush1.msra.mxu0 0.0
    %2506 = vmatprep.subr.mxu0 0.0
    %2507 = vmatpush1.msra.mxu0 0.0
    %2508 = vmatprep.subr.mxu0 0.0
    %2509 = vmatpush1.msra.mxu0 0.0
    %2510 = vmatprep.subr.mxu0 0.0
    %2511 = vmatpush1.msra.mxu0 0.0
    %2512 = vmatprep.subr.mxu0 0.0
    %2513 = vmatpush1.msra.mxu0 0.0
    %2514 = vmatprep.subr.mxu0 0.0
    %2515 = vmatpush1.msra.mxu0 0.0
    %2516 = vmatprep.subr.mxu0 0.0
    %2517 = vmatpush1.msra.mxu0 0.0
    %2518 = vmatprep.subr.mxu0 0.0
    %2519 = vmatpush1.msra.mxu0 0.0
    %2520 = vmatprep.subr.mxu0 0.0
    %2521 = vmatpush1.msra.mxu0 0.0
    %2522 = vmatprep.subr.mxu0 0.0
    %2523 = vmatpush1.msra.mxu0 0.0
    %2524 = vmatprep.subr.mxu0 0.0
    %2525 = vmatpush1.msra.mxu0 0.0
    %2526 = vmatprep.subr.mxu0 0.0
    %2527 = vmatpush1.msra.mxu0 0.0
    %2528 = vmatprep.subr.mxu0 0.0
    %2529 = vmatpush1.msra.mxu0 0.0
    %2530 = vmatprep.subr.mxu0 0.0
    %2531 = vmatpush1.msra.mxu0 0.0
    %2532 = vmatprep.subr.mxu0 0.0
    %2533 = vmatpush1.msra.mxu0 0.0
    %2534 = vmatprep.subr.mxu0 0.0
    %2535 = vmatpush1.msra.mxu0 0.0
    %2536 = vmatprep.subr.mxu0 0.0
    %2537 = vmatpush1.msra.mxu0 0.0
    %2538 = vmatprep.subr.mxu0 0.0
    %2539 = vmatpush1.msra.mxu0 0.0
    %2540 = vmatprep.subr.mxu0 0.0
    %2541 = vmatpush1.msra.mxu0 0.0
    %2542 = vmatprep.subr.mxu0 0.0
    %2543 = vmatpush1.msra.mxu0 0.0
    %2544 = vmatprep.subr.mxu0 0.0
    %2545 = vmatpush1.msra.mxu0 0.0
    %2546 = vmatprep.subr.mxu0 0.0
    %2547 = vmatpush1.msra.mxu0 0.0
    %2548 = vmatprep.subr.mxu0 0.0
    %2549 = vmatpush1.msra.mxu0 0.0
    %2550 = vmatprep.subr.mxu0 0.0
    %2551 = vmatpush1.msra.mxu0 0.0
    %2552 = vmatprep.subr.mxu0 0.0
    %2553 = vmatpush1.msra.mxu0 0.0
    %2554 = vmatprep.subr.mxu0 0.0
    %2555 = vmatpush1.msra.mxu0 0.0
    %2556 = vmatprep.subr.mxu0 0.0
    %2557 = vmatpush1.msra.mxu0 0.0
    %2558 = vmatprep.subr.mxu0 0.0
    %2559 = vmatpush1.msra.mxu0 0.0
    %2560 = vmatprep.mubr.f32.mxu0 0.0
    %2561 = vmatmul.mubr.f32.gmra.mrb[0].mxu0 %v2331
    %v2562 = vpop.f32.mrb[0].mxu0
    %v2563 = vadd.f32 %v2495, %v2562
    %v2564 = vpop.f32.mrb[0].mxu0
    %2565 = vmatprep.mubr.f32.mxu0 0.0
    %2566 = vmatmul.mubr.f32.gmra.mrb[0].mxu0 %v2334
    %v2567 = vpop.f32.mrb[0].mxu0
    %v2568 = vadd.f32 %v2495, %v2567
    %v2569 = vpop.f32.mrb[0].mxu0
    %2570 = vdwg.mxu0
    %2573 = vrot.lane.b32.xlu0 %v2403, 120
    %v2574 = vpop.permute.xlu0 %2573
    %2575 = vrot.lane.b32.xlu0 %v2408, 120
    %v2576 = vpop.permute.xlu0 %2575
    %2577 = vrot.lane.b32.xlu0 %v2403, 112
    %v2578 = vpop.permute.xlu0 %2577
    %2579 = vrot.lane.b32.xlu0 %v2408, 112
    %v2580 = vpop.permute.xlu0 %2579
    %2581 = vrot.lane.b32.xlu0 %v2403, 104
    %v2582 = vpop.permute.xlu0 %2581
    %2583 = vrot.lane.b32.xlu0 %v2408, 104
    %v2584 = vpop.permute.xlu0 %2583
    %2587 = vrot.lane.b32.xlu0 %v2483, 120
    %v2588 = vpop.permute.xlu0 %2587
    %2589 = vrot.lane.b32.xlu0 %v2488, 120
    %v2590 = vpop.permute.xlu0 %2589
    %2591 = vrot.lane.b32.xlu0 %v2483, 112
    %v2592 = vpop.permute.xlu0 %2591
    %2593 = vrot.lane.b32.xlu0 %v2488, 112
    %v2594 = vpop.permute.xlu0 %2593
    %2595 = vrot.lane.b32.xlu0 %v2483, 104
    %v2596 = vpop.permute.xlu0 %2595
    %2597 = vrot.lane.b32.xlu0 %v2488, 104
    %v2598 = vpop.permute.xlu0 %2597
    %2601 = vrot.lane.b32.xlu0 %v2563, 120
    %v2602 = vpop.permute.xlu0 %2601
    %2603 = vrot.lane.b32.xlu0 %v2568, 120
    %v2604 = vpop.permute.xlu0 %2603
    %2607 = vrot.lane.b32.xlu0 %v2563, 112
    %v2608 = vpop.permute.xlu0 %2607
    %2609 = vrot.lane.b32.xlu0 %v2568, 112
    %v2610 = vpop.permute.xlu0 %2609
    %2613 = vrot.lane.b32.xlu0 %v2563, 104
    %v2614 = vpop.permute.xlu0 %2613
    %2615 = vrot.lane.b32.xlu0 %v2568, 104
    %v2616 = vpop.permute.xlu0 %2615
    %v2619 = vsel %vm64, %v2403, 0
    %v2621 = vsel %vm64, %v2483, 0
    %2623 = vmatprep.subr.mxu0 0.0
    %2624 = vmatpush1.xpose.msra.mxu0 %v2621
    %2625 = vmatprep.subr.mxu0 0.0
    %2626 = vmatpush1.xpose.msra.mxu0 0.0
    %2627 = vmatprep.subr.mxu0 0.0
    %2628 = vmatpush1.xpose.msra.mxu0 0.0
    %2629 = vmatprep.subr.mxu0 0.0
    %2630 = vmatpush1.xpose.msra.mxu0 0.0
    %2631 = vmatprep.subr.mxu0 0.0
    %2632 = vmatpush1.xpose.msra.mxu0 0.0
    %2633 = vmatprep.subr.mxu0 0.0
    %2634 = vmatpush1.xpose.msra.mxu0 0.0
    %2635 = vmatprep.subr.mxu0 0.0
    %2636 = vmatpush1.xpose.msra.mxu0 0.0
    %2637 = vmatprep.subr.mxu0 0.0
    %2638 = vmatpush1.xpose.msra.mxu0 0.0
    %2639 = vmatprep.subr.mxu0 0.0
    %2640 = vmatpush1.xpose.msra.mxu0 0.0
    %2641 = vmatprep.subr.mxu0 0.0
    %2642 = vmatpush1.xpose.msra.mxu0 0.0
    %2643 = vmatprep.subr.mxu0 0.0
    %2644 = vmatpush1.xpose.msra.mxu0 0.0
    %2645 = vmatprep.subr.mxu0 0.0
    %2646 = vmatpush1.xpose.msra.mxu0 0.0
    %2647 = vmatprep.subr.mxu0 0.0
    %2648 = vmatpush1.xpose.msra.mxu0 0.0
    %2649 = vmatprep.subr.mxu0 0.0
    %2650 = vmatpush1.xpose.msra.mxu0 0.0
    %2651 = vmatprep.subr.mxu0 0.0
    %2652 = vmatpush1.xpose.msra.mxu0 0.0
    %2653 = vmatprep.subr.mxu0 0.0
    %2654 = vmatpush1.xpose.msra.mxu0 0.0
    %2655 = vmatprep.subr.mxu0 0.0
    %2656 = vmatpush1.xpose.msra.mxu0 0.0
    %2657 = vmatprep.subr.mxu0 0.0
    %2658 = vmatpush1.xpose.msra.mxu0 0.0
    %2659 = vmatprep.subr.mxu0 0.0
    %2660 = vmatpush1.xpose.msra.mxu0 0.0
    %2661 = vmatprep.subr.mxu0 0.0
    %2662 = vmatpush1.xpose.msra.mxu0 0.0
    %2663 = vmatprep.subr.mxu0 0.0
    %2664 = vmatpush1.xpose.msra.mxu0 0.0
    %2665 = vmatprep.subr.mxu0 0.0
    %2666 = vmatpush1.xpose.msra.mxu0 0.0
    %2667 = vmatprep.subr.mxu0 0.0
    %2668 = vmatpush1.xpose.msra.mxu0 0.0
    %2669 = vmatprep.subr.mxu0 0.0
    %2670 = vmatpush1.xpose.msra.mxu0 0.0
    %2671 = vmatprep.subr.mxu0 0.0
    %2672 = vmatpush1.xpose.msra.mxu0 0.0
    %2673 = vmatprep.subr.mxu0 0.0
    %2674 = vmatpush1.xpose.msra.mxu0 0.0
    %2675 = vmatprep.subr.mxu0 0.0
    %2676 = vmatpush1.xpose.msra.mxu0 0.0
    %2677 = vmatprep.subr.mxu0 0.0
    %2678 = vmatpush1.xpose.msra.mxu0 0.0
    %2679 = vmatprep.subr.mxu0 0.0
    %2680 = vmatpush1.xpose.msra.mxu0 0.0
    %2681 = vmatprep.subr.mxu0 0.0
    %2682 = vmatpush1.xpose.msra.mxu0 0.0
    %2683 = vmatprep.subr.mxu0 0.0
    %2684 = vmatpush1.xpose.msra.mxu0 0.0
    %2685 = vmatprep.subr.mxu0 0.0
    %2686 = vmatpush1.xpose.msra.mxu0 0.0
    %2687 = vmatprep.mubr.f32.mxu0 0.0
    %2688 = vmatmul.mubr.f32.gmra.mrb[0].mxu0 %v2619
    %v2689 = vpop.f32.mrb[0].mxu0
    %v2690 = vadd.f32 0.0, %v2689
    %v2691 = vpop.f32.mrb[0].mxu0
    %2692 = vdwg.mxu0
    %v2693 = vsel %vm64, %v2408, 0
    %v2695 = vsel %vm64, %v2488, 0
    %2697 = vmatprep.subr.mxu0 0.0
    %2698 = vmatpush1.xpose.msra.mxu0 %v2695
    %2699 = vmatprep.subr.mxu0 0.0
    %2700 = vmatpush1.xpose.msra.mxu0 0.0
    %2701 = vmatprep.subr.mxu0 0.0
    %2702 = vmatpush1.xpose.msra.mxu0 0.0
    %2703 = vmatprep.subr.mxu0 0.0
    %2704 = vmatpush1.xpose.msra.mxu0 0.0
    %2705 = vmatprep.subr.mxu0 0.0
    %2706 = vmatpush1.xpose.msra.mxu0 0.0
    %2707 = vmatprep.subr.mxu0 0.0
    %2708 = vmatpush1.xpose.msra.mxu0 0.0
    %2709 = vmatprep.subr.mxu0 0.0
    %2710 = vmatpush1.xpose.msra.mxu0 0.0
    %2711 = vmatprep.subr.mxu0 0.0
    %2712 = vmatpush1.xpose.msra.mxu0 0.0
    %2713 = vmatprep.subr.mxu0 0.0
    %2714 = vmatpush1.xpose.msra.mxu0 0.0
    %2715 = vmatprep.subr.mxu0 0.0
    %2716 = vmatpush1.xpose.msra.mxu0 0.0
    %2717 = vmatprep.subr.mxu0 0.0
    %2718 = vmatpush1.xpose.msra.mxu0 0.0
    %2719 = vmatprep.subr.mxu0 0.0
    %2720 = vmatpush1.xpose.msra.mxu0 0.0
    %2721 = vmatprep.subr.mxu0 0.0
    %2722 = vmatpush1.xpose.msra.mxu0 0.0
    %2723 = vmatprep.subr.mxu0 0.0
    %2724 = vmatpush1.xpose.msra.mxu0 0.0
    %2725 = vmatprep.subr.mxu0 0.0
    %2726 = vmatpush1.xpose.msra.mxu0 0.0
    %2727 = vmatprep.subr.mxu0 0.0
    %2728 = vmatpush1.xpose.msra.mxu0 0.0
    %2729 = vmatprep.subr.mxu0 0.0
    %2730 = vmatpush1.xpose.msra.mxu0 0.0
    %2731 = vmatprep.subr.mxu0 0.0
    %2732 = vmatpush1.xpose.msra.mxu0 0.0
    %2733 = vmatprep.subr.mxu0 0.0
    %2734 = vmatpush1.xpose.msra.mxu0 0.0
    %2735 = vmatprep.subr.mxu0 0.0
    %2736 = vmatpush1.xpose.msra.mxu0 0.0
    %2737 = vmatprep.subr.mxu0 0.0
    %2738 = vmatpush1.xpose.msra.mxu0 0.0
    %2739 = vmatprep.subr.mxu0 0.0
    %2740 = vmatpush1.xpose.msra.mxu0 0.0
    %2741 = vmatprep.subr.mxu0 0.0
    %2742 = vmatpush1.xpose.msra.mxu0 0.0
    %2743 = vmatprep.subr.mxu0 0.0
    %2744 = vmatpush1.xpose.msra.mxu0 0.0
    %2745 = vmatprep.subr.mxu0 0.0
    %2746 = vmatpush1.xpose.msra.mxu0 0.0
    %2747 = vmatprep.subr.mxu0 0.0
    %2748 = vmatpush1.xpose.msra.mxu0 0.0
    %2749 = vmatprep.subr.mxu0 0.0
    %2750 = vmatpush1.xpose.msra.mxu0 0.0
    %2751 = vmatprep.subr.mxu0 0.0
    %2752 = vmatpush1.xpose.msra.mxu0 0.0
    %2753 = vmatprep.subr.mxu0 0.0
    %2754 = vmatpush1.xpose.msra.mxu0 0.0
    %2755 = vmatprep.subr.mxu0 0.0
    %2756 = vmatpush1.xpose.msra.mxu0 0.0
    %2757 = vmatprep.subr.mxu0 0.0
    %2758 = vmatpush1.xpose.msra.mxu0 0.0
    %2759 = vmatprep.subr.mxu0 0.0
    %2760 = vmatpush1.xpose.msra.mxu0 0.0
    %2761 = vmatprep.mubr.f32.mxu0 0.0
    %2762 = vmatmul.mubr.f32.gmra.mrb[0].mxu0 %v2693
    %v2763 = vpop.f32.mrb[0].mxu0
    %v2764 = vadd.f32 0.0, %v2763
    %v2765 = vpop.f32.mrb[0].mxu0
    %2766 = vdwg.mxu0
    %v2767 = vsel %vm64, %v2574, 0
    %v2769 = vsel %vm64, %v2588, 0
    %2771 = vmatprep.subr.mxu0 0.0
    %2772 = vmatpush1.xpose.msra.mxu0 %v2769
    %2773 = vmatprep.subr.mxu0 0.0
    %2774 = vmatpush1.xpose.msra.mxu0 0.0
    %2775 = vmatprep.subr.mxu0 0.0
    %2776 = vmatpush1.xpose.msra.mxu0 0.0
    %2777 = vmatprep.subr.mxu0 0.0
    %2778 = vmatpush1.xpose.msra.mxu0 0.0
    %2779 = vmatprep.subr.mxu0 0.0
    %2780 = vmatpush1.xpose.msra.mxu0 0.0
    %2781 = vmatprep.subr.mxu0 0.0
    %2782 = vmatpush1.xpose.msra.mxu0 0.0
    %2783 = vmatprep.subr.mxu0 0.0
    %2784 = vmatpush1.xpose.msra.mxu0 0.0
    %2785 = vmatprep.subr.mxu0 0.0
    %2786 = vmatpush1.xpose.msra.mxu0 0.0
    %2787 = vmatprep.subr.mxu0 0.0
    %2788 = vmatpush1.xpose.msra.mxu0 0.0
    %2789 = vmatprep.subr.mxu0 0.0
    %2790 = vmatpush1.xpose.msra.mxu0 0.0
    %2791 = vmatprep.subr.mxu0 0.0
    %2792 = vmatpush1.xpose.msra.mxu0 0.0
    %2793 = vmatprep.subr.mxu0 0.0
    %2794 = vmatpush1.xpose.msra.mxu0 0.0
    %2795 = vmatprep.subr.mxu0 0.0
    %2796 = vmatpush1.xpose.msra.mxu0 0.0
    %2797 = vmatprep.subr.mxu0 0.0
    %2798 = vmatpush1.xpose.msra.mxu0 0.0
    %2799 = vmatprep.subr.mxu0 0.0
    %2800 = vmatpush1.xpose.msra.mxu0 0.0
    %2801 = vmatprep.subr.mxu0 0.0
    %2802 = vmatpush1.xpose.msra.mxu0 0.0
    %2803 = vmatprep.subr.mxu0 0.0
    %2804 = vmatpush1.xpose.msra.mxu0 0.0
    %2805 = vmatprep.subr.mxu0 0.0
    %2806 = vmatpush1.xpose.msra.mxu0 0.0
    %2807 = vmatprep.subr.mxu0 0.0
    %2808 = vmatpush1.xpose.msra.mxu0 0.0
    %2809 = vmatprep.subr.mxu0 0.0
    %2810 = vmatpush1.xpose.msra.mxu0 0.0
    %2811 = vmatprep.subr.mxu0 0.0
    %2812 = vmatpush1.xpose.msra.mxu0 0.0
    %2813 = vmatprep.subr.mxu0 0.0
    %2814 = vmatpush1.xpose.msra.mxu0 0.0
    %2815 = vmatprep.subr.mxu0 0.0
    %2816 = vmatpush1.xpose.msra.mxu0 0.0
    %2817 = vmatprep.subr.mxu0 0.0
    %2818 = vmatpush1.xpose.msra.mxu0 0.0
    %2819 = vmatprep.subr.mxu0 0.0
    %2820 = vmatpush1.xpose.msra.mxu0 0.0
    %2821 = vmatprep.subr.mxu0 0.0
    %2822 = vmatpush1.xpose.msra.mxu0 0.0
    %2823 = vmatprep.subr.mxu0 0.0
    %2824 = vmatpush1.xpose.msra.mxu0 0.0
    %2825 = vmatprep.subr.mxu0 0.0
    %2826 = vmatpush1.xpose.msra.mxu0 0.0
    %2827 = vmatprep.subr.mxu0 0.0
    %2828 = vmatpush1.xpose.msra.mxu0 0.0
    %2829 = vmatprep.subr.mxu0 0.0
    %2830 = vmatpush1.xpose.msra.mxu0 0.0
    %2831 = vmatprep.subr.mxu0 0.0
    %2832 = vmatpush1.xpose.msra.mxu0 0.0
    %2833 = vmatprep.subr.mxu0 0.0
    %2834 = vmatpush1.xpose.msra.mxu0 0.0
    %2835 = vmatprep.mubr.f32.mxu0 0.0
    %2836 = vmatmul.mubr.f32.gmra.mrb[0].mxu0 %v2767
    %v2837 = vpop.f32.mrb[0].mxu0
    %v2838 = vadd.f32 0.0, %v2837
    %v2839 = vpop.f32.mrb[0].mxu0
    %2840 = vdwg.mxu0
    %v2841 = vsel %vm64, %v2576, 0
    %v2843 = vsel %vm64, %v2590, 0
    %2845 = vmatprep.subr.mxu0 0.0
    %2846 = vmatpush1.xpose.msra.mxu0 %v2843
    %2847 = vmatprep.subr.mxu0 0.0
    %2848 = vmatpush1.xpose.msra.mxu0 0.0
    %2849 = vmatprep.subr.mxu0 0.0
    %2850 = vmatpush1.xpose.msra.mxu0 0.0
    %2851 = vmatprep.subr.mxu0 0.0
    %2852 = vmatpush1.xpose.msra.mxu0 0.0
    %2853 = vmatprep.subr.mxu0 0.0
    %2854 = vmatpush1.xpose.msra.mxu0 0.0
    %2855 = vmatprep.subr.mxu0 0.0
    %2856 = vmatpush1.xpose.msra.mxu0 0.0
    %2857 = vmatprep.subr.mxu0 0.0
    %2858 = vmatpush1.xpose.msra.mxu0 0.0
    %2859 = vmatprep.subr.mxu0 0.0
    %2860 = vmatpush1.xpose.msra.mxu0 0.0
    %2861 = vmatprep.subr.mxu0 0.0
    %2862 = vmatpush1.xpose.msra.mxu0 0.0
    %2863 = vmatprep.subr.mxu0 0.0
    %2864 = vmatpush1.xpose.msra.mxu0 0.0
    %2865 = vmatprep.subr.mxu0 0.0
    %2866 = vmatpush1.xpose.msra.mxu0 0.0
    %2867 = vmatprep.subr.mxu0 0.0
    %2868 = vmatpush1.xpose.msra.mxu0 0.0
    %2869 = vmatprep.subr.mxu0 0.0
    %2870 = vmatpush1.xpose.msra.mxu0 0.0
    %2871 = vmatprep.subr.mxu0 0.0
    %2872 = vmatpush1.xpose.msra.mxu0 0.0
    %2873 = vmatprep.subr.mxu0 0.0
    %2874 = vmatpush1.xpose.msra.mxu0 0.0
    %2875 = vmatprep.subr.mxu0 0.0
    %2876 = vmatpush1.xpose.msra.mxu0 0.0
    %2877 = vmatprep.subr.mxu0 0.0
    %2878 = vmatpush1.xpose.msra.mxu0 0.0
    %2879 = vmatprep.subr.mxu0 0.0
    %2880 = vmatpush1.xpose.msra.mxu0 0.0
    %2881 = vmatprep.subr.mxu0 0.0
    %2882 = vmatpush1.xpose.msra.mxu0 0.0
    %2883 = vmatprep.subr.mxu0 0.0
    %2884 = vmatpush1.xpose.msra.mxu0 0.0
    %2885 = vmatprep.subr.mxu0 0.0
    %2886 = vmatpush1.xpose.msra.mxu0 0.0
    %2887 = vmatprep.subr.mxu0 0.0
    %2888 = vmatpush1.xpose.msra.mxu0 0.0
    %2889 = vmatprep.subr.mxu0 0.0
    %2890 = vmatpush1.xpose.msra.mxu0 0.0
    %2891 = vmatprep.subr.mxu0 0.0
    %2892 = vmatpush1.xpose.msra.mxu0 0.0
    %2893 = vmatprep.subr.mxu0 0.0
    %2894 = vmatpush1.xpose.msra.mxu0 0.0
    %2895 = vmatprep.subr.mxu0 0.0
    %2896 = vmatpush1.xpose.msra.mxu0 0.0
    %2897 = vmatprep.subr.mxu0 0.0
    %2898 = vmatpush1.xpose.msra.mxu0 0.0
    %2899 = vmatprep.subr.mxu0 0.0
    %2900 = vmatpush1.xpose.msra.mxu0 0.0
    %2901 = vmatprep.subr.mxu0 0.0
    %2902 = vmatpush1.xpose.msra.mxu0 0.0
    %2903 = vmatprep.subr.mxu0 0.0
    %2904 = vmatpush1.xpose.msra.mxu0 0.0
    %2905 = vmatprep.subr.mxu0 0.0
    %2906 = vmatpush1.xpose.msra.mxu0 0.0
    %2907 = vmatprep.subr.mxu0 0.0
    %2908 = vmatpush1.xpose.msra.mxu0 0.0
    %2909 = vmatprep.mubr.f32.mxu0 0.0
    %2910 = vmatmul.mubr.f32.gmra.mrb[0].mxu0 %v2841
    %v2911 = vpop.f32.mrb[0].mxu0
    %v2912 = vadd.f32 0.0, %v2911
    %v2913 = vpop.f32.mrb[0].mxu0
    %2914 = vdwg.mxu0
    %v2915 = vsel %vm64, %v2578, 0
    %v2917 = vsel %vm64, %v2592, 0
    %2919 = vmatprep.subr.mxu0 0.0
    %2920 = vmatpush1.xpose.msra.mxu0 %v2917
    %2921 = vmatprep.subr.mxu0 0.0
    %2922 = vmatpush1.xpose.msra.mxu0 0.0
    %2923 = vmatprep.subr.mxu0 0.0
    %2924 = vmatpush1.xpose.msra.mxu0 0.0
    %2925 = vmatprep.subr.mxu0 0.0
    %2926 = vmatpush1.xpose.msra.mxu0 0.0
    %2927 = vmatprep.subr.mxu0 0.0
    %2928 = vmatpush1.xpose.msra.mxu0 0.0
    %2929 = vmatprep.subr.mxu0 0.0
    %2930 = vmatpush1.xpose.msra.mxu0 0.0
    %2931 = vmatprep.subr.mxu0 0.0
    %2932 = vmatpush1.xpose.msra.mxu0 0.0
    %2933 = vmatprep.subr.mxu0 0.0
    %2934 = vmatpush1.xpose.msra.mxu0 0.0
    %2935 = vmatprep.subr.mxu0 0.0
    %2936 = vmatpush1.xpose.msra.mxu0 0.0
    %2937 = vmatprep.subr.mxu0 0.0
    %2938 = vmatpush1.xpose.msra.mxu0 0.0
    %2939 = vmatprep.subr.mxu0 0.0
    %2940 = vmatpush1.xpose.msra.mxu0 0.0
    %2941 = vmatprep.subr.mxu0 0.0
    %2942 = vmatpush1.xpose.msra.mxu0 0.0
    %2943 = vmatprep.subr.mxu0 0.0
    %2944 = vmatpush1.xpose.msra.mxu0 0.0
    %2945 = vmatprep.subr.mxu0 0.0
    %2946 = vmatpush1.xpose.msra.mxu0 0.0
    %2947 = vmatprep.subr.mxu0 0.0
    %2948 = vmatpush1.xpose.msra.mxu0 0.0
    %2949 = vmatprep.subr.mxu0 0.0
    %2950 = vmatpush1.xpose.msra.mxu0 0.0
    %2951 = vmatprep.subr.mxu0 0.0
    %2952 = vmatpush1.xpose.msra.mxu0 0.0
    %2953 = vmatprep.subr.mxu0 0.0
    %2954 = vmatpush1.xpose.msra.mxu0 0.0
    %2955 = vmatprep.subr.mxu0 0.0
    %2956 = vmatpush1.xpose.msra.mxu0 0.0
    %2957 = vmatprep.subr.mxu0 0.0
    %2958 = vmatpush1.xpose.msra.mxu0 0.0
    %2959 = vmatprep.subr.mxu0 0.0
    %2960 = vmatpush1.xpose.msra.mxu0 0.0
    %2961 = vmatprep.subr.mxu0 0.0
    %2962 = vmatpush1.xpose.msra.mxu0 0.0
    %2963 = vmatprep.subr.mxu0 0.0
    %2964 = vmatpush1.xpose.msra.mxu0 0.0
    %2965 = vmatprep.subr.mxu0 0.0
    %2966 = vmatpush1.xpose.msra.mxu0 0.0
    %2967 = vmatprep.subr.mxu0 0.0
    %2968 = vmatpush1.xpose.msra.mxu0 0.0
    %2969 = vmatprep.subr.mxu0 0.0
    %2970 = vmatpush1.xpose.msra.mxu0 0.0
    %2971 = vmatprep.subr.mxu0 0.0
    %2972 = vmatpush1.xpose.msra.mxu0 0.0
    %2973 = vmatprep.subr.mxu0 0.0
    %2974 = vmatpush1.xpose.msra.mxu0 0.0
    %2975 = vmatprep.subr.mxu0 0.0
    %2976 = vmatpush1.xpose.msra.mxu0 0.0
    %2977 = vmatprep.subr.mxu0 0.0
    %2978 = vmatpush1.xpose.msra.mxu0 0.0
    %2979 = vmatprep.subr.mxu0 0.0
    %2980 = vmatpush1.xpose.msra.mxu0 0.0
    %2981 = vmatprep.subr.mxu0 0.0
    %2982 = vmatpush1.xpose.msra.mxu0 0.0
    %2983 = vmatprep.mubr.f32.mxu0 0.0
    %2984 = vmatmul.mubr.f32.gmra.mrb[0].mxu0 %v2915
    %v2985 = vpop.f32.mrb[0].mxu0
    %v2986 = vadd.f32 0.0, %v2985
    %v2987 = vpop.f32.mrb[0].mxu0
    %2988 = vdwg.mxu0
    %v2989 = vsel %vm64, %v2580, 0
    %v2991 = vsel %vm64, %v2594, 0
    %2993 = vmatprep.subr.mxu0 0.0
    %2994 = vmatpush1.xpose.msra.mxu0 %v2991
    %2995 = vmatprep.subr.mxu0 0.0
    %2996 = vmatpush1.xpose.msra.mxu0 0.0
    %2997 = vmatprep.subr.mxu0 0.0
    %2998 = vmatpush1.xpose.msra.mxu0 0.0
    %2999 = vmatprep.subr.mxu0 0.0
    %3000 = vmatpush1.xpose.msra.mxu0 0.0
    %3001 = vmatprep.subr.mxu0 0.0
    %3002 = vmatpush1.xpose.msra.mxu0 0.0
    %3003 = vmatprep.subr.mxu0 0.0
    %3004 = vmatpush1.xpose.msra.mxu0 0.0
    %3005 = vmatprep.subr.mxu0 0.0
    %3006 = vmatpush1.xpose.msra.mxu0 0.0
    %3007 = vmatprep.subr.mxu0 0.0
    %3008 = vmatpush1.xpose.msra.mxu0 0.0
    %3009 = vmatprep.subr.mxu0 0.0
    %3010 = vmatpush1.xpose.msra.mxu0 0.0
    %3011 = vmatprep.subr.mxu0 0.0
    %3012 = vmatpush1.xpose.msra.mxu0 0.0
    %3013 = vmatprep.subr.mxu0 0.0
    %3014 = vmatpush1.xpose.msra.mxu0 0.0
    %3015 = vmatprep.subr.mxu0 0.0
    %3016 = vmatpush1.xpose.msra.mxu0 0.0
    %3017 = vmatprep.subr.mxu0 0.0
    %3018 = vmatpush1.xpose.msra.mxu0 0.0
    %3019 = vmatprep.subr.mxu0 0.0
    %3020 = vmatpush1.xpose.msra.mxu0 0.0
    %3021 = vmatprep.subr.mxu0 0.0
    %3022 = vmatpush1.xpose.msra.mxu0 0.0
    %3023 = vmatprep.subr.mxu0 0.0
    %3024 = vmatpush1.xpose.msra.mxu0 0.0
    %3025 = vmatprep.subr.mxu0 0.0
    %3026 = vmatpush1.xpose.msra.mxu0 0.0
    %3027 = vmatprep.subr.mxu0 0.0
    %3028 = vmatpush1.xpose.msra.mxu0 0.0
    %3029 = vmatprep.subr.mxu0 0.0
    %3030 = vmatpush1.xpose.msra.mxu0 0.0
    %3031 = vmatprep.subr.mxu0 0.0
    %3032 = vmatpush1.xpose.msra.mxu0 0.0
    %3033 = vmatprep.subr.mxu0 0.0
    %3034 = vmatpush1.xpose.msra.mxu0 0.0
    %3035 = vmatprep.subr.mxu0 0.0
    %3036 = vmatpush1.xpose.msra.mxu0 0.0
    %3037 = vmatprep.subr.mxu0 0.0
    %3038 = vmatpush1.xpose.msra.mxu0 0.0
    %3039 = vmatprep.subr.mxu0 0.0
    %3040 = vmatpush1.xpose.msra.mxu0 0.0
    %3041 = vmatprep.subr.mxu0 0.0
    %3042 = vmatpush1.xpose.msra.mxu0 0.0
    %3043 = vmatprep.subr.mxu0 0.0
    %3044 = vmatpush1.xpose.msra.mxu0 0.0
    %3045 = vmatprep.subr.mxu0 0.0
    %3046 = vmatpush1.xpose.msra.mxu0 0.0
    %3047 = vmatprep.subr.mxu0 0.0
    %3048 = vmatpush1.xpose.msra.mxu0 0.0
    %3049 = vmatprep.subr.mxu0 0.0
    %3050 = vmatpush1.xpose.msra.mxu0 0.0
    %3051 = vmatprep.subr.mxu0 0.0
    %3052 = vmatpush1.xpose.msra.mxu0 0.0
    %3053 = vmatprep.subr.mxu0 0.0
    %3054 = vmatpush1.xpose.msra.mxu0 0.0
    %3055 = vmatprep.subr.mxu0 0.0
    %3056 = vmatpush1.xpose.msra.mxu0 0.0
    %3057 = vmatprep.mubr.f32.mxu0 0.0
    %3058 = vmatmul.mubr.f32.gmra.mrb[0].mxu0 %v2989
    %v3059 = vpop.f32.mrb[0].mxu0
    %v3060 = vadd.f32 0.0, %v3059
    %v3061 = vpop.f32.mrb[0].mxu0
    %3062 = vdwg.mxu0
    %v3063 = vsel %vm64, %v2582, 0
    %v3065 = vsel %vm64, %v2596, 0
    %3067 = vmatprep.subr.mxu0 0.0
    %3068 = vmatpush1.xpose.msra.mxu0 %v3065
    %3069 = vmatprep.subr.mxu0 0.0
    %3070 = vmatpush1.xpose.msra.mxu0 0.0
    %3071 = vmatprep.subr.mxu0 0.0
    %3072 = vmatpush1.xpose.msra.mxu0 0.0
    %3073 = vmatprep.subr.mxu0 0.0
    %3074 = vmatpush1.xpose.msra.mxu0 0.0
    %3075 = vmatprep.subr.mxu0 0.0
    %3076 = vmatpush1.xpose.msra.mxu0 0.0
    %3077 = vmatprep.subr.mxu0 0.0
    %3078 = vmatpush1.xpose.msra.mxu0 0.0
    %3079 = vmatprep.subr.mxu0 0.0
    %3080 = vmatpush1.xpose.msra.mxu0 0.0
    %3081 = vmatprep.subr.mxu0 0.0
    %3082 = vmatpush1.xpose.msra.mxu0 0.0
    %3083 = vmatprep.subr.mxu0 0.0
    %3084 = vmatpush1.xpose.msra.mxu0 0.0
    %3085 = vmatprep.subr.mxu0 0.0
    %3086 = vmatpush1.xpose.msra.mxu0 0.0
    %3087 = vmatprep.subr.mxu0 0.0
    %3088 = vmatpush1.xpose.msra.mxu0 0.0
    %3089 = vmatprep.subr.mxu0 0.0
    %3090 = vmatpush1.xpose.msra.mxu0 0.0
    %3091 = vmatprep.subr.mxu0 0.0
    %3092 = vmatpush1.xpose.msra.mxu0 0.0
    %3093 = vmatprep.subr.mxu0 0.0
    %3094 = vmatpush1.xpose.msra.mxu0 0.0
    %3095 = vmatprep.subr.mxu0 0.0
    %3096 = vmatpush1.xpose.msra.mxu0 0.0
    %3097 = vmatprep.subr.mxu0 0.0
    %3098 = vmatpush1.xpose.msra.mxu0 0.0
    %3099 = vmatprep.subr.mxu0 0.0
    %3100 = vmatpush1.xpose.msra.mxu0 0.0
    %3101 = vmatprep.subr.mxu0 0.0
    %3102 = vmatpush1.xpose.msra.mxu0 0.0
    %3103 = vmatprep.subr.mxu0 0.0
    %3104 = vmatpush1.xpose.msra.mxu0 0.0
    %3105 = vmatprep.subr.mxu0 0.0
    %3106 = vmatpush1.xpose.msra.mxu0 0.0
    %3107 = vmatprep.subr.mxu0 0.0
    %3108 = vmatpush1.xpose.msra.mxu0 0.0
    %3109 = vmatprep.subr.mxu0 0.0
    %3110 = vmatpush1.xpose.msra.mxu0 0.0
    %3111 = vmatprep.subr.mxu0 0.0
    %3112 = vmatpush1.xpose.msra.mxu0 0.0
    %3113 = vmatprep.subr.mxu0 0.0
    %3114 = vmatpush1.xpose.msra.mxu0 0.0
    %3115 = vmatprep.subr.mxu0 0.0
    %3116 = vmatpush1.xpose.msra.mxu0 0.0
    %3117 = vmatprep.subr.mxu0 0.0
    %3118 = vmatpush1.xpose.msra.mxu0 0.0
    %3119 = vmatprep.subr.mxu0 0.0
    %3120 = vmatpush1.xpose.msra.mxu0 0.0
    %3121 = vmatprep.subr.mxu0 0.0
    %3122 = vmatpush1.xpose.msra.mxu0 0.0
    %3123 = vmatprep.subr.mxu0 0.0
    %3124 = vmatpush1.xpose.msra.mxu0 0.0
    %3125 = vmatprep.subr.mxu0 0.0
    %3126 = vmatpush1.xpose.msra.mxu0 0.0
    %3127 = vmatprep.subr.mxu0 0.0
    %3128 = vmatpush1.xpose.msra.mxu0 0.0
    %3129 = vmatprep.subr.mxu0 0.0
    %3130 = vmatpush1.xpose.msra.mxu0 0.0
    %3131 = vmatprep.mubr.f32.mxu0 0.0
    %3132 = vmatmul.mubr.f32.gmra.mrb[0].mxu0 %v3063
    %v3133 = vpop.f32.mrb[0].mxu0
    %v3134 = vadd.f32 0.0, %v3133
    %v3135 = vpop.f32.mrb[0].mxu0
    %3136 = vdwg.mxu0
    %v3137 = vsel %vm64, %v2584, 0
    %v3139 = vsel %vm64, %v2598, 0
    %3141 = vmatprep.subr.mxu0 0.0
    %3142 = vmatpush1.xpose.msra.mxu0 %v3139
    %3143 = vmatprep.subr.mxu0 0.0
    %3144 = vmatpush1.xpose.msra.mxu0 0.0
    %3145 = vmatprep.subr.mxu0 0.0
    %3146 = vmatpush1.xpose.msra.mxu0 0.0
    %3147 = vmatprep.subr.mxu0 0.0
    %3148 = vmatpush1.xpose.msra.mxu0 0.0
    %3149 = vmatprep.subr.mxu0 0.0
    %3150 = vmatpush1.xpose.msra.mxu0 0.0
    %3151 = vmatprep.subr.mxu0 0.0
    %3152 = vmatpush1.xpose.msra.mxu0 0.0
    %3153 = vmatprep.subr.mxu0 0.0
    %3154 = vmatpush1.xpose.msra.mxu0 0.0
    %3155 = vmatprep.subr.mxu0 0.0
    %3156 = vmatpush1.xpose.msra.mxu0 0.0
    %3157 = vmatprep.subr.mxu0 0.0
    %3158 = vmatpush1.xpose.msra.mxu0 0.0
    %3159 = vmatprep.subr.mxu0 0.0
    %3160 = vmatpush1.xpose.msra.mxu0 0.0
    %3161 = vmatprep.subr.mxu0 0.0
    %3162 = vmatpush1.xpose.msra.mxu0 0.0
    %3163 = vmatprep.subr.mxu0 0.0
    %3164 = vmatpush1.xpose.msra.mxu0 0.0
    %3165 = vmatprep.subr.mxu0 0.0
    %3166 = vmatpush1.xpose.msra.mxu0 0.0
    %3167 = vmatprep.subr.mxu0 0.0
    %3168 = vmatpush1.xpose.msra.mxu0 0.0
    %3169 = vmatprep.subr.mxu0 0.0
    %3170 = vmatpush1.xpose.msra.mxu0 0.0
    %3171 = vmatprep.subr.mxu0 0.0
    %3172 = vmatpush1.xpose.msra.mxu0 0.0
    %3173 = vmatprep.subr.mxu0 0.0
    %3174 = vmatpush1.xpose.msra.mxu0 0.0
    %3175 = vmatprep.subr.mxu0 0.0
    %3176 = vmatpush1.xpose.msra.mxu0 0.0
    %3177 = vmatprep.subr.mxu0 0.0
    %3178 = vmatpush1.xpose.msra.mxu0 0.0
    %3179 = vmatprep.subr.mxu0 0.0
    %3180 = vmatpush1.xpose.msra.mxu0 0.0
    %3181 = vmatprep.subr.mxu0 0.0
    %3182 = vmatpush1.xpose.msra.mxu0 0.0
    %3183 = vmatprep.subr.mxu0 0.0
    %3184 = vmatpush1.xpose.msra.mxu0 0.0
    %3185 = vmatprep.subr.mxu0 0.0
    %3186 = vmatpush1.xpose.msra.mxu0 0.0
    %3187 = vmatprep.subr.mxu0 0.0
    %3188 = vmatpush1.xpose.msra.mxu0 0.0
    %3189 = vmatprep.subr.mxu0 0.0
    %3190 = vmatpush1.xpose.msra.mxu0 0.0
    %3191 = vmatprep.subr.mxu0 0.0
    %3192 = vmatpush1.xpose.msra.mxu0 0.0
    %3193 = vmatprep.subr.mxu0 0.0
    %3194 = vmatpush1.xpose.msra.mxu0 0.0
    %3195 = vmatprep.subr.mxu0 0.0
    %3196 = vmatpush1.xpose.msra.mxu0 0.0
    %3197 = vmatprep.subr.mxu0 0.0
    %3198 = vmatpush1.xpose.msra.mxu0 0.0
    %3199 = vmatprep.subr.mxu0 0.0
    %3200 = vmatpush1.xpose.msra.mxu0 0.0
    %3201 = vmatprep.subr.mxu0 0.0
    %3202 = vmatpush1.xpose.msra.mxu0 0.0
    %3203 = vmatprep.subr.mxu0 0.0
    %3204 = vmatpush1.xpose.msra.mxu0 0.0
    %3205 = vmatprep.mubr.f32.mxu0 0.0
    %3206 = vmatmul.mubr.f32.gmra.mrb[0].mxu0 %v3137
    %v3207 = vpop.f32.mrb[0].mxu0
    %v3208 = vadd.f32 0.0, %v3207
    %v3209 = vpop.f32.mrb[0].mxu0
    %3210 = vdwg.mxu0
    %v3211 = vmul.f32 %v2690, 0.35355338
    %v3212 = vmul.f32 %v2764, 0.35355338
    %v3213 = vmul.f32 %v2838, 0.35355338
    %v3214 = vmul.f32 %v2912, 0.35355338
    %v3215 = vmul.f32 %v2986, 0.35355338
    %v3216 = vmul.f32 %v3060, 0.35355338
    %v3217 = vmul.f32 %v3134, 0.35355338
    %v3218 = vmul.f32 %v3208, 0.35355338
    %v3219 = vsel %vm1218, %v3211, -1e+30
    %v3220 = vsel %vm1218, %v3212, -1e+30
    %v3221 = vsel %vm1218, %v3213, -1e+30
    %v3222 = vsel %vm1218, %v3214, -1e+30
    %v3223 = vsel %vm1218, %v3215, -1e+30
    %v3224 = vsel %vm1218, %v3216, -1e+30
    %v3225 = vsel %vm1218, %v3217, -1e+30
    %v3226 = vsel %vm1218, %v3218, -1e+30
    %v3227 = vsel %vm64, %v3219, -inf
    %3228 = vmax.xlane.f32.xlu0 %v3227
    %v3229 = vpop.xlane.xlu0 %3228
    %v3230 = vsel %vm64, %v3220, -inf
    %3231 = vmax.xlane.f32.xlu0 %v3230
    %v3232 = vpop.xlane.xlu0 %3231
    %v3233 = vsel %vm64, %v3221, -inf
    %3234 = vmax.xlane.f32.xlu0 %v3233
    %v3235 = vpop.xlane.xlu0 %3234
    %v3236 = vsel %vm64, %v3222, -inf
    %3237 = vmax.xlane.f32.xlu0 %v3236
    %v3238 = vpop.xlane.xlu0 %3237
    %v3239 = vsel %vm64, %v3223, -inf
    %3240 = vmax.xlane.f32.xlu0 %v3239
    %v3241 = vpop.xlane.xlu0 %3240
    %v3242 = vsel %vm64, %v3224, -inf
    %3243 = vmax.xlane.f32.xlu0 %v3242
    %v3244 = vpop.xlane.xlu0 %3243
    %v3245 = vsel %vm64, %v3225, -inf
    %3246 = vmax.xlane.f32.xlu0 %v3245
    %v3247 = vpop.xlane.xlu0 %3246
    %v3248 = vsel %vm64, %v3226, -inf
    %3249 = vmax.xlane.f32.xlu0 %v3248
    %v3250 = vpop.xlane.xlu0 %3249
    %v3251 = vsub.f32 %v3219, %v3229
    %v3252 = vsub.f32 %v3220, %v3232
    %v3253 = vsub.f32 %v3221, %v3235
    %v3254 = vsub.f32 %v3222, %v3238
    %v3255 = vsub.f32 %v3223, %v3241
    %v3256 = vsub.f32 %v3224, %v3244
    %v3257 = vsub.f32 %v3225, %v3247
    %v3258 = vsub.f32 %v3226, %v3250
    %v3259 = vmul.f32 %v3251, 1.442695
    %v3260 = vpow.pop %v3259
    %v3261 = vmul.f32 %v3252, 1.442695
    %v3262 = vpow.pop %v3261
    %v3263 = vmul.f32 %v3253, 1.442695
    %v3264 = vpow.pop %v3263
    %v3265 = vmul.f32 %v3254, 1.442695
    %v3266 = vpow.pop %v3265
    %v3267 = vmul.f32 %v3255, 1.442695
    %v3268 = vpow.pop %v3267
    %v3269 = vmul.f32 %v3256, 1.442695
    %v3270 = vpow.pop %v3269
    %v3271 = vmul.f32 %v3257, 1.442695
    %v3272 = vpow.pop %v3271
    %v3273 = vmul.f32 %v3258, 1.442695
    %v3274 = vpow.pop %v3273
    %v3275 = vsel %vm64, %v3260, 0.0
    %3276 = vadd.xlane.f32.xlu0 %v3275
    %v3277 = vpop.xlane.xlu0 %3276
    %v3278 = vsel %vm64, %v3262, 0.0
    %3279 = vadd.xlane.f32.xlu0 %v3278
    %v3280 = vpop.xlane.xlu0 %3279
    %v3281 = vsel %vm64, %v3264, 0.0
    %3282 = vadd.xlane.f32.xlu0 %v3281
    %v3283 = vpop.xlane.xlu0 %3282
    %v3284 = vsel %vm64, %v3266, 0.0
    %3285 = vadd.xlane.f32.xlu0 %v3284
    %v3286 = vpop.xlane.xlu0 %3285
    %v3287 = vsel %vm64, %v3268, 0.0
    %3288 = vadd.xlane.f32.xlu0 %v3287
    %v3289 = vpop.xlane.xlu0 %3288
    %v3290 = vsel %vm64, %v3270, 0.0
    %3291 = vadd.xlane.f32.xlu0 %v3290
    %v3292 = vpop.xlane.xlu0 %3291
    %v3293 = vsel %vm64, %v3272, 0.0
    %3294 = vadd.xlane.f32.xlu0 %v3293
    %v3295 = vpop.xlane.xlu0 %3294
    %v3296 = vsel %vm64, %v3274, 0.0
    %3297 = vadd.xlane.f32.xlu0 %v3296
    %v3298 = vpop.xlane.xlu0 %3297
    %v3299 = vrcp.pop %v3277
    %v3300 = vrcp.pop %v3280
    %v3301 = vrcp.pop %v3283
    %v3302 = vrcp.pop %v3286
    %v3303 = vrcp.pop %v3289
    %v3304 = vrcp.pop %v3292
    %v3305 = vrcp.pop %v3295
    %v3306 = vrcp.pop %v3298
    %v3307 = vmul.f32 %v3260, %v3299
    %v3308 = vmul.f32 %v3262, %v3300
    %v3309 = vmul.f32 %v3264, %v3301
    %v3310 = vmul.f32 %v3266, %v3302
    %v3311 = vmul.f32 %v3268, %v3303
    %v3312 = vmul.f32 %v3270, %v3304
    %v3313 = vmul.f32 %v3272, %v3305
    %v3314 = vmul.f32 %v3274, %v3306
    %v3316 = vsel %vm64, %v3307, 0
    %3318 = vmatprep.subr.mxu0 0.0
    %3319 = vmatpush1.msra.mxu0 %v2563
    %3320 = vmatprep.subr.mxu0 0.0
    %3321 = vmatpush1.msra.mxu0 0.0
    %3322 = vmatprep.subr.mxu0 0.0
    %3323 = vmatpush1.msra.mxu0 0.0
    %3324 = vmatprep.subr.mxu0 0.0
    %3325 = vmatpush1.msra.mxu0 0.0
    %3326 = vmatprep.subr.mxu0 0.0
    %3327 = vmatpush1.msra.mxu0 0.0
    %3328 = vmatprep.subr.mxu0 0.0
    %3329 = vmatpush1.msra.mxu0 0.0
    %3330 = vmatprep.subr.mxu0 0.0
    %3331 = vmatpush1.msra.mxu0 0.0
    %3332 = vmatprep.subr.mxu0 0.0
    %3333 = vmatpush1.msra.mxu0 0.0
    %3334 = vmatprep.subr.mxu0 0.0
    %3335 = vmatpush1.msra.mxu0 0.0
    %3336 = vmatprep.subr.mxu0 0.0
    %3337 = vmatpush1.msra.mxu0 0.0
    %3338 = vmatprep.subr.mxu0 0.0
    %3339 = vmatpush1.msra.mxu0 0.0
    %3340 = vmatprep.subr.mxu0 0.0
    %3341 = vmatpush1.msra.mxu0 0.0
    %3342 = vmatprep.subr.mxu0 0.0
    %3343 = vmatpush1.msra.mxu0 0.0
    %3344 = vmatprep.subr.mxu0 0.0
    %3345 = vmatpush1.msra.mxu0 0.0
    %3346 = vmatprep.subr.mxu0 0.0
    %3347 = vmatpush1.msra.mxu0 0.0
    %3348 = vmatprep.subr.mxu0 0.0
    %3349 = vmatpush1.msra.mxu0 0.0
    %3350 = vmatprep.subr.mxu0 0.0
    %3351 = vmatpush1.msra.mxu0 0.0
    %3352 = vmatprep.subr.mxu0 0.0
    %3353 = vmatpush1.msra.mxu0 0.0
    %3354 = vmatprep.subr.mxu0 0.0
    %3355 = vmatpush1.msra.mxu0 0.0
    %3356 = vmatprep.subr.mxu0 0.0
    %3357 = vmatpush1.msra.mxu0 0.0
    %3358 = vmatprep.subr.mxu0 0.0
    %3359 = vmatpush1.msra.mxu0 0.0
    %3360 = vmatprep.subr.mxu0 0.0
    %3361 = vmatpush1.msra.mxu0 0.0
    %3362 = vmatprep.subr.mxu0 0.0
    %3363 = vmatpush1.msra.mxu0 0.0
    %3364 = vmatprep.subr.mxu0 0.0
    %3365 = vmatpush1.msra.mxu0 0.0
    %3366 = vmatprep.subr.mxu0 0.0
    %3367 = vmatpush1.msra.mxu0 0.0
    %3368 = vmatprep.subr.mxu0 0.0
    %3369 = vmatpush1.msra.mxu0 0.0
    %3370 = vmatprep.subr.mxu0 0.0
    %3371 = vmatpush1.msra.mxu0 0.0
    %3372 = vmatprep.subr.mxu0 0.0
    %3373 = vmatpush1.msra.mxu0 0.0
    %3374 = vmatprep.subr.mxu0 0.0
    %3375 = vmatpush1.msra.mxu0 0.0
    %3376 = vmatprep.subr.mxu0 0.0
    %3377 = vmatpush1.msra.mxu0 0.0
    %3378 = vmatprep.subr.mxu0 0.0
    %3379 = vmatpush1.msra.mxu0 0.0
    %3380 = vmatprep.subr.mxu0 0.0
    %3381 = vmatpush1.msra.mxu0 0.0
    %3382 = vmatprep.mubr.f32.mxu0 0.0
    %3383 = vmatmul.mubr.f32.gmra.mrb[0].mxu0 %v3316
    %v3384 = vpop.f32.mrb[0].mxu0
    %v3385 = vadd.f32 0.0, %v3384
    %v3386 = vpop.f32.mrb[0].mxu0
    %3387 = vdwg.mxu0
    %v3389 = vsel %vm64, %v3308, 0
    %3391 = vmatprep.subr.mxu0 0.0
    %3392 = vmatpush1.msra.mxu0 %v2568
    %3393 = vmatprep.subr.mxu0 0.0
    %3394 = vmatpush1.msra.mxu0 0.0
    %3395 = vmatprep.subr.mxu0 0.0
    %3396 = vmatpush1.msra.mxu0 0.0
    %3397 = vmatprep.subr.mxu0 0.0
    %3398 = vmatpush1.msra.mxu0 0.0
    %3399 = vmatprep.subr.mxu0 0.0
    %3400 = vmatpush1.msra.mxu0 0.0
    %3401 = vmatprep.subr.mxu0 0.0
    %3402 = vmatpush1.msra.mxu0 0.0
    %3403 = vmatprep.subr.mxu0 0.0
    %3404 = vmatpush1.msra.mxu0 0.0
    %3405 = vmatprep.subr.mxu0 0.0
    %3406 = vmatpush1.msra.mxu0 0.0
    %3407 = vmatprep.subr.mxu0 0.0
    %3408 = vmatpush1.msra.mxu0 0.0
    %3409 = vmatprep.subr.mxu0 0.0
    %3410 = vmatpush1.msra.mxu0 0.0
    %3411 = vmatprep.subr.mxu0 0.0
    %3412 = vmatpush1.msra.mxu0 0.0
    %3413 = vmatprep.subr.mxu0 0.0
    %3414 = vmatpush1.msra.mxu0 0.0
    %3415 = vmatprep.subr.mxu0 0.0
    %3416 = vmatpush1.msra.mxu0 0.0
    %3417 = vmatprep.subr.mxu0 0.0
    %3418 = vmatpush1.msra.mxu0 0.0
    %3419 = vmatprep.subr.mxu0 0.0
    %3420 = vmatpush1.msra.mxu0 0.0
    %3421 = vmatprep.subr.mxu0 0.0
    %3422 = vmatpush1.msra.mxu0 0.0
    %3423 = vmatprep.subr.mxu0 0.0
    %3424 = vmatpush1.msra.mxu0 0.0
    %3425 = vmatprep.subr.mxu0 0.0
    %3426 = vmatpush1.msra.mxu0 0.0
    %3427 = vmatprep.subr.mxu0 0.0
    %3428 = vmatpush1.msra.mxu0 0.0
    %3429 = vmatprep.subr.mxu0 0.0
    %3430 = vmatpush1.msra.mxu0 0.0
    %3431 = vmatprep.subr.mxu0 0.0
    %3432 = vmatpush1.msra.mxu0 0.0
    %3433 = vmatprep.subr.mxu0 0.0
    %3434 = vmatpush1.msra.mxu0 0.0
    %3435 = vmatprep.subr.mxu0 0.0
    %3436 = vmatpush1.msra.mxu0 0.0
    %3437 = vmatprep.subr.mxu0 0.0
    %3438 = vmatpush1.msra.mxu0 0.0
    %3439 = vmatprep.subr.mxu0 0.0
    %3440 = vmatpush1.msra.mxu0 0.0
    %3441 = vmatprep.subr.mxu0 0.0
    %3442 = vmatpush1.msra.mxu0 0.0
    %3443 = vmatprep.subr.mxu0 0.0
    %3444 = vmatpush1.msra.mxu0 0.0
    %3445 = vmatprep.subr.mxu0 0.0
    %3446 = vmatpush1.msra.mxu0 0.0
    %3447 = vmatprep.subr.mxu0 0.0
    %3448 = vmatpush1.msra.mxu0 0.0
    %3449 = vmatprep.subr.mxu0 0.0
    %3450 = vmatpush1.msra.mxu0 0.0
    %3451 = vmatprep.subr.mxu0 0.0
    %3452 = vmatpush1.msra.mxu0 0.0
    %3453 = vmatprep.subr.mxu0 0.0
    %3454 = vmatpush1.msra.mxu0 0.0
    %3455 = vmatprep.mubr.f32.mxu0 0.0
    %3456 = vmatmul.mubr.f32.gmra.mrb[0].mxu0 %v3389
    %v3457 = vpop.f32.mrb[0].mxu0
    %v3458 = vadd.f32 0.0, %v3457
    %v3459 = vpop.f32.mrb[0].mxu0
    %3460 = vdwg.mxu0
    %v3462 = vsel %vm64, %v3309, 0
    %3464 = vmatprep.subr.mxu0 0.0
    %3465 = vmatpush1.msra.mxu0 %v2602
    %3466 = vmatprep.subr.mxu0 0.0
    %3467 = vmatpush1.msra.mxu0 0.0
    %3468 = vmatprep.subr.mxu0 0.0
    %3469 = vmatpush1.msra.mxu0 0.0
    %3470 = vmatprep.subr.mxu0 0.0
    %3471 = vmatpush1.msra.mxu0 0.0
    %3472 = vmatprep.subr.mxu0 0.0
    %3473 = vmatpush1.msra.mxu0 0.0
    %3474 = vmatprep.subr.mxu0 0.0
    %3475 = vmatpush1.msra.mxu0 0.0
    %3476 = vmatprep.subr.mxu0 0.0
    %3477 = vmatpush1.msra.mxu0 0.0
    %3478 = vmatprep.subr.mxu0 0.0
    %3479 = vmatpush1.msra.mxu0 0.0
    %3480 = vmatprep.subr.mxu0 0.0
    %3481 = vmatpush1.msra.mxu0 0.0
    %3482 = vmatprep.subr.mxu0 0.0
    %3483 = vmatpush1.msra.mxu0 0.0
    %3484 = vmatprep.subr.mxu0 0.0
    %3485 = vmatpush1.msra.mxu0 0.0
    %3486 = vmatprep.subr.mxu0 0.0
    %3487 = vmatpush1.msra.mxu0 0.0
    %3488 = vmatprep.subr.mxu0 0.0
    %3489 = vmatpush1.msra.mxu0 0.0
    %3490 = vmatprep.subr.mxu0 0.0
    %3491 = vmatpush1.msra.mxu0 0.0
    %3492 = vmatprep.subr.mxu0 0.0
    %3493 = vmatpush1.msra.mxu0 0.0
    %3494 = vmatprep.subr.mxu0 0.0
    %3495 = vmatpush1.msra.mxu0 0.0
    %3496 = vmatprep.subr.mxu0 0.0
    %3497 = vmatpush1.msra.mxu0 0.0
    %3498 = vmatprep.subr.mxu0 0.0
    %3499 = vmatpush1.msra.mxu0 0.0
    %3500 = vmatprep.subr.mxu0 0.0
    %3501 = vmatpush1.msra.mxu0 0.0
    %3502 = vmatprep.subr.mxu0 0.0
    %3503 = vmatpush1.msra.mxu0 0.0
    %3504 = vmatprep.subr.mxu0 0.0
    %3505 = vmatpush1.msra.mxu0 0.0
    %3506 = vmatprep.subr.mxu0 0.0
    %3507 = vmatpush1.msra.mxu0 0.0
    %3508 = vmatprep.subr.mxu0 0.0
    %3509 = vmatpush1.msra.mxu0 0.0
    %3510 = vmatprep.subr.mxu0 0.0
    %3511 = vmatpush1.msra.mxu0 0.0
    %3512 = vmatprep.subr.mxu0 0.0
    %3513 = vmatpush1.msra.mxu0 0.0
    %3514 = vmatprep.subr.mxu0 0.0
    %3515 = vmatpush1.msra.mxu0 0.0
    %3516 = vmatprep.subr.mxu0 0.0
    %3517 = vmatpush1.msra.mxu0 0.0
    %3518 = vmatprep.subr.mxu0 0.0
    %3519 = vmatpush1.msra.mxu0 0.0
    %3520 = vmatprep.subr.mxu0 0.0
    %3521 = vmatpush1.msra.mxu0 0.0
    %3522 = vmatprep.subr.mxu0 0.0
    %3523 = vmatpush1.msra.mxu0 0.0
    %3524 = vmatprep.subr.mxu0 0.0
    %3525 = vmatpush1.msra.mxu0 0.0
    %3526 = vmatprep.subr.mxu0 0.0
    %3527 = vmatpush1.msra.mxu0 0.0
    %3528 = vmatprep.mubr.f32.mxu0 0.0
    %3529 = vmatmul.mubr.f32.gmra.mrb[0].mxu0 %v3462
    %v3530 = vpop.f32.mrb[0].mxu0
    %v3531 = vadd.f32 0.0, %v3530
    %v3532 = vpop.f32.mrb[0].mxu0
    %3533 = vdwg.mxu0
    %v3535 = vsel %vm64, %v3310, 0
    %3537 = vmatprep.subr.mxu0 0.0
    %3538 = vmatpush1.msra.mxu0 %v2604
    %3539 = vmatprep.subr.mxu0 0.0
    %3540 = vmatpush1.msra.mxu0 0.0
    %3541 = vmatprep.subr.mxu0 0.0
    %3542 = vmatpush1.msra.mxu0 0.0
    %3543 = vmatprep.subr.mxu0 0.0
    %3544 = vmatpush1.msra.mxu0 0.0
    %3545 = vmatprep.subr.mxu0 0.0
    %3546 = vmatpush1.msra.mxu0 0.0
    %3547 = vmatprep.subr.mxu0 0.0
    %3548 = vmatpush1.msra.mxu0 0.0
    %3549 = vmatprep.subr.mxu0 0.0
    %3550 = vmatpush1.msra.mxu0 0.0
    %3551 = vmatprep.subr.mxu0 0.0
    %3552 = vmatpush1.msra.mxu0 0.0
    %3553 = vmatprep.subr.mxu0 0.0
    %3554 = vmatpush1.msra.mxu0 0.0
    %3555 = vmatprep.subr.mxu0 0.0
    %3556 = vmatpush1.msra.mxu0 0.0
    %3557 = vmatprep.subr.mxu0 0.0
    %3558 = vmatpush1.msra.mxu0 0.0
    %3559 = vmatprep.subr.mxu0 0.0
    %3560 = vmatpush1.msra.mxu0 0.0
    %3561 = vmatprep.subr.mxu0 0.0
    %3562 = vmatpush1.msra.mxu0 0.0
    %3563 = vmatprep.subr.mxu0 0.0
    %3564 = vmatpush1.msra.mxu0 0.0
    %3565 = vmatprep.subr.mxu0 0.0
    %3566 = vmatpush1.msra.mxu0 0.0
    %3567 = vmatprep.subr.mxu0 0.0
    %3568 = vmatpush1.msra.mxu0 0.0
    %3569 = vmatprep.subr.mxu0 0.0
    %3570 = vmatpush1.msra.mxu0 0.0
    %3571 = vmatprep.subr.mxu0 0.0
    %3572 = vmatpush1.msra.mxu0 0.0
    %3573 = vmatprep.subr.mxu0 0.0
    %3574 = vmatpush1.msra.mxu0 0.0
    %3575 = vmatprep.subr.mxu0 0.0
    %3576 = vmatpush1.msra.mxu0 0.0
    %3577 = vmatprep.subr.mxu0 0.0
    %3578 = vmatpush1.msra.mxu0 0.0
    %3579 = vmatprep.subr.mxu0 0.0
    %3580 = vmatpush1.msra.mxu0 0.0
    %3581 = vmatprep.subr.mxu0 0.0
    %3582 = vmatpush1.msra.mxu0 0.0
    %3583 = vmatprep.subr.mxu0 0.0
    %3584 = vmatpush1.msra.mxu0 0.0
    %3585 = vmatprep.subr.mxu0 0.0
    %3586 = vmatpush1.msra.mxu0 0.0
    %3587 = vmatprep.subr.mxu0 0.0
    %3588 = vmatpush1.msra.mxu0 0.0
    %3589 = vmatprep.subr.mxu0 0.0
    %3590 = vmatpush1.msra.mxu0 0.0
    %3591 = vmatprep.subr.mxu0 0.0
    %3592 = vmatpush1.msra.mxu0 0.0
    %3593 = vmatprep.subr.mxu0 0.0
    %3594 = vmatpush1.msra.mxu0 0.0
    %3595 = vmatprep.subr.mxu0 0.0
    %3596 = vmatpush1.msra.mxu0 0.0
    %3597 = vmatprep.subr.mxu0 0.0
    %3598 = vmatpush1.msra.mxu0 0.0
    %3599 = vmatprep.subr.mxu0 0.0
    %3600 = vmatpush1.msra.mxu0 0.0
    %3601 = vmatprep.mubr.f32.mxu0 0.0
    %3602 = vmatmul.mubr.f32.gmra.mrb[0].mxu0 %v3535
    %v3603 = vpop.f32.mrb[0].mxu0
    %v3604 = vadd.f32 0.0, %v3603
    %v3605 = vpop.f32.mrb[0].mxu0
    %3606 = vdwg.mxu0
    %v3608 = vsel %vm64, %v3311, 0
    %3610 = vmatprep.subr.mxu0 0.0
    %3611 = vmatpush1.msra.mxu0 %v2608
    %3612 = vmatprep.subr.mxu0 0.0
    %3613 = vmatpush1.msra.mxu0 0.0
    %3614 = vmatprep.subr.mxu0 0.0
    %3615 = vmatpush1.msra.mxu0 0.0
    %3616 = vmatprep.subr.mxu0 0.0
    %3617 = vmatpush1.msra.mxu0 0.0
    %3618 = vmatprep.subr.mxu0 0.0
    %3619 = vmatpush1.msra.mxu0 0.0
    %3620 = vmatprep.subr.mxu0 0.0
    %3621 = vmatpush1.msra.mxu0 0.0
    %3622 = vmatprep.subr.mxu0 0.0
    %3623 = vmatpush1.msra.mxu0 0.0
    %3624 = vmatprep.subr.mxu0 0.0
    %3625 = vmatpush1.msra.mxu0 0.0
    %3626 = vmatprep.subr.mxu0 0.0
    %3627 = vmatpush1.msra.mxu0 0.0
    %3628 = vmatprep.subr.mxu0 0.0
    %3629 = vmatpush1.msra.mxu0 0.0
    %3630 = vmatprep.subr.mxu0 0.0
    %3631 = vmatpush1.msra.mxu0 0.0
    %3632 = vmatprep.subr.mxu0 0.0
    %3633 = vmatpush1.msra.mxu0 0.0
    %3634 = vmatprep.subr.mxu0 0.0
    %3635 = vmatpush1.msra.mxu0 0.0
    %3636 = vmatprep.subr.mxu0 0.0
    %3637 = vmatpush1.msra.mxu0 0.0
    %3638 = vmatprep.subr.mxu0 0.0
    %3639 = vmatpush1.msra.mxu0 0.0
    %3640 = vmatprep.subr.mxu0 0.0
    %3641 = vmatpush1.msra.mxu0 0.0
    %3642 = vmatprep.subr.mxu0 0.0
    %3643 = vmatpush1.msra.mxu0 0.0
    %3644 = vmatprep.subr.mxu0 0.0
    %3645 = vmatpush1.msra.mxu0 0.0
    %3646 = vmatprep.subr.mxu0 0.0
    %3647 = vmatpush1.msra.mxu0 0.0
    %3648 = vmatprep.subr.mxu0 0.0
    %3649 = vmatpush1.msra.mxu0 0.0
    %3650 = vmatprep.subr.mxu0 0.0
    %3651 = vmatpush1.msra.mxu0 0.0
    %3652 = vmatprep.subr.mxu0 0.0
    %3653 = vmatpush1.msra.mxu0 0.0
    %3654 = vmatprep.subr.mxu0 0.0
    %3655 = vmatpush1.msra.mxu0 0.0
    %3656 = vmatprep.subr.mxu0 0.0
    %3657 = vmatpush1.msra.mxu0 0.0
    %3658 = vmatprep.subr.mxu0 0.0
    %3659 = vmatpush1.msra.mxu0 0.0
    %3660 = vmatprep.subr.mxu0 0.0
    %3661 = vmatpush1.msra.mxu0 0.0
    %3662 = vmatprep.subr.mxu0 0.0
    %3663 = vmatpush1.msra.mxu0 0.0
    %3664 = vmatprep.subr.mxu0 0.0
    %3665 = vmatpush1.msra.mxu0 0.0
    %3666 = vmatprep.subr.mxu0 0.0
    %3667 = vmatpush1.msra.mxu0 0.0
    %3668 = vmatprep.subr.mxu0 0.0
    %3669 = vmatpush1.msra.mxu0 0.0
    %3670 = vmatprep.subr.mxu0 0.0
    %3671 = vmatpush1.msra.mxu0 0.0
    %3672 = vmatprep.subr.mxu0 0.0
    %3673 = vmatpush1.msra.mxu0 0.0
    %3674 = vmatprep.mubr.f32.mxu0 0.0
    %3675 = vmatmul.mubr.f32.gmra.mrb[0].mxu0 %v3608
    %v3676 = vpop.f32.mrb[0].mxu0
    %v3677 = vadd.f32 0.0, %v3676
    %v3678 = vpop.f32.mrb[0].mxu0
    %3679 = vdwg.mxu0
    %v3681 = vsel %vm64, %v3312, 0
    %3683 = vmatprep.subr.mxu0 0.0
    %3684 = vmatpush1.msra.mxu0 %v2610
    %3685 = vmatprep.subr.mxu0 0.0
    %3686 = vmatpush1.msra.mxu0 0.0
    %3687 = vmatprep.subr.mxu0 0.0
    %3688 = vmatpush1.msra.mxu0 0.0
    %3689 = vmatprep.subr.mxu0 0.0
    %3690 = vmatpush1.msra.mxu0 0.0
    %3691 = vmatprep.subr.mxu0 0.0
    %3692 = vmatpush1.msra.mxu0 0.0
    %3693 = vmatprep.subr.mxu0 0.0
    %3694 = vmatpush1.msra.mxu0 0.0
    %3695 = vmatprep.subr.mxu0 0.0
    %3696 = vmatpush1.msra.mxu0 0.0
    %3697 = vmatprep.subr.mxu0 0.0
    %3698 = vmatpush1.msra.mxu0 0.0
    %3699 = vmatprep.subr.mxu0 0.0
    %3700 = vmatpush1.msra.mxu0 0.0
    %3701 = vmatprep.subr.mxu0 0.0
    %3702 = vmatpush1.msra.mxu0 0.0
    %3703 = vmatprep.subr.mxu0 0.0
    %3704 = vmatpush1.msra.mxu0 0.0
    %3705 = vmatprep.subr.mxu0 0.0
    %3706 = vmatpush1.msra.mxu0 0.0
    %3707 = vmatprep.subr.mxu0 0.0
    %3708 = vmatpush1.msra.mxu0 0.0
    %3709 = vmatprep.subr.mxu0 0.0
    %3710 = vmatpush1.msra.mxu0 0.0
    %3711 = vmatprep.subr.mxu0 0.0
    %3712 = vmatpush1.msra.mxu0 0.0
    %3713 = vmatprep.subr.mxu0 0.0
    %3714 = vmatpush1.msra.mxu0 0.0
    %3715 = vmatprep.subr.mxu0 0.0
    %3716 = vmatpush1.msra.mxu0 0.0
    %3717 = vmatprep.subr.mxu0 0.0
    %3718 = vmatpush1.msra.mxu0 0.0
    %3719 = vmatprep.subr.mxu0 0.0
    %3720 = vmatpush1.msra.mxu0 0.0
    %3721 = vmatprep.subr.mxu0 0.0
    %3722 = vmatpush1.msra.mxu0 0.0
    %3723 = vmatprep.subr.mxu0 0.0
    %3724 = vmatpush1.msra.mxu0 0.0
    %3725 = vmatprep.subr.mxu0 0.0
    %3726 = vmatpush1.msra.mxu0 0.0
    %3727 = vmatprep.subr.mxu0 0.0
    %3728 = vmatpush1.msra.mxu0 0.0
    %3729 = vmatprep.subr.mxu0 0.0
    %3730 = vmatpush1.msra.mxu0 0.0
    %3731 = vmatprep.subr.mxu0 0.0
    %3732 = vmatpush1.msra.mxu0 0.0
    %3733 = vmatprep.subr.mxu0 0.0
    %3734 = vmatpush1.msra.mxu0 0.0
    %3735 = vmatprep.subr.mxu0 0.0
    %3736 = vmatpush1.msra.mxu0 0.0
    %3737 = vmatprep.subr.mxu0 0.0
    %3738 = vmatpush1.msra.mxu0 0.0
    %3739 = vmatprep.subr.mxu0 0.0
    %3740 = vmatpush1.msra.mxu0 0.0
    %3741 = vmatprep.subr.mxu0 0.0
    %3742 = vmatpush1.msra.mxu0 0.0
    %3743 = vmatprep.subr.mxu0 0.0
    %3744 = vmatpush1.msra.mxu0 0.0
    %3745 = vmatprep.subr.mxu0 0.0
    %3746 = vmatpush1.msra.mxu0 0.0
    %3747 = vmatprep.mubr.f32.mxu0 0.0
    %3748 = vmatmul.mubr.f32.gmra.mrb[0].mxu0 %v3681
    %v3749 = vpop.f32.mrb[0].mxu0
    %v3750 = vadd.f32 0.0, %v3749
    %v3751 = vpop.f32.mrb[0].mxu0
    %3752 = vdwg.mxu0
    %v3754 = vsel %vm64, %v3313, 0
    %3756 = vmatprep.subr.mxu0 0.0
    %3757 = vmatpush1.msra.mxu0 %v2614
    %3758 = vmatprep.subr.mxu0 0.0
    %3759 = vmatpush1.msra.mxu0 0.0
    %3760 = vmatprep.subr.mxu0 0.0
    %3761 = vmatpush1.msra.mxu0 0.0
    %3762 = vmatprep.subr.mxu0 0.0
    %3763 = vmatpush1.msra.mxu0 0.0
    %3764 = vmatprep.subr.mxu0 0.0
    %3765 = vmatpush1.msra.mxu0 0.0
    %3766 = vmatprep.subr.mxu0 0.0
    %3767 = vmatpush1.msra.mxu0 0.0
    %3768 = vmatprep.subr.mxu0 0.0
    %3769 = vmatpush1.msra.mxu0 0.0
    %3770 = vmatprep.subr.mxu0 0.0
    %3771 = vmatpush1.msra.mxu0 0.0
    %3772 = vmatprep.subr.mxu0 0.0
    %3773 = vmatpush1.msra.mxu0 0.0
    %3774 = vmatprep.subr.mxu0 0.0
    %3775 = vmatpush1.msra.mxu0 0.0
    %3776 = vmatprep.subr.mxu0 0.0
    %3777 = vmatpush1.msra.mxu0 0.0
    %3778 = vmatprep.subr.mxu0 0.0
    %3779 = vmatpush1.msra.mxu0 0.0
    %3780 = vmatprep.subr.mxu0 0.0
    %3781 = vmatpush1.msra.mxu0 0.0
    %3782 = vmatprep.subr.mxu0 0.0
    %3783 = vmatpush1.msra.mxu0 0.0
    %3784 = vmatprep.subr.mxu0 0.0
    %3785 = vmatpush1.msra.mxu0 0.0
    %3786 = vmatprep.subr.mxu0 0.0
    %3787 = vmatpush1.msra.mxu0 0.0
    %3788 = vmatprep.subr.mxu0 0.0
    %3789 = vmatpush1.msra.mxu0 0.0
    %3790 = vmatprep.subr.mxu0 0.0
    %3791 = vmatpush1.msra.mxu0 0.0
    %3792 = vmatprep.subr.mxu0 0.0
    %3793 = vmatpush1.msra.mxu0 0.0
    %3794 = vmatprep.subr.mxu0 0.0
    %3795 = vmatpush1.msra.mxu0 0.0
    %3796 = vmatprep.subr.mxu0 0.0
    %3797 = vmatpush1.msra.mxu0 0.0
    %3798 = vmatprep.subr.mxu0 0.0
    %3799 = vmatpush1.msra.mxu0 0.0
    %3800 = vmatprep.subr.mxu0 0.0
    %3801 = vmatpush1.msra.mxu0 0.0
    %3802 = vmatprep.subr.mxu0 0.0
    %3803 = vmatpush1.msra.mxu0 0.0
    %3804 = vmatprep.subr.mxu0 0.0
    %3805 = vmatpush1.msra.mxu0 0.0
    %3806 = vmatprep.subr.mxu0 0.0
    %3807 = vmatpush1.msra.mxu0 0.0
    %3808 = vmatprep.subr.mxu0 0.0
    %3809 = vmatpush1.msra.mxu0 0.0
    %3810 = vmatprep.subr.mxu0 0.0
    %3811 = vmatpush1.msra.mxu0 0.0
    %3812 = vmatprep.subr.mxu0 0.0
    %3813 = vmatpush1.msra.mxu0 0.0
    %3814 = vmatprep.subr.mxu0 0.0
    %3815 = vmatpush1.msra.mxu0 0.0
    %3816 = vmatprep.subr.mxu0 0.0
    %3817 = vmatpush1.msra.mxu0 0.0
    %3818 = vmatprep.subr.mxu0 0.0
    %3819 = vmatpush1.msra.mxu0 0.0
    %3820 = vmatprep.mubr.f32.mxu0 0.0
    %3821 = vmatmul.mubr.f32.gmra.mrb[0].mxu0 %v3754
    %v3822 = vpop.f32.mrb[0].mxu0
    %v3823 = vadd.f32 0.0, %v3822
    %v3824 = vpop.f32.mrb[0].mxu0
    %3825 = vdwg.mxu0
    %v3827 = vsel %vm64, %v3314, 0
    %3829 = vmatprep.subr.mxu0 0.0
    %3830 = vmatpush1.msra.mxu0 %v2616
    %3831 = vmatprep.subr.mxu0 0.0
    %3832 = vmatpush1.msra.mxu0 0.0
    %3833 = vmatprep.subr.mxu0 0.0
    %3834 = vmatpush1.msra.mxu0 0.0
    %3835 = vmatprep.subr.mxu0 0.0
    %3836 = vmatpush1.msra.mxu0 0.0
    %3837 = vmatprep.subr.mxu0 0.0
    %3838 = vmatpush1.msra.mxu0 0.0
    %3839 = vmatprep.subr.mxu0 0.0
    %3840 = vmatpush1.msra.mxu0 0.0
    %3841 = vmatprep.subr.mxu0 0.0
    %3842 = vmatpush1.msra.mxu0 0.0
    %3843 = vmatprep.subr.mxu0 0.0
    %3844 = vmatpush1.msra.mxu0 0.0
    %3845 = vmatprep.subr.mxu0 0.0
    %3846 = vmatpush1.msra.mxu0 0.0
    %3847 = vmatprep.subr.mxu0 0.0
    %3848 = vmatpush1.msra.mxu0 0.0
    %3849 = vmatprep.subr.mxu0 0.0
    %3850 = vmatpush1.msra.mxu0 0.0
    %3851 = vmatprep.subr.mxu0 0.0
    %3852 = vmatpush1.msra.mxu0 0.0
    %3853 = vmatprep.subr.mxu0 0.0
    %3854 = vmatpush1.msra.mxu0 0.0
    %3855 = vmatprep.subr.mxu0 0.0
    %3856 = vmatpush1.msra.mxu0 0.0
    %3857 = vmatprep.subr.mxu0 0.0
    %3858 = vmatpush1.msra.mxu0 0.0
    %3859 = vmatprep.subr.mxu0 0.0
    %3860 = vmatpush1.msra.mxu0 0.0
    %3861 = vmatprep.subr.mxu0 0.0
    %3862 = vmatpush1.msra.mxu0 0.0
    %3863 = vmatprep.subr.mxu0 0.0
    %3864 = vmatpush1.msra.mxu0 0.0
    %3865 = vmatprep.subr.mxu0 0.0
    %3866 = vmatpush1.msra.mxu0 0.0
    %3867 = vmatprep.subr.mxu0 0.0
    %3868 = vmatpush1.msra.mxu0 0.0
    %3869 = vmatprep.subr.mxu0 0.0
    %3870 = vmatpush1.msra.mxu0 0.0
    %3871 = vmatprep.subr.mxu0 0.0
    %3872 = vmatpush1.msra.mxu0 0.0
    %3873 = vmatprep.subr.mxu0 0.0
    %3874 = vmatpush1.msra.mxu0 0.0
    %3875 = vmatprep.subr.mxu0 0.0
    %3876 = vmatpush1.msra.mxu0 0.0
    %3877 = vmatprep.subr.mxu0 0.0
    %3878 = vmatpush1.msra.mxu0 0.0
    %3879 = vmatprep.subr.mxu0 0.0
    %3880 = vmatpush1.msra.mxu0 0.0
    %3881 = vmatprep.subr.mxu0 0.0
    %3882 = vmatpush1.msra.mxu0 0.0
    %3883 = vmatprep.subr.mxu0 0.0
    %3884 = vmatpush1.msra.mxu0 0.0
    %3885 = vmatprep.subr.mxu0 0.0
    %3886 = vmatpush1.msra.mxu0 0.0
    %3887 = vmatprep.subr.mxu0 0.0
    %3888 = vmatpush1.msra.mxu0 0.0
    %3889 = vmatprep.subr.mxu0 0.0
    %3890 = vmatpush1.msra.mxu0 0.0
    %3891 = vmatprep.subr.mxu0 0.0
    %3892 = vmatpush1.msra.mxu0 0.0
    %3893 = vmatprep.mubr.f32.mxu0 0.0
    %3894 = vmatmul.mubr.f32.gmra.mrb[0].mxu0 %v3827
    %v3895 = vpop.f32.mrb[0].mxu0
    %v3896 = vadd.f32 0.0, %v3895
    %v3897 = vpop.f32.mrb[0].mxu0
    %3898 = vdwg.mxu0
    %3901 = vrot.lane.b32.xlu0 %v3531, 8
    %v3902 = vpop.permute.xlu0 %3901
    %3903 = vrot.lane.b32.xlu0 %v3604, 8
    %v3904 = vpop.permute.xlu0 %3903
    %3909 = vrot.lane.b32.xlu0 %v3677, 16
    %v3910 = vpop.permute.xlu0 %3909
    %3911 = vrot.lane.b32.xlu0 %v3750, 16
    %v3912 = vpop.permute.xlu0 %3911
    %3917 = vrot.lane.b32.xlu0 %v3823, 24
    %v3918 = vpop.permute.xlu0 %3917
    %3919 = vrot.lane.b32.xlu0 %v3896, 24
    %v3920 = vpop.permute.xlu0 %3919
    %v3923 = vsel %vm64, %v3385, %v3902
    %v3924 = vsel %vm64, %v3458, %v3904
    %v3925 = vsel %vm146, %v3923, %v3910
    %v3926 = vsel %vm146, %v3924, %v3912
    %v3927 = vsel %vm1927, %v3925, %v3918
    %v3928 = vsel %vm1927, %v3926, %v3920
    %v3929 = vld [vmem:[%s2 + $0x2a] sm:$0x1]
    %v3930 = vlaneseq
    %v3931 = vshrl.u32 %v3930, 7
    %v3932 = vsub.s32 0, %v3931
    %v3933 = vrot.slane %v3929, %v3932
    %v3935 = vsel %vm327, %v3927, 0
    %v3938 = vsel %vm327, %v3928, 0
    %3940 = vmatprep.subr.mxu0 0.0
    %3941 = vmatpush1.msra.mxu0 %v2321
    %3942 = vmatprep.subr.mxu0 0.0
    %3943 = vmatpush1.msra.mxu0 %v2322
    %3944 = vmatprep.subr.mxu0 0.0
    %3945 = vmatpush1.msra.mxu0 %v2323
    %3946 = vmatprep.subr.mxu0 0.0
    %3947 = vmatpush1.msra.mxu0 %v2324
    %3948 = vmatprep.subr.mxu0 0.0
    %3949 = vmatpush1.msra.mxu0 0.0
    %3950 = vmatprep.subr.mxu0 0.0
    %3951 = vmatpush1.msra.mxu0 0.0
    %3952 = vmatprep.subr.mxu0 0.0
    %3953 = vmatpush1.msra.mxu0 0.0
    %3954 = vmatprep.subr.mxu0 0.0
    %3955 = vmatpush1.msra.mxu0 0.0
    %3956 = vmatprep.subr.mxu0 0.0
    %3957 = vmatpush1.msra.mxu0 0.0
    %3958 = vmatprep.subr.mxu0 0.0
    %3959 = vmatpush1.msra.mxu0 0.0
    %3960 = vmatprep.subr.mxu0 0.0
    %3961 = vmatpush1.msra.mxu0 0.0
    %3962 = vmatprep.subr.mxu0 0.0
    %3963 = vmatpush1.msra.mxu0 0.0
    %3964 = vmatprep.subr.mxu0 0.0
    %3965 = vmatpush1.msra.mxu0 0.0
    %3966 = vmatprep.subr.mxu0 0.0
    %3967 = vmatpush1.msra.mxu0 0.0
    %3968 = vmatprep.subr.mxu0 0.0
    %3969 = vmatpush1.msra.mxu0 0.0
    %3970 = vmatprep.subr.mxu0 0.0
    %3971 = vmatpush1.msra.mxu0 0.0
    %3972 = vmatprep.subr.mxu0 0.0
    %3973 = vmatpush1.msra.mxu0 0.0
    %3974 = vmatprep.subr.mxu0 0.0
    %3975 = vmatpush1.msra.mxu0 0.0
    %3976 = vmatprep.subr.mxu0 0.0
    %3977 = vmatpush1.msra.mxu0 0.0
    %3978 = vmatprep.subr.mxu0 0.0
    %3979 = vmatpush1.msra.mxu0 0.0
    %3980 = vmatprep.subr.mxu0 0.0
    %3981 = vmatpush1.msra.mxu0 0.0
    %3982 = vmatprep.subr.mxu0 0.0
    %3983 = vmatpush1.msra.mxu0 0.0
    %3984 = vmatprep.subr.mxu0 0.0
    %3985 = vmatpush1.msra.mxu0 0.0
    %3986 = vmatprep.subr.mxu0 0.0
    %3987 = vmatpush1.msra.mxu0 0.0
    %3988 = vmatprep.subr.mxu0 0.0
    %3989 = vmatpush1.msra.mxu0 0.0
    %3990 = vmatprep.subr.mxu0 0.0
    %3991 = vmatpush1.msra.mxu0 0.0
    %3992 = vmatprep.subr.mxu0 0.0
    %3993 = vmatpush1.msra.mxu0 0.0
    %3994 = vmatprep.subr.mxu0 0.0
    %3995 = vmatpush1.msra.mxu0 0.0
    %3996 = vmatprep.subr.mxu0 0.0
    %3997 = vmatpush1.msra.mxu0 0.0
    %3998 = vmatprep.subr.mxu0 0.0
    %3999 = vmatpush1.msra.mxu0 0.0
    %4000 = vmatprep.subr.mxu0 0.0
    %4001 = vmatpush1.msra.mxu0 0.0
    %4002 = vmatprep.subr.mxu0 0.0
    %4003 = vmatpush1.msra.mxu0 0.0
    %4004 = vmatprep.mubr.f32.mxu0 0.0
    %4005 = vmatmul.mubr.f32.gmra.mrb[0].mxu0 %v3935
    %v4006 = vpop.f32.mrb[0].mxu0
    %v4007 = vadd.f32 %v3933, %v4006
    %v4008 = vpop.f32.mrb[0].mxu0
    %4009 = vmatprep.mubr.f32.mxu0 0.0
    %4010 = vmatmul.mubr.f32.gmra.mrb[0].mxu0 %v3938
    %v4011 = vpop.f32.mrb[0].mxu0
    %v4012 = vadd.f32 %v3933, %v4011
    %v4013 = vpop.f32.mrb[0].mxu0
    %4014 = vdwg.mxu0
    %v4015 = vadd.f32 %v2303, %v4007
    %v4016 = vadd.f32 %v2304, %v4012
    %v4017 = vld [vmem:[%s2 + $0x2b] sm:$0x1]
    %v4018 = vld [vmem:[%s2 + $0x2c] sm:$0x1]
    %v4019 = vsel %vm327, %v4015, 0.0
    %4020 = vadd.xlane.f32.xlu0 %v4019
    %v4021 = vpop.xlane.xlu0 %4020
    %v4022 = vsel %vm327, %v4016, 0.0
    %4023 = vadd.xlane.f32.xlu0 %v4022
    %v4024 = vpop.xlane.xlu0 %4023
    %v4025 = vmul.f32 %v4021, %v2026
    %v4026 = vmul.f32 %v4024, %v2026
    %v4027 = vsub.f32 %v4015, %v4025
    %v4028 = vsub.f32 %v4016, %v4026
    %v4029 = vmul.f32 %v4027, %v4027
    %v4030 = vmul.f32 %v4028, %v4028
    %v4031 = vsel %vm327, %v4029, 0.0
    %4032 = vadd.xlane.f32.xlu0 %v4031
    %v4033 = vpop.xlane.xlu0 %4032
    %v4034 = vsel %vm327, %v4030, 0.0
    %4035 = vadd.xlane.f32.xlu0 %v4034
    %v4036 = vpop.xlane.xlu0 %4035
    %v4037 = vmul.f32 %v4033, %v2026
    %v4038 = vmul.f32 %v4036, %v2026
    %v4039 = vadd.f32 %v4037, 1e-05
    %v4040 = vadd.f32 %v4038, 1e-05
    %v4041 = vrsqrt.pop %v4039
    %v4042 = vrsqrt.pop %v4040
    %v4043 = vmul.f32 %v4027, %v4041
    %v4044 = vmul.f32 %v4028, %v4042
    %v4045 = vlaneseq
    %v4046 = vshrl.u32 %v4045, 7
    %v4047 = vsub.s32 0, %v4046
    %v4048 = vrot.slane %v4017, %v4047
    %v4049 = vmul.f32 %v4043, %v4048
    %v4050 = vmul.f32 %v4044, %v4048
    %v4051 = vlaneseq
    %v4052 = vshrl.u32 %v4051, 7
    %v4053 = vsub.s32 0, %v4052
    %v4054 = vrot.slane %v4018, %v4053
    %v4055 = vadd.f32 %v4049, %v4054
    %v4056 = vadd.f32 %v4050, %v4054
    %s4057 = scalar_lea.vmem [#allocation2], 32
    %v4058 = vld [vmem:[%s4057] sm:$0xff]
    %v4059 = vld [vmem:[%s4057 + $0x8] sm:$0xff]
    %v4060 = vld [vmem:[%s4057 + $0x10] sm:$0xff]
    %v4061 = vld [vmem:[%s4057 + $0x18] sm:$0xff]
    %v4062 = vld [vmem:[%s2 + $0x2d] sm:$0x1]
    %v4063 = vlaneseq
    %v4064 = vshrl.u32 %v4063, 7
    %v4065 = vsub.s32 0, %v4064
    %v4066 = vrot.slane %v4062, %v4065
    %v4068 = vsel %vm327, %v4055, 0
    %v4071 = vsel %vm327, %v4056, 0
    %4073 = vmatprep.subr.mxu0 0.0
    %4074 = vmatpush1.msra.mxu0 %v4058
    %4075 = vmatprep.subr.mxu0 0.0
    %4076 = vmatpush1.msra.mxu0 %v4059
    %4077 = vmatprep.subr.mxu0 0.0
    %4078 = vmatpush1.msra.mxu0 %v4060
    %4079 = vmatprep.subr.mxu0 0.0
    %4080 = vmatpush1.msra.mxu0 %v4061
    %4081 = vmatprep.subr.mxu0 0.0
    %4082 = vmatpush1.msra.mxu0 0.0
    %4083 = vmatprep.subr.mxu0 0.0
    %4084 = vmatpush1.msra.mxu0 0.0
    %4085 = vmatprep.subr.mxu0 0.0
    %4086 = vmatpush1.msra.mxu0 0.0
    %4087 = vmatprep.subr.mxu0 0.0
    %4088 = vmatpush1.msra.mxu0 0.0
    %4089 = vmatprep.subr.mxu0 0.0
    %4090 = vmatpush1.msra.mxu0 0.0
    %4091 = vmatprep.subr.mxu0 0.0
    %4092 = vmatpush1.msra.mxu0 0.0
    %4093 = vmatprep.subr.mxu0 0.0
    %4094 = vmatpush1.msra.mxu0 0.0
    %4095 = vmatprep.subr.mxu0 0.0
    %4096 = vmatpush1.msra.mxu0 0.0
    %4097 = vmatprep.subr.mxu0 0.0
    %4098 = vmatpush1.msra.mxu0 0.0
    %4099 = vmatprep.subr.mxu0 0.0
    %4100 = vmatpush1.msra.mxu0 0.0
    %4101 = vmatprep.subr.mxu0 0.0
    %4102 = vmatpush1.msra.mxu0 0.0
    %4103 = vmatprep.subr.mxu0 0.0
    %4104 = vmatpush1.msra.mxu0 0.0
    %4105 = vmatprep.subr.mxu0 0.0
    %4106 = vmatpush1.msra.mxu0 0.0
    %4107 = vmatprep.subr.mxu0 0.0
    %4108 = vmatpush1.msra.mxu0 0.0
    %4109 = vmatprep.subr.mxu0 0.0
    %4110 = vmatpush1.msra.mxu0 0.0
    %4111 = vmatprep.subr.mxu0 0.0
    %4112 = vmatpush1.msra.mxu0 0.0
    %4113 = vmatprep.subr.mxu0 0.0
    %4114 = vmatpush1.msra.mxu0 0.0
    %4115 = vmatprep.subr.mxu0 0.0
    %4116 = vmatpush1.msra.mxu0 0.0
    %4117 = vmatprep.subr.mxu0 0.0
    %4118 = vmatpush1.msra.mxu0 0.0
    %4119 = vmatprep.subr.mxu0 0.0
    %4120 = vmatpush1.msra.mxu0 0.0
    %4121 = vmatprep.subr.mxu0 0.0
    %4122 = vmatpush1.msra.mxu0 0.0
    %4123 = vmatprep.subr.mxu0 0.0
    %4124 = vmatpush1.msra.mxu0 0.0
    %4125 = vmatprep.subr.mxu0 0.0
    %4126 = vmatpush1.msra.mxu0 0.0
    %4127 = vmatprep.subr.mxu0 0.0
    %4128 = vmatpush1.msra.mxu0 0.0
    %4129 = vmatprep.subr.mxu0 0.0
    %4130 = vmatpush1.msra.mxu0 0.0
    %4131 = vmatprep.subr.mxu0 0.0
    %4132 = vmatpush1.msra.mxu0 0.0
    %4133 = vmatprep.subr.mxu0 0.0
    %4134 = vmatpush1.msra.mxu0 0.0
    %4135 = vmatprep.subr.mxu0 0.0
    %4136 = vmatpush1.msra.mxu0 0.0
    %4137 = vmatprep.mubr.f32.mxu0 0.0
    %4138 = vmatmul.mubr.f32.gmra.mrb[0].mxu0 %v4068
    %v4139 = vpop.f32.mrb[0].mxu0
    %v4140 = vadd.f32 %v4066, %v4139
    %v4141 = vpop.f32.mrb[0].mxu0
    %4142 = vmatprep.mubr.f32.mxu0 0.0
    %4143 = vmatmul.mubr.f32.gmra.mrb[0].mxu0 %v4071
    %v4144 = vpop.f32.mrb[0].mxu0
    %v4145 = vadd.f32 %v4066, %v4144
    %v4146 = vpop.f32.mrb[0].mxu0
    %4147 = vdwg.mxu0
    %v4148 = vmul.f32 %v4140, %v4140
    %v4149 = vmul.f32 %v4145, %v4145
    %v4150 = vmul.f32 %v4140, %v4148
    %v4151 = vmul.f32 %v4145, %v4149
    %v4152 = vmul.f32 %v4150, 0.044715
    %v4153 = vmul.f32 %v4151, 0.044715
    %v4154 = vadd.f32 %v4140, %v4152
    %v4155 = vadd.f32 %v4145, %v4153
    %v4156 = vmul.f32 %v4154, 0.7978846
    %v4157 = vmul.f32 %v4155, 0.7978846
    %v4158 = vtanh.pop %v4156
    %v4159 = vtanh.pop %v4157
    %v4160 = vadd.f32 %v4158, 1.0
    %v4161 = vadd.f32 %v4159, 1.0
    %v4162 = vmul.f32 %v4160, 0.5
    %v4163 = vmul.f32 %v4161, 0.5
    %v4164 = vmul.f32 %v4140, %v4162
    %v4165 = vmul.f32 %v4145, %v4163
    %s4166 = scalar_lea.vmem %s5, 128
    %v4167 = vld [vmem:[%s4166] sm:$0xff]
    %v4168 = vld [vmem:[%s4166 + $0x8] sm:$0xff]
    %v4169 = vld [vmem:[%s4166 + $0x10] sm:$0xff]
    %v4170 = vld [vmem:[%s4166 + $0x18] sm:$0xff]
    %v4171 = vld [vmem:[%s4166 + $0x20] sm:$0xff]
    %v4172 = vld [vmem:[%s4166 + $0x28] sm:$0xff]
    %v4173 = vld [vmem:[%s4166 + $0x30] sm:$0xff]
    %v4174 = vld [vmem:[%s4166 + $0x38] sm:$0xff]
    %v4175 = vld [vmem:[%s4166 + $0x40] sm:$0xff]
    %v4176 = vld [vmem:[%s4166 + $0x48] sm:$0xff]
    %v4177 = vld [vmem:[%s4166 + $0x50] sm:$0xff]
    %v4178 = vld [vmem:[%s4166 + $0x58] sm:$0xff]
    %v4179 = vld [vmem:[%s4166 + $0x60] sm:$0xff]
    %v4180 = vld [vmem:[%s4166 + $0x68] sm:$0xff]
    %v4181 = vld [vmem:[%s4166 + $0x70] sm:$0xff]
    %v4182 = vld [vmem:[%s4166 + $0x78] sm:$0xff]
    %v4183 = vld [vmem:[%s2 + $0x2e] sm:$0x1]
    %v4184 = vlaneseq
    %v4185 = vshrl.u32 %v4184, 7
    %v4186 = vsub.s32 0, %v4185
    %v4187 = vrot.slane %v4183, %v4186
    %4188 = vmatprep.subr.mxu0 0.0
    %4189 = vmatpush1.msra.mxu0 %v4167
    %4190 = vmatprep.subr.mxu0 0.0
    %4191 = vmatpush1.msra.mxu0 %v4168
    %4192 = vmatprep.subr.mxu0 0.0
    %4193 = vmatpush1.msra.mxu0 %v4169
    %4194 = vmatprep.subr.mxu0 0.0
    %4195 = vmatpush1.msra.mxu0 %v4170
    %4196 = vmatprep.subr.mxu0 0.0
    %4197 = vmatpush1.msra.mxu0 %v4171
    %4198 = vmatprep.subr.mxu0 0.0
    %4199 = vmatpush1.msra.mxu0 %v4172
    %4200 = vmatprep.subr.mxu0 0.0
    %4201 = vmatpush1.msra.mxu0 %v4173
    %4202 = vmatprep.subr.mxu0 0.0
    %4203 = vmatpush1.msra.mxu0 %v4174
    %4204 = vmatprep.subr.mxu0 0.0
    %4205 = vmatpush1.msra.mxu0 %v4175
    %4206 = vmatprep.subr.mxu0 0.0
    %4207 = vmatpush1.msra.mxu0 %v4176
    %4208 = vmatprep.subr.mxu0 0.0
    %4209 = vmatpush1.msra.mxu0 %v4177
    %4210 = vmatprep.subr.mxu0 0.0
    %4211 = vmatpush1.msra.mxu0 %v4178
    %4212 = vmatprep.subr.mxu0 0.0
    %4213 = vmatpush1.msra.mxu0 %v4179
    %4214 = vmatprep.subr.mxu0 0.0
    %4215 = vmatpush1.msra.mxu0 %v4180
    %4216 = vmatprep.subr.mxu0 0.0
    %4217 = vmatpush1.msra.mxu0 %v4181
    %4218 = vmatprep.subr.mxu0 0.0
    %4219 = vmatpush1.msra.mxu0 %v4182
    %4220 = vmatprep.subr.mxu0 0.0
    %4221 = vmatpush1.msra.mxu0 0.0
    %4222 = vmatprep.subr.mxu0 0.0
    %4223 = vmatpush1.msra.mxu0 0.0
    %4224 = vmatprep.subr.mxu0 0.0
    %4225 = vmatpush1.msra.mxu0 0.0
    %4226 = vmatprep.subr.mxu0 0.0
    %4227 = vmatpush1.msra.mxu0 0.0
    %4228 = vmatprep.subr.mxu0 0.0
    %4229 = vmatpush1.msra.mxu0 0.0
    %4230 = vmatprep.subr.mxu0 0.0
    %4231 = vmatpush1.msra.mxu0 0.0
    %4232 = vmatprep.subr.mxu0 0.0
    %4233 = vmatpush1.msra.mxu0 0.0
    %4234 = vmatprep.subr.mxu0 0.0
    %4235 = vmatpush1.msra.mxu0 0.0
    %4236 = vmatprep.subr.mxu0 0.0
    %4237 = vmatpush1.msra.mxu0 0.0
    %4238 = vmatprep.subr.mxu0 0.0
    %4239 = vmatpush1.msra.mxu0 0.0
    %4240 = vmatprep.subr.mxu0 0.0
    %4241 = vmatpush1.msra.mxu0 0.0
    %4242 = vmatprep.subr.mxu0 0.0
    %4243 = vmatpush1.msra.mxu0 0.0
    %4244 = vmatprep.subr.mxu0 0.0
    %4245 = vmatpush1.msra.mxu0 0.0
    %4246 = vmatprep.subr.mxu0 0.0
    %4247 = vmatpush1.msra.mxu0 0.0
    %4248 = vmatprep.subr.mxu0 0.0
    %4249 = vmatpush1.msra.mxu0 0.0
    %4250 = vmatprep.subr.mxu0 0.0
    %4251 = vmatpush1.msra.mxu0 0.0
    %4252 = vmatprep.mubr.f32.mxu0 0.0
    %4253 = vmatmul.mubr.f32.gmra.mrb[0].mxu0 %v4164
    %v4254 = vpop.f32.mrb[0].mxu0
    %v4255 = vadd.f32 %v4187, %v4254
    %v4256 = vpop.f32.mrb[0].mxu0
    %4257 = vmatprep.mubr.f32.mxu0 0.0
    %4258 = vmatmul.mubr.f32.gmra.mrb[0].mxu0 %v4165
    %v4259 = vpop.f32.mrb[0].mxu0
    %v4260 = vadd.f32 %v4187, %v4259
    %v4261 = vpop.f32.mrb[0].mxu0
    %4262 = vdwg.mxu0
    %v4263 = vadd.f32 %v4055, %v4255
    %v4264 = vadd.f32 %v4056, %v4260
    %v4265 = vld [vmem:[%s2 + $0x2f] sm:$0x1]
    %v4266 = vld [vmem:[%s2 + $0x30] sm:$0x1]
    %v4267 = vsel %vm327, %v4263, 0.0
    %4268 = vadd.xlane.f32.xlu0 %v4267
    %v4269 = vpop.xlane.xlu0 %4268
    %v4270 = vsel %vm327, %v4264, 0.0
    %4271 = vadd.xlane.f32.xlu0 %v4270
    %v4272 = vpop.xlane.xlu0 %4271
    %v4273 = vmul.f32 %v4269, %v2026
    %v4274 = vmul.f32 %v4272, %v2026
    %v4275 = vsub.f32 %v4263, %v4273
    %v4276 = vsub.f32 %v4264, %v4274
    %v4277 = vmul.f32 %v4275, %v4275
    %v4278 = vmul.f32 %v4276, %v4276
    %v4279 = vsel %vm327, %v4277, 0.0
    %4280 = vadd.xlane.f32.xlu0 %v4279
    %v4281 = vpop.xlane.xlu0 %4280
    %v4282 = vsel %vm327, %v4278, 0.0
    %4283 = vadd.xlane.f32.xlu0 %v4282
    %v4284 = vpop.xlane.xlu0 %4283
    %v4285 = vmul.f32 %v4281, %v2026
    %v4286 = vmul.f32 %v4284, %v2026
    %v4287 = vadd.f32 %v4285, 1e-05
    %v4288 = vadd.f32 %v4286, 1e-05
    %v4289 = vrsqrt.pop %v4287
    %v4290 = vrsqrt.pop %v4288
    %v4291 = vmul.f32 %v4275, %v4289
    %v4292 = vmul.f32 %v4276, %v4290
    %v4293 = vlaneseq
    %v4294 = vshrl.u32 %v4293, 7
    %v4295 = vsub.s32 0, %v4294
    %v4296 = vrot.slane %v4265, %v4295
    %v4297 = vmul.f32 %v4291, %v4296
    %v4298 = vmul.f32 %v4292, %v4296
    %v4299 = vlaneseq
    %v4300 = vshrl.u32 %v4299, 7
    %v4301 = vsub.s32 0, %v4300
    %v4302 = vrot.slane %v4266, %v4301
    %v4303 = vadd.f32 %v4297, %v4302
    %v4304 = vadd.f32 %v4298, %v4302
    %v4305 = vld [vmem:[%s2 + $0x31] sm:$0x1]
    %v4306 = vld [vmem:[%s2 + $0x32] sm:$0x1]
    %v4307 = vsel %vm327, %v4303, 0.0
    %4308 = vadd.xlane.f32.xlu0 %v4307
    %v4309 = vpop.xlane.xlu0 %4308
    %v4310 = vsel %vm327, %v4304, 0.0
    %4311 = vadd.xlane.f32.xlu0 %v4310
    %v4312 = vpop.xlane.xlu0 %4311
    %v4313 = vmul.f32 %v4309, %v2026
    %v4314 = vmul.f32 %v4312, %v2026
    %v4315 = vsub.f32 %v4303, %v4313
    %v4316 = vsub.f32 %v4304, %v4314
    %v4317 = vmul.f32 %v4315, %v4315
    %v4318 = vmul.f32 %v4316, %v4316
    %v4319 = vsel %vm327, %v4317, 0.0
    %4320 = vadd.xlane.f32.xlu0 %v4319
    %v4321 = vpop.xlane.xlu0 %4320
    %v4322 = vsel %vm327, %v4318, 0.0
    %4323 = vadd.xlane.f32.xlu0 %v4322
    %v4324 = vpop.xlane.xlu0 %4323
    %v4325 = vmul.f32 %v4321, %v2026
    %v4326 = vmul.f32 %v4324, %v2026
    %v4327 = vadd.f32 %v4325, 1e-05
    %v4328 = vadd.f32 %v4326, 1e-05
    %v4329 = vrsqrt.pop %v4327
    %v4330 = vrsqrt.pop %v4328
    %v4331 = vmul.f32 %v4315, %v4329
    %v4332 = vmul.f32 %v4316, %v4330
    %v4333 = vlaneseq
    %v4334 = vshrl.u32 %v4333, 7
    %v4335 = vsub.s32 0, %v4334
    %v4336 = vrot.slane %v4305, %v4335
    %v4337 = vmul.f32 %v4331, %v4336
    %v4338 = vmul.f32 %v4332, %v4336
    %v4339 = vlaneseq
    %v4340 = vshrl.u32 %v4339, 7
    %v4341 = vsub.s32 0, %v4340
    %v4342 = vrot.slane %v4306, %v4341
    %v4343 = vadd.f32 %v4337, %v4342
    %v4344 = vadd.f32 %v4338, %v4342
    %v4345 = vld [vmem:[%s2 + $0x34] sm:$0xff]
    %v4346 = vld [vmem:[%s2 + $0x3c] sm:$0xff]
    %v4347 = vld [vmem:[%s2 + $0x44] sm:$0xff]
    %v4348 = vld [vmem:[%s2 + $0x4c] sm:$0xff]
    %v4349 = vld [vmem:[%s2 + $0x33] sm:$0x1]
    %v4350 = vlaneseq
    %v4351 = vshrl.u32 %v4350, 7
    %v4352 = vsub.s32 0, %v4351
    %v4353 = vrot.slane %v4349, %v4352
    %v4355 = vsel %vm327, %v4343, 0
    %v4358 = vsel %vm327, %v4344, 0
    %4360 = vmatprep.subr.mxu0 0.0
    %4361 = vmatpush1.msra.mxu0 %v4345
    %4362 = vmatprep.subr.mxu0 0.0
    %4363 = vmatpush1.msra.mxu0 %v4346
    %4364 = vmatprep.subr.mxu0 0.0
    %4365 = vmatpush1.msra.mxu0 %v4347
    %4366 = vmatprep.subr.mxu0 0.0
    %4367 = vmatpush1.msra.mxu0 %v4348
    %4368 = vmatprep.subr.mxu0 0.0
    %4369 = vmatpush1.msra.mxu0 0.0
    %4370 = vmatprep.subr.mxu0 0.0
    %4371 = vmatpush1.msra.mxu0 0.0
    %4372 = vmatprep.subr.mxu0 0.0
    %4373 = vmatpush1.msra.mxu0 0.0
    %4374 = vmatprep.subr.mxu0 0.0
    %4375 = vmatpush1.msra.mxu0 0.0
    %4376 = vmatprep.subr.mxu0 0.0
    %4377 = vmatpush1.msra.mxu0 0.0
    %4378 = vmatprep.subr.mxu0 0.0
    %4379 = vmatpush1.msra.mxu0 0.0
    %4380 = vmatprep.subr.mxu0 0.0
    %4381 = vmatpush1.msra.mxu0 0.0
    %4382 = vmatprep.subr.mxu0 0.0
    %4383 = vmatpush1.msra.mxu0 0.0
    %4384 = vmatprep.subr.mxu0 0.0
    %4385 = vmatpush1.msra.mxu0 0.0
    %4386 = vmatprep.subr.mxu0 0.0
    %4387 = vmatpush1.msra.mxu0 0.0
    %4388 = vmatprep.subr.mxu0 0.0
    %4389 = vmatpush1.msra.mxu0 0.0
    %4390 = vmatprep.subr.mxu0 0.0
    %4391 = vmatpush1.msra.mxu0 0.0
    %4392 = vmatprep.subr.mxu0 0.0
    %4393 = vmatpush1.msra.mxu0 0.0
    %4394 = vmatprep.subr.mxu0 0.0
    %4395 = vmatpush1.msra.mxu0 0.0
    %4396 = vmatprep.subr.mxu0 0.0
    %4397 = vmatpush1.msra.mxu0 0.0
    %4398 = vmatprep.subr.mxu0 0.0
    %4399 = vmatpush1.msra.mxu0 0.0
    %4400 = vmatprep.subr.mxu0 0.0
    %4401 = vmatpush1.msra.mxu0 0.0
    %4402 = vmatprep.subr.mxu0 0.0
    %4403 = vmatpush1.msra.mxu0 0.0
    %4404 = vmatprep.subr.mxu0 0.0
    %4405 = vmatpush1.msra.mxu0 0.0
    %4406 = vmatprep.subr.mxu0 0.0
    %4407 = vmatpush1.msra.mxu0 0.0
    %4408 = vmatprep.subr.mxu0 0.0
    %4409 = vmatpush1.msra.mxu0 0.0
    %4410 = vmatprep.subr.mxu0 0.0
    %4411 = vmatpush1.msra.mxu0 0.0
    %4412 = vmatprep.subr.mxu0 0.0
    %4413 = vmatpush1.msra.mxu0 0.0
    %4414 = vmatprep.subr.mxu0 0.0
    %4415 = vmatpush1.msra.mxu0 0.0
    %4416 = vmatprep.subr.mxu0 0.0
    %4417 = vmatpush1.msra.mxu0 0.0
    %4418 = vmatprep.subr.mxu0 0.0
    %4419 = vmatpush1.msra.mxu0 0.0
    %4420 = vmatprep.subr.mxu0 0.0
    %4421 = vmatpush1.msra.mxu0 0.0
    %4422 = vmatprep.subr.mxu0 0.0
    %4423 = vmatpush1.msra.mxu0 0.0
    %4424 = vmatprep.mubr.f32.mxu0 0.0
    %4425 = vmatmul.mubr.f32.gmra.mrb[0].mxu0 %v4355
    %v4426 = vpop.f32.mrb[0].mxu0
    %v4427 = vadd.f32 %v4353, %v4426
    %v4428 = vpop.f32.mrb[0].mxu0
    %4429 = vmatprep.mubr.f32.mxu0 0.0
    %4430 = vmatmul.mubr.f32.gmra.mrb[0].mxu0 %v4358
    %v4431 = vpop.f32.mrb[0].mxu0
    %v4432 = vadd.f32 %v4353, %v4431
    %v4433 = vpop.f32.mrb[0].mxu0
    %4434 = vdwg.mxu0
    %4435 = vst [vmem:[%s6] sm:$0xff] %v4427
    %4436 = vst [vmem:[%s6 + $0x8] sm:$0xff] %v4432
    // Predicated region
    $region30: #{fast_recurrent_transformer_forward.1} parent=1 // pred_check
      _
    $region31: #{fast_recurrent_transformer_forward.1} parent=1 // pred_check_branch
      %4438 = sbr.rel (0) target = $region33
    $region32: #{fast_recurrent_transformer_forward.1} parent=1 // pred_region
      _
    $region33: #{fast_recurrent_transformer_forward.1} parent=1 // pred_fallthru
      _
    // Predicated region
    $region34: #{fast_recurrent_transformer_forward.1} parent=1 // pred_check
      _
    $region35: #{fast_recurrent_transformer_forward.1} parent=1 // pred_check_branch
      %4440 = sbr.rel (0) target = $region37
    $region36: #{fast_recurrent_transformer_forward.1} parent=1 // pred_region
      _
    $region37: #{fast_recurrent_transformer_forward.1} parent=1 // pred_fallthru
      _
    %4441 = vsyncpa [#allocation3], 1

</llo_original>
